<compile_context>
chip_gen: v5e
topology: v5e:2x2
jax: 0.10.0
libtpu: 0.0.40
codegen_flags: <defaults>
</compile_context>

<pallas_src>
import functools

import jax
import jax.numpy as jnp
from jax.experimental import pallas as pl
from jax.experimental.pallas import tpu as pltpu

# Sizes consistent with the module's constructor (small, TPU-friendly).
DIM1 = 128          # dim1
DIM2 = 128          # dim2
HID = 32            # hidden_size
MM = 64             # mm_hidden_size
OUT = 64            # output_size
HP1 = HID + 1       # hidden_size + appended 1.0
MPAD = 128          # fc1 width (MM) padded to the 128-lane register width


# --------------------------------------------------------------------- slab layout
def _make_slab_layout(dim1, dim2, hid, mpad, out):
    """Row layout of the packed small-operand slab (width 128, f32)."""
    hp1 = hid + 1
    layout = {}
    r = 0

    def add(name, rows, cols, pad=True):
        nonlocal r
        layout[name] = (r, rows, cols)
        r += ((rows + 7) // 8) * 8 if pad else rows

    add("wh1", dim1, hid)        # linear_h1 weight (in, out)
    add("wh2", dim2, hid)        # linear_h2 weight
    add("wo1", hid, hp1)         # linear_o1 weight with folded "append 1.0" lane
    add("wo2", hid, hp1)         # linear_o2 weight with folded "append 1.0" lane
    add("w2a", mpad, out)        # fc2 block acting on fc1 (zero rows for m >= MM)
    add("w2b", hp1, out)         # fc2 block acting on o1p (skip connection)
    add("w2c", hp1, out)         # fc2 block acting on o2p (skip connection)
    for name, cols in (("bh1", hid), ("bz1", hid), ("bo1", hp1),
                       ("bh2", hid), ("bz2", hid), ("bo2", hp1),
                       ("bfc1", mpad), ("bfc2", out)):
        add(name, 1, cols, pad=False)
    rows_total = ((r + 7) // 8) * 8
    return layout, rows_total


_SLAB, _SLAB_ROWS = _make_slab_layout(DIM1, DIM2, HID, MPAD, OUT)   # (536, 128) slab


# ----------------------------------------------------------------------------- kernel
def _bilinear_fusion_kernel(x1_ref, x2_ref, wz1_ref, wz2_ref, wr_ref, sm_ref, out_ref):
    f32, bf16 = jnp.float32, jnp.bfloat16
    dot = functools.partial(jnp.dot, preferred_element_type=f32)
    relu = lambda v: jnp.maximum(v, 0.0)
    sigmoid = lambda v: pl.reciprocal(1.0 + jnp.exp(-v), approx=True)   # EUP recip

    def sl(name):
        r0, nr, nc = _SLAB[name]
        return sm_ref[r0:r0 + nr, 0:nc]

    x1 = x1_ref[...]                       # (B, D1) f32
    x2 = x2_ref[...]                       # (B, D2) f32
    batch = x1.shape[0]

    def gated_branch(x_self, x_other, wz_ref, wh, bh, bz, wo, bo):
        # h = ReLU(Linear(x_self)); z = Bilinear(x_self, x_other);
        # o = ReLU(Linear(sigmoid(z) * h)); the reference's trailing "append 1.0"
        # is folded into wo/bo (extra output lane, zero weights, bias 1.0).
        h = relu(dot(x_self, wh) + bh)                              # (B, H)
        # v[b, k*D_self + i] = sum_j Wz[k, i, j] * x_other[b, j]  (one big bf16 matmul)
        v = dot(x_other.astype(bf16), wz_ref[...])                  # (B, H*D_self) f32
        v3 = v.reshape(batch, HID, x_self.shape[1])                 # (B, H, D_self)
        # per-sample contraction over D_self (lane reduce; no transpose needed)
        z = jnp.sum(v3 * x_self[:, None, :], axis=-1) + bz          # (B, H)
        return relu(dot(sigmoid(z) * h, wo) + bo)                   # (B, H+1)

    o1p = gated_branch(x1, x2, wz1_ref, sl("wh1"), sl("bh1"), sl("bz1"),
                       sl("wo1"), sl("bo1"))                        # (B, H+1)
    o2p = gated_branch(x2, x1, wz2_ref, sl("wh2"), sl("bh2"), sl("bz2"),
                       sl("wo2"), sl("bo2"))                        # (B, H+1)

    # fc1 over the flattened outer product o1p (x) o2p, without materializing it:
    #   fc1[b, m] = sum_{a,c} o1p[b,a] * o2p[b,c] * Wfc1[m, a*(H+1)+c]
    #             = sum_a o1p[b,a] * (o2p @ Wr)[b, a*MPAD + m]
    t = dot(o2p.astype(bf16), wr_ref[...])                          # (B, (H+1)*MPAD)
    t3 = t.reshape(batch, HP1, MPAD)                                # (B, H+1, MPAD)
    fc1 = relu(jnp.sum(t3 * o1p[:, :, None], axis=1) + sl("bfc1"))  # (B, MPAD); m>=MM are 0

    # fc2 on cat([fc1, o1p, o2p]) as three partial matmuls (skip connection, no concat).
    out = (dot(fc1, sl("w2a")) + dot(o1p, sl("w2b"))
           + dot(o2p, sl("w2c")) + sl("bfc2"))                      # (B, OUT)
    out_ref[...] = relu(out)


# ----------------------------------------------------------------------------- prep
def prepare_params(p):
    """One-time repack of PyTorch-layout params into kernel operand layouts.

    Heavy weights (Wz1, Wz2, repacked Wfc1) are stored bf16; all small operands are
    packed into a single f32 slab.  Call once; reuse the result for every forward call.
    """
    f32, bf16 = jnp.float32, jnp.bfloat16
    hid = int(p["bh1"].shape[0]); mm = int(p["bfc1"].shape[0]); out = int(p["bfc2"].shape[0])
    dim1 = int(p["wh1"].shape[1]); dim2 = int(p["wh2"].shape[1])
    hp1 = hid + 1

    # Static layout assertions: the in-kernel reshapes (B, H*D)->(B, H, D) and
    # (B, (H+1)*MPAD)->(B, H+1, MPAD) are only cheap/lane-aligned because the inner
    # split is a multiple of 128 lanes.
    assert (dim1, dim2, hid, mm, out) == (DIM1, DIM2, HID, MM, OUT), \
        "rebuild the module-level slab layout for new sizes"
    assert dim1 % 128 == 0 and dim2 % 128 == 0 and MPAD % 128 == 0 and MPAD >= mm

    # --- heavy weights (bf16) ---
    # wz1[j, k*D1 + i] = Wz1[k, i, j]
    wz1 = jnp.transpose(jnp.asarray(p["Wz1"], f32), (2, 0, 1)).reshape(dim2, hid * dim1).astype(bf16)
    # wz2[i, k*D2 + j] = Wz2[k, j, i]
    wz2 = jnp.transpose(jnp.asarray(p["Wz2"], f32), (2, 0, 1)).reshape(dim1, hid * dim2).astype(bf16)
    # wr[c, a*MPAD + m] = Wfc1[m, a*(hid+1) + c]   (zero-padded for m >= mm)
    w3 = jnp.transpose(jnp.asarray(p["wfc1"], f32).reshape(mm, hp1, hp1), (2, 1, 0))   # [c, a, m]
    wr = (jnp.zeros((hp1, hp1, MPAD), f32).at[:, :, :mm].set(w3)
          .reshape(hp1, hp1 * MPAD).astype(bf16))

    # --- small-operand slab (f32, single DMA) ---
    def o_fold(w, b):
        # Fold "append 1.0" into the o-layer: extra output lane, zero weights, bias 1.0.
        wp = jnp.zeros((hid, hp1), f32).at[:, :hid].set(jnp.asarray(w, f32).T)
        bp = (jnp.zeros((1, hp1), f32)
              .at[0, :hid].set(jnp.asarray(b, f32)).at[0, hid].set(1.0))
        return wp, bp

    wo1p, bo1p = o_fold(p["wo1"], p["bo1"])
    wo2p, bo2p = o_fold(p["wo2"], p["bo2"])
    w2 = jnp.asarray(p["wfc2"], f32)
    w2a = jnp.zeros((MPAD, out), f32).at[:mm, :].set(w2[:, :mm].T)
    w2b = w2[:, mm:mm + hp1].T
    w2c = w2[:, mm + hp1:mm + 2 * hp1].T
    bfc1 = jnp.zeros((1, MPAD), f32).at[0, :mm].set(jnp.asarray(p["bfc1"], f32))

    slab = jnp.zeros((_SLAB_ROWS, 128), f32)

    def put(s, name, mat):
        r0, nr, nc = _SLAB[name]
        return s.at[r0:r0 + nr, 0:nc].set(jnp.asarray(mat, f32).reshape(nr, nc))

    slab = put(slab, "wh1", jnp.asarray(p["wh1"], f32).T)
    slab = put(slab, "wh2", jnp.asarray(p["wh2"], f32).T)
    slab = put(slab, "wo1", wo1p)
    slab = put(slab, "wo2", wo2p)
    slab = put(slab, "w2a", w2a)
    slab = put(slab, "w2b", w2b)
    slab = put(slab, "w2c", w2c)
    slab = put(slab, "bh1", p["bh1"]); slab = put(slab, "bz1", p["bz1"]); slab = put(slab, "bo1", bo1p)
    slab = put(slab, "bh2", p["bh2"]); slab = put(slab, "bz2", p["bz2"]); slab = put(slab, "bo2", bo2p)
    slab = put(slab, "bfc1", bfc1);   slab = put(slab, "bfc2", p["bfc2"])

    return dict(wz1=wz1, wz2=wz2, wr=wr, slab=slab)


# ----------------------------------------------------------------------------- wrapper
@jax.jit
def _fused_call(x1, x2, wz1, wz2, wr, slab):
    batch = x1.shape[0]
    nbytes = lambda a: a.size * a.dtype.itemsize
    bytes_accessed = (nbytes(x1) + nbytes(x2) + nbytes(wz1) + nbytes(wz2)
                      + nbytes(wr) + nbytes(slab) + batch * OUT * 4)
    flops = 2 * batch * (
        DIM2 * HID * DIM1 + DIM1 * HID * DIM2          # two big bilinear matmuls
        + HID * DIM1 + HID * DIM2                      # per-sample bilinear contractions
        + DIM1 * HID + DIM2 * HID                      # h1, h2
        + 2 * HID * HP1                                # o1, o2
        + HP1 * HP1 * MPAD + HP1 * MPAD                # fc1 two-stage contraction
        + (MPAD + 2 * HP1) * OUT)                      # fc2
    transcendentals = 4 * batch * HID                  # sigmoid: exp + reciprocal

    vmem = pl.BlockSpec(memory_space=pltpu.MemorySpace.VMEM)
    return pl.pallas_call(
        _bilinear_fusion_kernel,
        out_shape=jax.ShapeDtypeStruct((batch, OUT), jnp.float32),
        in_specs=[vmem] * 6,
        out_specs=vmem,
        cost_estimate=pl.CostEstimate(flops=flops, transcendentals=transcendentals,
                                      bytes_accessed=bytes_accessed),
    )(x1, x2, wz1, wz2, wr, slab)


def bilinear_fusion(x1, x2, prep):
    """x1: (dim1,) or (B, dim1); x2: (dim2,) or (B, dim2)  ->  (out,) or (B, out).

    Per-row math is exactly BilinearFusion.forward (eval mode)."""
    single = (x1.ndim == 1)
    x1b = x1.reshape(1, -1) if single else x1
    x2b = x2.reshape(1, -1) if single else x2
    y = _fused_call(x1b.astype(jnp.float32), x2b.astype(jnp.float32),
                    prep["wz1"], prep["wz2"], prep["wr"], prep["slab"])
    return y[0] if single else y


# ----------------------------------------------------------------------------- params
def init_params(key, dim1=DIM1, dim2=DIM2, hid=HID, mm=MM, out=OUT):
    """Deterministic synthetic weights (PyTorch layouts: Linear (out,in), Bilinear (out,in1,in2))."""
    f32 = jnp.float32
    ks = jax.random.split(key, 16)
    w = lambda k, shape, fan_in: jax.random.normal(k, shape, f32) / jnp.sqrt(jnp.asarray(fan_in, f32))
    k2 = (hid + 1) * (hid + 1)
    fsk = mm + 2 * hid + 2
    return {
        "wh1": w(ks[0], (hid, dim1), dim1),              "bh1": w(ks[1], (hid,), dim1),
        "Wz1": w(ks[2], (hid, dim1, dim2), dim1 * dim2), "bz1": w(ks[3], (hid,), dim1),
        "wo1": w(ks[4], (hid, hid), hid),                "bo1": w(ks[5], (hid,), hid),
        "wh2": w(ks[6], (hid, dim2), dim2),              "bh2": w(ks[7], (hid,), dim2),
        "Wz2": w(ks[8], (hid, dim2, dim1), dim1 * dim2), "bz2": w(ks[9], (hid,), dim2),
        "wo2": w(ks[10], (hid, hid), hid),               "bo2": w(ks[11], (hid,), hid),
        "wfc1": w(ks[12], (mm, k2), k2),                 "bfc1": w(ks[13], (mm,), k2),
        "wfc2": w(ks[14], (out, fsk), fsk),              "bfc2": w(ks[15], (out,), fsk),
    }


# ----------------------------------------------------------------------------- reference
def reference(x1, x2, p):
    """Pure-JAX transcription of BilinearFusion.forward (eval mode), f32 math, single sample."""
    relu, sig = jax.nn.relu, jax.nn.sigmoid
    h1 = relu(x1 @ p["wh1"].T + p["bh1"])
    z1 = jnp.einsum("i,kij,j->k", x1, p["Wz1"], x2) + p["bz1"]
    o1 = relu((sig(z1) * h1) @ p["wo1"].T + p["bo1"])
    h2 = relu(x2 @ p["wh2"].T + p["bh2"])
    z2 = jnp.einsum("j,kji,i->k", x2, p["Wz2"], x1) + p["bz2"]
    o2 = relu((sig(z2) * h2) @ p["wo2"].T + p["bo2"])
    one = jnp.ones((1,), jnp.float32)
    o1p = jnp.concatenate([o1, one])
    o2p = jnp.concatenate([o2, one])
    fused = jnp.outer(o1p, o2p).reshape(-1)
    f1 = relu(fused @ p["wfc1"].T + p["bfc1"])
    cat = jnp.concatenate([f1, o1p, o2p])
    return relu(cat @ p["wfc2"].T + p["bfc2"])


if __name__ == "__main__":
    key = jax.random.PRNGKey(0)
    kx1, kx2, kp = jax.random.split(key, 3)
    B = 4
    x1 = jax.random.normal(kx1, (B, DIM1), jnp.float32)
    x2 = jax.random.normal(kx2, (B, DIM2), jnp.float32)
    params = init_params(kp)

    prep = prepare_params(params)            # one-time weight repack (stays on device)
    y = jax.block_until_ready(bilinear_fusion(x1, x2, prep))
    assert y.shape == (B, OUT), y.shape

    # Check 1 (kernel math): compare against the module evaluated with the same
    # bf16-stored heavy weights (cast back to f32) -- isolates kernel correctness.
    params_q = dict(params)
    for k in ("Wz1", "Wz2", "wfc1"):
        params_q[k] = params[k].astype(jnp.bfloat16).astype(jnp.float32)
    y_q = jax.vmap(lambda a, b: reference(a, b, params_q))(x1, x2)
    if not jnp.allclose(y, y_q, rtol=2e-2, atol=2e-2):
        raise AssertionError(
            f"mismatch vs bf16-weight reference: max abs err = {float(jnp.max(jnp.abs(y - y_q)))}")

    # Check 2 (end-to-end semantics): compare against the original f32 module.
    # Tolerance is wider because the heavy weights are stored in bfloat16 for bandwidth.
    y_ref = jax.vmap(lambda a, b: reference(a, b, params))(x1, x2)
    if not jnp.allclose(y, y_ref, rtol=4e-2, atol=4e-2):
        raise AssertionError(
            f"mismatch vs f32 reference: max abs err = {float(jnp.max(jnp.abs(y - y_ref)))}")

    # Check 3 (single-sample path = the module's exact (dim,)->(out,) signature).
    y1 = jax.block_until_ready(bilinear_fusion(x1[0], x2[0], prep))
    assert y1.shape == (OUT,), y1.shape
    if not jnp.allclose(y1, y[0], rtol=1e-3, atol=1e-3):
        raise AssertionError("batched and single-sample paths disagree")

    print("KERNEL_OK")
</pallas_src>

<mosaic_0001>
module attributes {stable_mosaic.version = 11 : i64} {
  func.func @_bilinear_fusion_kernel(%arg0: memref<4x128xf32, #tpu.memory_space<vmem>>, %arg1: memref<4x128xf32, #tpu.memory_space<vmem>>, %arg2: memref<128x4096xbf16, #tpu.memory_space<vmem>>, %arg3: memref<128x4096xbf16, #tpu.memory_space<vmem>>, %arg4: memref<33x4224xbf16, #tpu.memory_space<vmem>>, %arg5: memref<536x128xf32, #tpu.memory_space<vmem>>, %arg6: memref<4x64xf32, #tpu.memory_space<vmem>>) attributes {dimension_semantics = [], scalar_prefetch = 0 : i64, scratch_operands = 0 : i64, tpu.core_type = #tpu.core_type<tc>} {
    %c0 = arith.constant 0 : index
    %c0_0 = arith.constant 0 : index
    %0 = vector.load %arg0[%c0, %c0_0] : memref<4x128xf32, #tpu.memory_space<vmem>>, vector<4x128xf32>
    %c0_1 = arith.constant 0 : index
    %c0_2 = arith.constant 0 : index
    %1 = vector.load %arg1[%c0_1, %c0_2] : memref<4x128xf32, #tpu.memory_space<vmem>>, vector<4x128xf32>
    %c0_3 = arith.constant 0 : index
    %c0_4 = arith.constant 0 : index
    %2 = vector.load %arg5[%c0_3, %c0_4] : memref<536x128xf32, #tpu.memory_space<vmem>>, vector<128x32xf32>
    %c528 = arith.constant 528 : index
    %c0_5 = arith.constant 0 : index
    %3 = vector.load %arg5[%c528, %c0_5] : memref<536x128xf32, #tpu.memory_space<vmem>>, vector<1x32xf32>
    %c529 = arith.constant 529 : index
    %c0_6 = arith.constant 0 : index
    %4 = vector.load %arg5[%c529, %c0_6] : memref<536x128xf32, #tpu.memory_space<vmem>>, vector<1x32xf32>
    %c256 = arith.constant 256 : index
    %c0_7 = arith.constant 0 : index
    %5 = vector.load %arg5[%c256, %c0_7] : memref<536x128xf32, #tpu.memory_space<vmem>>, vector<32x33xf32>
    %c530 = arith.constant 530 : index
    %c0_8 = arith.constant 0 : index
    %6 = vector.load %arg5[%c530, %c0_8] : memref<536x128xf32, #tpu.memory_space<vmem>>, vector<1x33xf32>
    %cst = arith.constant dense<0.000000e+00> : vector<4x32xf32>
    %7 = tpu.matmul %0, %2, %cst {dimension_numbers = #tpu.dot_dimension_numbers<[1], [0], [0], [1], [0, 0, 1, 1], [], []>} : vector<4x128xf32>, vector<128x32xf32>, vector<4x32xf32> -> vector<4x32xf32>
    %8 = vector.broadcast %3 : vector<1x32xf32> to vector<4x32xf32>
    %9 = arith.addf %7, %8 : vector<4x32xf32>
    %cst_9 = arith.constant 0.000000e+00 : f32
    %10 = vector.broadcast %cst_9 : f32 to vector<4x32xf32>
    %11 = arith.maximumf %9, %10 : vector<4x32xf32>
    %12 = arith.truncf %1 : vector<4x128xf32> to vector<4x128xbf16>
    %c0_10 = arith.constant 0 : index
    %c0_11 = arith.constant 0 : index
    %13 = vector.load %arg2[%c0_10, %c0_11] : memref<128x4096xbf16, #tpu.memory_space<vmem>>, vector<128x4096xbf16>
    %cst_12 = arith.constant dense<0.000000e+00> : vector<4x4096xf32>
    %14 = tpu.matmul %12, %13, %cst_12 {dimension_numbers = #tpu.dot_dimension_numbers<[1], [0], [0], [1], [0, 0, 1, 1], [], []>} : vector<4x128xbf16>, vector<128x4096xbf16>, vector<4x4096xf32> -> vector<4x4096xf32>
    %15 = vector.shape_cast %14 : vector<4x4096xf32> to vector<4x32x128xf32>
    %16 = vector.shape_cast %0 : vector<4x128xf32> to vector<4x1x128xf32>
    %17 = vector.broadcast %16 : vector<4x1x128xf32> to vector<4x32x128xf32>
    %18 = arith.mulf %15, %17 : vector<4x32x128xf32>
    %cst_13 = arith.constant dense<0.000000e+00> : vector<4x32xf32>
    %19 = vector.multi_reduction <add>, %18, %cst_13 [2] : vector<4x32x128xf32> to vector<4x32xf32>
    %20 = vector.broadcast %4 : vector<1x32xf32> to vector<4x32xf32>
    %21 = arith.addf %19, %20 : vector<4x32xf32>
    %cst_14 = arith.constant 0.000000e+00 : f32
    %22 = vector.broadcast %cst_14 : f32 to vector<4x32xf32>
    %23 = arith.subf %22, %21 : vector<4x32xf32>
    %24 = math.exp %23 : vector<4x32xf32>
    %cst_15 = arith.constant 1.000000e+00 : f32
    %25 = vector.broadcast %cst_15 : f32 to vector<4x32xf32>
    %26 = arith.addf %25, %24 : vector<4x32xf32>
    %27 = tpu.reciprocal %26 {approx = true} : vector<4x32xf32> -> vector<4x32xf32>
    %28 = arith.mulf %27, %11 : vector<4x32xf32>
    %cst_16 = arith.constant dense<0.000000e+00> : vector<4x33xf32>
    %29 = tpu.matmul %28, %5, %cst_16 {dimension_numbers = #tpu.dot_dimension_numbers<[1], [0], [0], [1], [0, 0, 1, 1], [], []>} : vector<4x32xf32>, vector<32x33xf32>, vector<4x33xf32> -> vector<4x33xf32>
    %30 = vector.broadcast %6 : vector<1x33xf32> to vector<4x33xf32>
    %31 = arith.addf %29, %30 : vector<4x33xf32>
    %cst_17 = arith.constant 0.000000e+00 : f32
    %32 = vector.broadcast %cst_17 : f32 to vector<4x33xf32>
    %33 = arith.maximumf %31, %32 : vector<4x33xf32>
    %c128 = arith.constant 128 : index
    %c0_18 = arith.constant 0 : index
    %34 = vector.load %arg5[%c128, %c0_18] : memref<536x128xf32, #tpu.memory_space<vmem>>, vector<128x32xf32>
    %c531 = arith.constant 531 : index
    %c0_19 = arith.constant 0 : index
    %35 = vector.load %arg5[%c531, %c0_19] : memref<536x128xf32, #tpu.memory_space<vmem>>, vector<1x32xf32>
    %c532 = arith.constant 532 : index
    %c0_20 = arith.constant 0 : index
    %36 = vector.load %arg5[%c532, %c0_20] : memref<536x128xf32, #tpu.memory_space<vmem>>, vector<1x32xf32>
    %c288 = arith.constant 288 : index
    %c0_21 = arith.constant 0 : index
    %37 = vector.load %arg5[%c288, %c0_21] : memref<536x128xf32, #tpu.memory_space<vmem>>, vector<32x33xf32>
    %c533 = arith.constant 533 : index
    %c0_22 = arith.constant 0 : index
    %38 = vector.load %arg5[%c533, %c0_22] : memref<536x128xf32, #tpu.memory_space<vmem>>, vector<1x33xf32>
    %cst_23 = arith.constant dense<0.000000e+00> : vector<4x32xf32>
    %39 = tpu.matmul %1, %34, %cst_23 {dimension_numbers = #tpu.dot_dimension_numbers<[1], [0], [0], [1], [0, 0, 1, 1], [], []>} : vector<4x128xf32>, vector<128x32xf32>, vector<4x32xf32> -> vector<4x32xf32>
    %40 = vector.broadcast %35 : vector<1x32xf32> to vector<4x32xf32>
    %41 = arith.addf %39, %40 : vector<4x32xf32>
    %cst_24 = arith.constant 0.000000e+00 : f32
    %42 = vector.broadcast %cst_24 : f32 to vector<4x32xf32>
    %43 = arith.maximumf %41, %42 : vector<4x32xf32>
    %44 = arith.truncf %0 : vector<4x128xf32> to vector<4x128xbf16>
    %c0_25 = arith.constant 0 : index
    %c0_26 = arith.constant 0 : index
    %45 = vector.load %arg3[%c0_25, %c0_26] : memref<128x4096xbf16, #tpu.memory_space<vmem>>, vector<128x4096xbf16>
    %cst_27 = arith.constant dense<0.000000e+00> : vector<4x4096xf32>
    %46 = tpu.matmul %44, %45, %cst_27 {dimension_numbers = #tpu.dot_dimension_numbers<[1], [0], [0], [1], [0, 0, 1, 1], [], []>} : vector<4x128xbf16>, vector<128x4096xbf16>, vector<4x4096xf32> -> vector<4x4096xf32>
    %47 = vector.shape_cast %46 : vector<4x4096xf32> to vector<4x32x128xf32>
    %48 = vector.shape_cast %1 : vector<4x128xf32> to vector<4x1x128xf32>
    %49 = vector.broadcast %48 : vector<4x1x128xf32> to vector<4x32x128xf32>
    %50 = arith.mulf %47, %49 : vector<4x32x128xf32>
    %cst_28 = arith.constant dense<0.000000e+00> : vector<4x32xf32>
    %51 = vector.multi_reduction <add>, %50, %cst_28 [2] : vector<4x32x128xf32> to vector<4x32xf32>
    %52 = vector.broadcast %36 : vector<1x32xf32> to vector<4x32xf32>
    %53 = arith.addf %51, %52 : vector<4x32xf32>
    %cst_29 = arith.constant 0.000000e+00 : f32
    %54 = vector.broadcast %cst_29 : f32 to vector<4x32xf32>
    %55 = arith.subf %54, %53 : vector<4x32xf32>
    %56 = math.exp %55 : vector<4x32xf32>
    %cst_30 = arith.constant 1.000000e+00 : f32
    %57 = vector.broadcast %cst_30 : f32 to vector<4x32xf32>
    %58 = arith.addf %57, %56 : vector<4x32xf32>
    %59 = tpu.reciprocal %58 {approx = true} : vector<4x32xf32> -> vector<4x32xf32>
    %60 = arith.mulf %59, %43 : vector<4x32xf32>
    %cst_31 = arith.constant dense<0.000000e+00> : vector<4x33xf32>
    %61 = tpu.matmul %60, %37, %cst_31 {dimension_numbers = #tpu.dot_dimension_numbers<[1], [0], [0], [1], [0, 0, 1, 1], [], []>} : vector<4x32xf32>, vector<32x33xf32>, vector<4x33xf32> -> vector<4x33xf32>
    %62 = vector.broadcast %38 : vector<1x33xf32> to vector<4x33xf32>
    %63 = arith.addf %61, %62 : vector<4x33xf32>
    %cst_32 = arith.constant 0.000000e+00 : f32
    %64 = vector.broadcast %cst_32 : f32 to vector<4x33xf32>
    %65 = arith.maximumf %63, %64 : vector<4x33xf32>
    %66 = arith.truncf %65 : vector<4x33xf32> to vector<4x33xbf16>
    %c0_33 = arith.constant 0 : index
    %c0_34 = arith.constant 0 : index
    %67 = vector.load %arg4[%c0_33, %c0_34] : memref<33x4224xbf16, #tpu.memory_space<vmem>>, vector<33x4224xbf16>
    %cst_35 = arith.constant dense<0.000000e+00> : vector<4x4224xf32>
    %68 = tpu.matmul %66, %67, %cst_35 {dimension_numbers = #tpu.dot_dimension_numbers<[1], [0], [0], [1], [0, 0, 1, 1], [], []>} : vector<4x33xbf16>, vector<33x4224xbf16>, vector<4x4224xf32> -> vector<4x4224xf32>
    %69 = vector.shape_cast %68 : vector<4x4224xf32> to vector<4x33x128xf32>
    %70 = vector.shape_cast %33 : vector<4x33xf32> to vector<4x33x1xf32>
    %71 = vector.broadcast %70 : vector<4x33x1xf32> to vector<4x33x128xf32>
    %72 = arith.mulf %69, %71 : vector<4x33x128xf32>
    %cst_36 = arith.constant dense<0.000000e+00> : vector<4x128xf32>
    %73 = vector.multi_reduction <add>, %72, %cst_36 [1] : vector<4x33x128xf32> to vector<4x128xf32>
    %c534 = arith.constant 534 : index
    %c0_37 = arith.constant 0 : index
    %74 = vector.load %arg5[%c534, %c0_37] : memref<536x128xf32, #tpu.memory_space<vmem>>, vector<1x128xf32>
    %75 = vector.broadcast %74 : vector<1x128xf32> to vector<4x128xf32>
    %76 = arith.addf %73, %75 : vector<4x128xf32>
    %cst_38 = arith.constant 0.000000e+00 : f32
    %77 = vector.broadcast %cst_38 : f32 to vector<4x128xf32>
    %78 = arith.maximumf %76, %77 : vector<4x128xf32>
    %c320 = arith.constant 320 : index
    %c0_39 = arith.constant 0 : index
    %79 = vector.load %arg5[%c320, %c0_39] : memref<536x128xf32, #tpu.memory_space<vmem>>, vector<128x64xf32>
    %cst_40 = arith.constant dense<0.000000e+00> : vector<4x64xf32>
    %80 = tpu.matmul %78, %79, %cst_40 {dimension_numbers = #tpu.dot_dimension_numbers<[1], [0], [0], [1], [0, 0, 1, 1], [], []>} : vector<4x128xf32>, vector<128x64xf32>, vector<4x64xf32> -> vector<4x64xf32>
    %c448 = arith.constant 448 : index
    %c0_41 = arith.constant 0 : index
    %81 = vector.load %arg5[%c448, %c0_41] : memref<536x128xf32, #tpu.memory_space<vmem>>, vector<33x64xf32>
    %cst_42 = arith.constant dense<0.000000e+00> : vector<4x64xf32>
    %82 = tpu.matmul %33, %81, %cst_42 {dimension_numbers = #tpu.dot_dimension_numbers<[1], [0], [0], [1], [0, 0, 1, 1], [], []>} : vector<4x33xf32>, vector<33x64xf32>, vector<4x64xf32> -> vector<4x64xf32>
    %83 = arith.addf %80, %82 : vector<4x64xf32>
    %c488 = arith.constant 488 : index
    %c0_43 = arith.constant 0 : index
    %84 = vector.load %arg5[%c488, %c0_43] : memref<536x128xf32, #tpu.memory_space<vmem>>, vector<33x64xf32>
    %cst_44 = arith.constant dense<0.000000e+00> : vector<4x64xf32>
    %85 = tpu.matmul %65, %84, %cst_44 {dimension_numbers = #tpu.dot_dimension_numbers<[1], [0], [0], [1], [0, 0, 1, 1], [], []>} : vector<4x33xf32>, vector<33x64xf32>, vector<4x64xf32> -> vector<4x64xf32>
    %86 = arith.addf %83, %85 : vector<4x64xf32>
    %c535 = arith.constant 535 : index
    %c0_45 = arith.constant 0 : index
    %87 = vector.load %arg5[%c535, %c0_45] : memref<536x128xf32, #tpu.memory_space<vmem>>, vector<1x64xf32>
    %88 = vector.broadcast %87 : vector<1x64xf32> to vector<4x64xf32>
    %89 = arith.addf %86, %88 : vector<4x64xf32>
    %cst_46 = arith.constant 0.000000e+00 : f32
    %90 = vector.broadcast %cst_46 : f32 to vector<4x64xf32>
    %91 = arith.maximumf %89, %90 : vector<4x64xf32>
    %c0_47 = arith.constant 0 : index
    %c0_48 = arith.constant 0 : index
    %92 = vector.load %arg6[%c0_47, %c0_48] : memref<4x64xf32, #tpu.memory_space<vmem>>, vector<4x64xf32>
    tpu.vector_store %arg6[%c0_47, %c0_48], %91 {strides = array<i32>} : memref<4x64xf32, #tpu.memory_space<vmem>>, vector<4x64xf32>,
    return
  }
}

</mosaic_0001>

<llo_original>
// kernel: _fused_call.1
$region0: #{_fused_call.1}
  #allocation0 [shape = 'u32[]', space=smem, size = 0x4, offset = 0x4, fixed_abs, tag = 'smem constant byte address 0x4 - core index']
  #allocation1 [shape = 'u32[72,128]{1,0:T(1,128)}', space=vmem, size = 0x9000, scoped, tag = 'internal scratch']
  %s0 = inlined_call_operand.hbm [shape: f32[4,128], index: 0, kind: input, shape index: {}]
  %s1 = inlined_call_operand.hbm [shape: f32[4,128], index: 1, kind: input, shape index: {}]
  %s2 = inlined_call_operand.hbm [shape: bf16[128,4096], index: 2, kind: input, shape index: {}]
  %s3 = inlined_call_operand.hbm [shape: bf16[128,4096], index: 3, kind: input, shape index: {}]
  %s4 = inlined_call_operand.hbm [shape: bf16[33,4224], index: 4, kind: input, shape index: {}]
  %s5 = inlined_call_operand.hbm [shape: f32[536,128], index: 5, kind: input, shape index: {}]
  %s6 = inlined_call_operand.hbm [shape: f32[4,64], index: 6, kind: output, shape index: {}]
  %s7 = sld [smem:[#allocation0]]
  $region58: #{_fused_call.1} parent=0
    _
  %s9 = ssub.s32 1, %s7
  %s10 = scalar_select 0, %s9, %s7
  $region1: #{_fused_call.1} parent=0
    #allocation2 [shape = 'u8[2048]{0}', space=vmem, size = 0x800, scoped, tag = 'input window, operand 0, single buffered']
    #allocation3 [shape = 's32[1]{0}', space=sflag, size = 0x4, scoped, tag = 'scoped memory for _fused_call.1']
    #allocation4 [shape = 's32[1]{0}', space=sflag, size = 0x4, scoped, tag = 'scoped memory for _fused_call.1']
    #allocation5 [shape = 'u8[2048]{0}', space=vmem, size = 0x800, scoped, tag = 'input window, operand 1, single buffered']
    #allocation6 [shape = 's32[1]{0}', space=sflag, size = 0x4, scoped, tag = 'scoped memory for _fused_call.1']
    #allocation7 [shape = 'u8[1048576]{0}', space=vmem, size = 0x100000, scoped, tag = 'input window, operand 2, single buffered']
    #allocation8 [shape = 'u8[1048576]{0}', space=vmem, size = 0x100000, scoped, tag = 'input window, operand 3, single buffered']
    #allocation9 [shape = 's32[1]{0}', space=sflag, size = 0x4, scoped, tag = 'scoped memory for _fused_call.1']
    #allocation10 [shape = 'u8[337920]{0}', space=vmem, size = 0x52800, scoped, tag = 'input window, operand 4, single buffered']
    #allocation11 [shape = 'u8[274432]{0}', space=vmem, size = 0x43000, scoped, tag = 'input window, operand 5, single buffered']
    #allocation12 [shape = 's32[1]{0}', space=sflag, size = 0x4, scoped, tag = 'scoped memory for _fused_call.1']
    #allocation13 [shape = 'u8[2048]{0}', space=vmem, size = 0x800, scoped, tag = 'output window, operand 0, single buffered']
    %11 = vsyncpa [#allocation3], 0
    %12 = vsyncpa [#allocation6], 0
    %13 = vsyncpa [#allocation9], 0
    %14 = vsyncpa [#allocation12], 0
    %15 = vsyncpa [#allocation4], 0
    // Predicated region
    $region2: #{_fused_call.1} parent=1 // pred_check
      _
    $region3: #{_fused_call.1} parent=1 // pred_check_branch
      %17 = sbr.rel (0) target = $region5
    $region4: #{_fused_call.1} parent=1 // pred_region
      %19 = vsyncadd [#allocation3], 0
      %s21 = sshll.u32 %s0, 4
      %s22 = int_to_ptr.hbm [resolvable:$true] %s21
      %s23 = sshll.u32 [#allocation2], 4
      %s24 = int_to_ptr.vmem [resolvable:$true] %s23
      %26 = dma.hbm_to_vmem [thread:$0]  %s22, 64, %s24, [#allocation3]
    $region5: #{_fused_call.1} parent=1 // pred_fallthru
      _
    // Predicated region
    $region6: #{_fused_call.1} parent=1 // pred_check
      _
    $region7: #{_fused_call.1} parent=1 // pred_check_branch
      %28 = sbr.rel (0) target = $region9
    $region8: #{_fused_call.1} parent=1 // pred_region
      %30 = vsyncadd [#allocation6], 0
      %s32 = sshll.u32 %s1, 4
      %s33 = int_to_ptr.hbm [resolvable:$true] %s32
      %s34 = sshll.u32 [#allocation5], 4
      %s35 = int_to_ptr.vmem [resolvable:$true] %s34
      %37 = dma.hbm_to_vmem [thread:$0]  %s33, 64, %s35, [#allocation6]
    $region9: #{_fused_call.1} parent=1 // pred_fallthru
      _
    // Predicated region
    $region10: #{_fused_call.1} parent=1 // pred_check
      _
    $region11: #{_fused_call.1} parent=1 // pred_check_branch
      %39 = sbr.rel (0) target = $region13
    $region12: #{_fused_call.1} parent=1 // pred_region
      %41 = vsyncadd [#allocation6], 0
      %s42 = sshll.u32 %s2, 4
      %s43 = int_to_ptr.hbm [resolvable:$true] %s42
      %s44 = sshll.u32 [#allocation7], 4
      %s45 = int_to_ptr.vmem [resolvable:$true] %s44
      %50 = dma.hbm_to_vmem [thread:$0]  %s43, 32768, %s45, [#allocation6], 2048, 2048, 128
    $region13: #{_fused_call.1} parent=1 // pred_fallthru
      _
    // Predicated region
    $region14: #{_fused_call.1} parent=1 // pred_check
      _
    $region15: #{_fused_call.1} parent=1 // pred_check_branch
      %52 = sbr.rel (0) target = $region17
    $region16: #{_fused_call.1} parent=1 // pred_region
      %54 = vsyncadd [#allocation9], 0
      %s55 = sshll.u32 %s3, 4
      %s56 = int_to_ptr.hbm [resolvable:$true] %s55
      %s57 = sshll.u32 [#allocation8], 4
      %s58 = int_to_ptr.vmem [resolvable:$true] %s57
      %63 = dma.hbm_to_vmem [thread:$0]  %s56, 32768, %s58, [#allocation9], 2048, 2048, 128
    $region17: #{_fused_call.1} parent=1 // pred_fallthru
      _
    // Predicated region
    $region18: #{_fused_call.1} parent=1 // pred_check
      _
    $region19: #{_fused_call.1} parent=1 // pred_check_branch
      %65 = sbr.rel (0) target = $region21
    $region20: #{_fused_call.1} parent=1 // pred_region
      %67 = vsyncadd [#allocation9], 0
      %s68 = sshll.u32 %s4, 4
      %s69 = int_to_ptr.hbm [resolvable:$true] %s68
      %s70 = sshll.u32 [#allocation10], 4
      %s71 = int_to_ptr.vmem [resolvable:$true] %s70
      %76 = dma.hbm_to_vmem [thread:$0]  %s69, 10560, %s71, [#allocation9], 2112, 2112, 132
    $region21: #{_fused_call.1} parent=1 // pred_fallthru
      _
    // Predicated region
    $region22: #{_fused_call.1} parent=1 // pred_check
      _
    $region23: #{_fused_call.1} parent=1 // pred_check_branch
      %78 = sbr.rel (0) target = $region25
    $region24: #{_fused_call.1} parent=1 // pred_region
      %80 = vsyncadd [#allocation12], 0
      %s81 = sshll.u32 %s5, 4
      %s82 = int_to_ptr.hbm [resolvable:$true] %s81
      %s83 = sshll.u32 [#allocation11], 4
      %s84 = int_to_ptr.vmem [resolvable:$true] %s83
      %89 = dma.hbm_to_vmem [thread:$0]  %s82, 8576, %s84, [#allocation12], 128, 128, 8
    $region25: #{_fused_call.1} parent=1 // pred_fallthru
      _
    // Predicated region
    $region26: #{_fused_call.1} parent=1 // pred_check
      _
    $region27: #{_fused_call.1} parent=1 // pred_check_branch
      %91 = sbr.rel (0) target = $region29
    $region28: #{_fused_call.1} parent=1 // pred_region
      %93 = dma.done [#allocation3], 64
    $region29: #{_fused_call.1} parent=1 // pred_fallthru
      _
    // Predicated region
    $region30: #{_fused_call.1} parent=1 // pred_check
      _
    $region31: #{_fused_call.1} parent=1 // pred_check_branch
      %95 = sbr.rel (0) target = $region33
    $region32: #{_fused_call.1} parent=1 // pred_region
      %97 = dma.done [#allocation6], 64
    $region33: #{_fused_call.1} parent=1 // pred_fallthru
      _
    // Predicated region
    $region34: #{_fused_call.1} parent=1 // pred_check
      _
    $region35: #{_fused_call.1} parent=1 // pred_check_branch
      %99 = sbr.rel (0) target = $region37
    $region36: #{_fused_call.1} parent=1 // pred_region
      %101 = dma.done [#allocation6], 32768
    $region37: #{_fused_call.1} parent=1 // pred_fallthru
      _
    // Predicated region
    $region38: #{_fused_call.1} parent=1 // pred_check
      _
    $region39: #{_fused_call.1} parent=1 // pred_check_branch
      %103 = sbr.rel (0) target = $region41
    $region40: #{_fused_call.1} parent=1 // pred_region
      %105 = dma.done [#allocation9], 32768
    $region41: #{_fused_call.1} parent=1 // pred_fallthru
      _
    // Predicated region
    $region42: #{_fused_call.1} parent=1 // pred_check
      _
    $region43: #{_fused_call.1} parent=1 // pred_check_branch
      %107 = sbr.rel (0) target = $region45
    $region44: #{_fused_call.1} parent=1 // pred_region
      %109 = dma.done [#allocation9], 10560
    $region45: #{_fused_call.1} parent=1 // pred_fallthru
      _
    // Predicated region
    $region46: #{_fused_call.1} parent=1 // pred_check
      _
    $region47: #{_fused_call.1} parent=1 // pred_check_branch
      %111 = sbr.rel (0) target = $region49
    $region48: #{_fused_call.1} parent=1 // pred_region
      %113 = dma.done [#allocation12], 8576
    $region49: #{_fused_call.1} parent=1 // pred_fallthru
      _
    %v115 = vld [vmem:[#allocation2] sm:$0xf]
    %v116 = vld [vmem:[#allocation5] sm:$0xf]
    %v117 = vld [vmem:[#allocation11] sm:$0xff]
    %v118 = vld [vmem:[#allocation11 + $0x8] sm:$0xff]
    %v119 = vld [vmem:[#allocation11 + $0x10] sm:$0xff]
    %v120 = vld [vmem:[#allocation11 + $0x18] sm:$0xff]
    %v121 = vld [vmem:[#allocation11 + $0x20] sm:$0xff]
    %v122 = vld [vmem:[#allocation11 + $0x28] sm:$0xff]
    %v123 = vld [vmem:[#allocation11 + $0x30] sm:$0xff]
    %v124 = vld [vmem:[#allocation11 + $0x38] sm:$0xff]
    %v125 = vld [vmem:[#allocation11 + $0x40] sm:$0xff]
    %v126 = vld [vmem:[#allocation11 + $0x48] sm:$0xff]
    %v127 = vld [vmem:[#allocation11 + $0x50] sm:$0xff]
    %v128 = vld [vmem:[#allocation11 + $0x58] sm:$0xff]
    %v129 = vld [vmem:[#allocation11 + $0x60] sm:$0xff]
    %v130 = vld [vmem:[#allocation11 + $0x68] sm:$0xff]
    %v131 = vld [vmem:[#allocation11 + $0x70] sm:$0xff]
    %v132 = vld [vmem:[#allocation11 + $0x78] sm:$0xff]
    %v133 = vld [vmem:[#allocation11 + $0x210] sm:$0x1]
    %v134 = vld [vmem:[#allocation11 + $0x211] sm:$0x1]
    %v135 = vld [vmem:[#allocation11 + $0x100] sm:$0xff]
    %v136 = vld [vmem:[#allocation11 + $0x108] sm:$0xff]
    %v137 = vld [vmem:[#allocation11 + $0x110] sm:$0xff]
    %v138 = vld [vmem:[#allocation11 + $0x118] sm:$0xff]
    %v139 = vld [vmem:[#allocation11 + $0x212] sm:$0x1]
    %v140 = vperm.slane %v133, 0
    %141 = vmatpush.msra.mxu0 %v132
    %142 = vmatpush.msra.mxu0 %v131
    %143 = vmatpush.msra.mxu0 %v130
    %144 = vmatpush.msra.mxu0 %v129
    %145 = vmatpush.msra.mxu0 %v128
    %146 = vmatpush.msra.mxu0 %v127
    %147 = vmatpush.msra.mxu0 %v126
    %148 = vmatpush.msra.mxu0 %v125
    %149 = vmatpush.msra.mxu0 %v124
    %150 = vmatpush.msra.mxu0 %v123
    %151 = vmatpush.msra.mxu0 %v122
    %152 = vmatpush.msra.mxu0 %v121
    %153 = vmatpush.msra.mxu0 %v120
    %154 = vmatpush.msra.mxu0 %v119
    %155 = vmatpush.msra.mxu0 %v118
    %156 = vmatpush.msra.mxu0 %v117
    %157 = vmatmul.f32.gmra.mxu0 %v115
    %v158 = vpop.f32.mrf.mxu0
    %v159 = vadd.f32 %v140, %v158
    %160 = vdwg.mxu0
    %v161 = vmax.f32 %v159, 0.0
    %v162 = vpack.c.bf16 %v116, %v116
    %v163 = vld [vmem:[#allocation7] sm:$0xff]
    %v164 = vld [vmem:[#allocation7 + $0x8] sm:$0xff]
    %v165 = vld [vmem:[#allocation7 + $0x10] sm:$0xff]
    %v166 = vld [vmem:[#allocation7 + $0x18] sm:$0xff]
    %v167 = vld [vmem:[#allocation7 + $0x20] sm:$0xff]
    %v168 = vld [vmem:[#allocation7 + $0x28] sm:$0xff]
    %v169 = vld [vmem:[#allocation7 + $0x30] sm:$0xff]
    %v170 = vld [vmem:[#allocation7 + $0x38] sm:$0xff]
    %v171 = vld [vmem:[#allocation7 + $0x40] sm:$0xff]
    %v172 = vld [vmem:[#allocation7 + $0x48] sm:$0xff]
    %v173 = vld [vmem:[#allocation7 + $0x50] sm:$0xff]
    %v174 = vld [vmem:[#allocation7 + $0x58] sm:$0xff]
    %v175 = vld [vmem:[#allocation7 + $0x60] sm:$0xff]
    %v176 = vld [vmem:[#allocation7 + $0x68] sm:$0xff]
    %v177 = vld [vmem:[#allocation7 + $0x70] sm:$0xff]
    %v178 = vld [vmem:[#allocation7 + $0x78] sm:$0xff]
    %v179 = vld [vmem:[#allocation7 + $0x80] sm:$0xff]
    %v180 = vld [vmem:[#allocation7 + $0x88] sm:$0xff]
    %v181 = vld [vmem:[#allocation7 + $0x90] sm:$0xff]
    %v182 = vld [vmem:[#allocation7 + $0x98] sm:$0xff]
    %v183 = vld [vmem:[#allocation7 + $0xa0] sm:$0xff]
    %v184 = vld [vmem:[#allocation7 + $0xa8] sm:$0xff]
    %v185 = vld [vmem:[#allocation7 + $0xb0] sm:$0xff]
    %v186 = vld [vmem:[#allocation7 + $0xb8] sm:$0xff]
    %v187 = vld [vmem:[#allocation7 + $0xc0] sm:$0xff]
    %v188 = vld [vmem:[#allocation7 + $0xc8] sm:$0xff]
    %v189 = vld [vmem:[#allocation7 + $0xd0] sm:$0xff]
    %v190 = vld [vmem:[#allocation7 + $0xd8] sm:$0xff]
    %v191 = vld [vmem:[#allocation7 + $0xe0] sm:$0xff]
    %v192 = vld [vmem:[#allocation7 + $0xe8] sm:$0xff]
    %v193 = vld [vmem:[#allocation7 + $0xf0] sm:$0xff]
    %v194 = vld [vmem:[#allocation7 + $0xf8] sm:$0xff]
    %v195 = vld [vmem:[#allocation7 + $0x100] sm:$0xff]
    %v196 = vld [vmem:[#allocation7 + $0x108] sm:$0xff]
    %v197 = vld [vmem:[#allocation7 + $0x110] sm:$0xff]
    %v198 = vld [vmem:[#allocation7 + $0x118] sm:$0xff]
    %v199 = vld [vmem:[#allocation7 + $0x120] sm:$0xff]
    %v200 = vld [vmem:[#allocation7 + $0x128] sm:$0xff]
    %v201 = vld [vmem:[#allocation7 + $0x130] sm:$0xff]
    %v202 = vld [vmem:[#allocation7 + $0x138] sm:$0xff]
    %v203 = vld [vmem:[#allocation7 + $0x140] sm:$0xff]
    %v204 = vld [vmem:[#allocation7 + $0x148] sm:$0xff]
    %v205 = vld [vmem:[#allocation7 + $0x150] sm:$0xff]
    %v206 = vld [vmem:[#allocation7 + $0x158] sm:$0xff]
    %v207 = vld [vmem:[#allocation7 + $0x160] sm:$0xff]
    %v208 = vld [vmem:[#allocation7 + $0x168] sm:$0xff]
    %v209 = vld [vmem:[#allocation7 + $0x170] sm:$0xff]
    %v210 = vld [vmem:[#allocation7 + $0x178] sm:$0xff]
    %v211 = vld [vmem:[#allocation7 + $0x180] sm:$0xff]
    %v212 = vld [vmem:[#allocation7 + $0x188] sm:$0xff]
    %v213 = vld [vmem:[#allocation7 + $0x190] sm:$0xff]
    %v214 = vld [vmem:[#allocation7 + $0x198] sm:$0xff]
    %v215 = vld [vmem:[#allocation7 + $0x1a0] sm:$0xff]
    %v216 = vld [vmem:[#allocation7 + $0x1a8] sm:$0xff]
    %v217 = vld [vmem:[#allocation7 + $0x1b0] sm:$0xff]
    %v218 = vld [vmem:[#allocation7 + $0x1b8] sm:$0xff]
    %v219 = vld [vmem:[#allocation7 + $0x1c0] sm:$0xff]
    %v220 = vld [vmem:[#allocation7 + $0x1c8] sm:$0xff]
    %v221 = vld [vmem:[#allocation7 + $0x1d0] sm:$0xff]
    %v222 = vld [vmem:[#allocation7 + $0x1d8] sm:$0xff]
    %v223 = vld [vmem:[#allocation7 + $0x1e0] sm:$0xff]
    %v224 = vld [vmem:[#allocation7 + $0x1e8] sm:$0xff]
    %v225 = vld [vmem:[#allocation7 + $0x1f0] sm:$0xff]
    %v226 = vld [vmem:[#allocation7 + $0x1f8] sm:$0xff]
    %v227 = vld [vmem:[#allocation7 + $0x200] sm:$0xff]
    %v228 = vld [vmem:[#allocation7 + $0x208] sm:$0xff]
    %v229 = vld [vmem:[#allocation7 + $0x210] sm:$0xff]
    %v230 = vld [vmem:[#allocation7 + $0x218] sm:$0xff]
    %v231 = vld [vmem:[#allocation7 + $0x220] sm:$0xff]
    %v232 = vld [vmem:[#allocation7 + $0x228] sm:$0xff]
    %v233 = vld [vmem:[#allocation7 + $0x230] sm:$0xff]
    %v234 = vld [vmem:[#allocation7 + $0x238] sm:$0xff]
    %v235 = vld [vmem:[#allocation7 + $0x240] sm:$0xff]
    %v236 = vld [vmem:[#allocation7 + $0x248] sm:$0xff]
    %v237 = vld [vmem:[#allocation7 + $0x250] sm:$0xff]
    %v238 = vld [vmem:[#allocation7 + $0x258] sm:$0xff]
    %v239 = vld [vmem:[#allocation7 + $0x260] sm:$0xff]
    %v240 = vld [vmem:[#allocation7 + $0x268] sm:$0xff]
    %v241 = vld [vmem:[#allocation7 + $0x270] sm:$0xff]
    %v242 = vld [vmem:[#allocation7 + $0x278] sm:$0xff]
    %v243 = vld [vmem:[#allocation7 + $0x280] sm:$0xff]
    %v244 = vld [vmem:[#allocation7 + $0x288] sm:$0xff]
    %v245 = vld [vmem:[#allocation7 + $0x290] sm:$0xff]
    %v246 = vld [vmem:[#allocation7 + $0x298] sm:$0xff]
    %v247 = vld [vmem:[#allocation7 + $0x2a0] sm:$0xff]
    %v248 = vld [vmem:[#allocation7 + $0x2a8] sm:$0xff]
    %v249 = vld [vmem:[#allocation7 + $0x2b0] sm:$0xff]
    %v250 = vld [vmem:[#allocation7 + $0x2b8] sm:$0xff]
    %v251 = vld [vmem:[#allocation7 + $0x2c0] sm:$0xff]
    %v252 = vld [vmem:[#allocation7 + $0x2c8] sm:$0xff]
    %v253 = vld [vmem:[#allocation7 + $0x2d0] sm:$0xff]
    %v254 = vld [vmem:[#allocation7 + $0x2d8] sm:$0xff]
    %v255 = vld [vmem:[#allocation7 + $0x2e0] sm:$0xff]
    %v256 = vld [vmem:[#allocation7 + $0x2e8] sm:$0xff]
    %v257 = vld [vmem:[#allocation7 + $0x2f0] sm:$0xff]
    %v258 = vld [vmem:[#allocation7 + $0x2f8] sm:$0xff]
    %v259 = vld [vmem:[#allocation7 + $0x300] sm:$0xff]
    %v260 = vld [vmem:[#allocation7 + $0x308] sm:$0xff]
    %v261 = vld [vmem:[#allocation7 + $0x310] sm:$0xff]
    %v262 = vld [vmem:[#allocation7 + $0x318] sm:$0xff]
    %v263 = vld [vmem:[#allocation7 + $0x320] sm:$0xff]
    %v264 = vld [vmem:[#allocation7 + $0x328] sm:$0xff]
    %v265 = vld [vmem:[#allocation7 + $0x330] sm:$0xff]
    %v266 = vld [vmem:[#allocation7 + $0x338] sm:$0xff]
    %v267 = vld [vmem:[#allocation7 + $0x340] sm:$0xff]
    %v268 = vld [vmem:[#allocation7 + $0x348] sm:$0xff]
    %v269 = vld [vmem:[#allocation7 + $0x350] sm:$0xff]
    %v270 = vld [vmem:[#allocation7 + $0x358] sm:$0xff]
    %v271 = vld [vmem:[#allocation7 + $0x360] sm:$0xff]
    %v272 = vld [vmem:[#allocation7 + $0x368] sm:$0xff]
    %v273 = vld [vmem:[#allocation7 + $0x370] sm:$0xff]
    %v274 = vld [vmem:[#allocation7 + $0x378] sm:$0xff]
    %v275 = vld [vmem:[#allocation7 + $0x380] sm:$0xff]
    %v276 = vld [vmem:[#allocation7 + $0x388] sm:$0xff]
    %v277 = vld [vmem:[#allocation7 + $0x390] sm:$0xff]
    %v278 = vld [vmem:[#allocation7 + $0x398] sm:$0xff]
    %v279 = vld [vmem:[#allocation7 + $0x3a0] sm:$0xff]
    %v280 = vld [vmem:[#allocation7 + $0x3a8] sm:$0xff]
    %v281 = vld [vmem:[#allocation7 + $0x3b0] sm:$0xff]
    %v282 = vld [vmem:[#allocation7 + $0x3b8] sm:$0xff]
    %v283 = vld [vmem:[#allocation7 + $0x3c0] sm:$0xff]
    %v284 = vld [vmem:[#allocation7 + $0x3c8] sm:$0xff]
    %v285 = vld [vmem:[#allocation7 + $0x3d0] sm:$0xff]
    %v286 = vld [vmem:[#allocation7 + $0x3d8] sm:$0xff]
    %v287 = vld [vmem:[#allocation7 + $0x3e0] sm:$0xff]
    %v288 = vld [vmem:[#allocation7 + $0x3e8] sm:$0xff]
    %v289 = vld [vmem:[#allocation7 + $0x3f0] sm:$0xff]
    %v290 = vld [vmem:[#allocation7 + $0x3f8] sm:$0xff]
    %v291 = vld [vmem:[#allocation7 + $0x400] sm:$0xff]
    %v292 = vld [vmem:[#allocation7 + $0x408] sm:$0xff]
    %v293 = vld [vmem:[#allocation7 + $0x410] sm:$0xff]
    %v294 = vld [vmem:[#allocation7 + $0x418] sm:$0xff]
    %v295 = vld [vmem:[#allocation7 + $0x420] sm:$0xff]
    %v296 = vld [vmem:[#allocation7 + $0x428] sm:$0xff]
    %v297 = vld [vmem:[#allocation7 + $0x430] sm:$0xff]
    %v298 = vld [vmem:[#allocation7 + $0x438] sm:$0xff]
    %v299 = vld [vmem:[#allocation7 + $0x440] sm:$0xff]
    %v300 = vld [vmem:[#allocation7 + $0x448] sm:$0xff]
    %v301 = vld [vmem:[#allocation7 + $0x450] sm:$0xff]
    %v302 = vld [vmem:[#allocation7 + $0x458] sm:$0xff]
    %v303 = vld [vmem:[#allocation7 + $0x460] sm:$0xff]
    %v304 = vld [vmem:[#allocation7 + $0x468] sm:$0xff]
    %v305 = vld [vmem:[#allocation7 + $0x470] sm:$0xff]
    %v306 = vld [vmem:[#allocation7 + $0x478] sm:$0xff]
    %v307 = vld [vmem:[#allocation7 + $0x480] sm:$0xff]
    %v308 = vld [vmem:[#allocation7 + $0x488] sm:$0xff]
    %v309 = vld [vmem:[#allocation7 + $0x490] sm:$0xff]
    %v310 = vld [vmem:[#allocation7 + $0x498] sm:$0xff]
    %v311 = vld [vmem:[#allocation7 + $0x4a0] sm:$0xff]
    %v312 = vld [vmem:[#allocation7 + $0x4a8] sm:$0xff]
    %v313 = vld [vmem:[#allocation7 + $0x4b0] sm:$0xff]
    %v314 = vld [vmem:[#allocation7 + $0x4b8] sm:$0xff]
    %v315 = vld [vmem:[#allocation7 + $0x4c0] sm:$0xff]
    %v316 = vld [vmem:[#allocation7 + $0x4c8] sm:$0xff]
    %v317 = vld [vmem:[#allocation7 + $0x4d0] sm:$0xff]
    %v318 = vld [vmem:[#allocation7 + $0x4d8] sm:$0xff]
    %v319 = vld [vmem:[#allocation7 + $0x4e0] sm:$0xff]
    %v320 = vld [vmem:[#allocation7 + $0x4e8] sm:$0xff]
    %v321 = vld [vmem:[#allocation7 + $0x4f0] sm:$0xff]
    %v322 = vld [vmem:[#allocation7 + $0x4f8] sm:$0xff]
    %v323 = vld [vmem:[#allocation7 + $0x500] sm:$0xff]
    %v324 = vld [vmem:[#allocation7 + $0x508] sm:$0xff]
    %v325 = vld [vmem:[#allocation7 + $0x510] sm:$0xff]
    %v326 = vld [vmem:[#allocation7 + $0x518] sm:$0xff]
    %v327 = vld [vmem:[#allocation7 + $0x520] sm:$0xff]
    %v328 = vld [vmem:[#allocation7 + $0x528] sm:$0xff]
    %v329 = vld [vmem:[#allocation7 + $0x530] sm:$0xff]
    %v330 = vld [vmem:[#allocation7 + $0x538] sm:$0xff]
    %v331 = vld [vmem:[#allocation7 + $0x540] sm:$0xff]
    %v332 = vld [vmem:[#allocation7 + $0x548] sm:$0xff]
    %v333 = vld [vmem:[#allocation7 + $0x550] sm:$0xff]
    %v334 = vld [vmem:[#allocation7 + $0x558] sm:$0xff]
    %v335 = vld [vmem:[#allocation7 + $0x560] sm:$0xff]
    %v336 = vld [vmem:[#allocation7 + $0x568] sm:$0xff]
    %v337 = vld [vmem:[#allocation7 + $0x570] sm:$0xff]
    %v338 = vld [vmem:[#allocation7 + $0x578] sm:$0xff]
    %v339 = vld [vmem:[#allocation7 + $0x580] sm:$0xff]
    %v340 = vld [vmem:[#allocation7 + $0x588] sm:$0xff]
    %v341 = vld [vmem:[#allocation7 + $0x590] sm:$0xff]
    %v342 = vld [vmem:[#allocation7 + $0x598] sm:$0xff]
    %v343 = vld [vmem:[#allocation7 + $0x5a0] sm:$0xff]
    %v344 = vld [vmem:[#allocation7 + $0x5a8] sm:$0xff]
    %v345 = vld [vmem:[#allocation7 + $0x5b0] sm:$0xff]
    %v346 = vld [vmem:[#allocation7 + $0x5b8] sm:$0xff]
    %v347 = vld [vmem:[#allocation7 + $0x5c0] sm:$0xff]
    %v348 = vld [vmem:[#allocation7 + $0x5c8] sm:$0xff]
    %v349 = vld [vmem:[#allocation7 + $0x5d0] sm:$0xff]
    %v350 = vld [vmem:[#allocation7 + $0x5d8] sm:$0xff]
    %v351 = vld [vmem:[#allocation7 + $0x5e0] sm:$0xff]
    %v352 = vld [vmem:[#allocation7 + $0x5e8] sm:$0xff]
    %v353 = vld [vmem:[#allocation7 + $0x5f0] sm:$0xff]
    %v354 = vld [vmem:[#allocation7 + $0x5f8] sm:$0xff]
    %v355 = vld [vmem:[#allocation7 + $0x600] sm:$0xff]
    %v356 = vld [vmem:[#allocation7 + $0x608] sm:$0xff]
    %v357 = vld [vmem:[#allocation7 + $0x610] sm:$0xff]
    %v358 = vld [vmem:[#allocation7 + $0x618] sm:$0xff]
    %v359 = vld [vmem:[#allocation7 + $0x620] sm:$0xff]
    %v360 = vld [vmem:[#allocation7 + $0x628] sm:$0xff]
    %v361 = vld [vmem:[#allocation7 + $0x630] sm:$0xff]
    %v362 = vld [vmem:[#allocation7 + $0x638] sm:$0xff]
    %v363 = vld [vmem:[#allocation7 + $0x640] sm:$0xff]
    %v364 = vld [vmem:[#allocation7 + $0x648] sm:$0xff]
    %v365 = vld [vmem:[#allocation7 + $0x650] sm:$0xff]
    %v366 = vld [vmem:[#allocation7 + $0x658] sm:$0xff]
    %v367 = vld [vmem:[#allocation7 + $0x660] sm:$0xff]
    %v368 = vld [vmem:[#allocation7 + $0x668] sm:$0xff]
    %v369 = vld [vmem:[#allocation7 + $0x670] sm:$0xff]
    %v370 = vld [vmem:[#allocation7 + $0x678] sm:$0xff]
    %v371 = vld [vmem:[#allocation7 + $0x680] sm:$0xff]
    %v372 = vld [vmem:[#allocation7 + $0x688] sm:$0xff]
    %v373 = vld [vmem:[#allocation7 + $0x690] sm:$0xff]
    %v374 = vld [vmem:[#allocation7 + $0x698] sm:$0xff]
    %v375 = vld [vmem:[#allocation7 + $0x6a0] sm:$0xff]
    %v376 = vld [vmem:[#allocation7 + $0x6a8] sm:$0xff]
    %v377 = vld [vmem:[#allocation7 + $0x6b0] sm:$0xff]
    %v378 = vld [vmem:[#allocation7 + $0x6b8] sm:$0xff]
    %v379 = vld [vmem:[#allocation7 + $0x6c0] sm:$0xff]
    %v380 = vld [vmem:[#allocation7 + $0x6c8] sm:$0xff]
    %v381 = vld [vmem:[#allocation7 + $0x6d0] sm:$0xff]
    %v382 = vld [vmem:[#allocation7 + $0x6d8] sm:$0xff]
    %v383 = vld [vmem:[#allocation7 + $0x6e0] sm:$0xff]
    %v384 = vld [vmem:[#allocation7 + $0x6e8] sm:$0xff]
    %v385 = vld [vmem:[#allocation7 + $0x6f0] sm:$0xff]
    %v386 = vld [vmem:[#allocation7 + $0x6f8] sm:$0xff]
    %v387 = vld [vmem:[#allocation7 + $0x700] sm:$0xff]
    %v388 = vld [vmem:[#allocation7 + $0x708] sm:$0xff]
    %v389 = vld [vmem:[#allocation7 + $0x710] sm:$0xff]
    %v390 = vld [vmem:[#allocation7 + $0x718] sm:$0xff]
    %v391 = vld [vmem:[#allocation7 + $0x720] sm:$0xff]
    %v392 = vld [vmem:[#allocation7 + $0x728] sm:$0xff]
    %v393 = vld [vmem:[#allocation7 + $0x730] sm:$0xff]
    %v394 = vld [vmem:[#allocation7 + $0x738] sm:$0xff]
    %v395 = vld [vmem:[#allocation7 + $0x740] sm:$0xff]
    %v396 = vld [vmem:[#allocation7 + $0x748] sm:$0xff]
    %v397 = vld [vmem:[#allocation7 + $0x750] sm:$0xff]
    %v398 = vld [vmem:[#allocation7 + $0x758] sm:$0xff]
    %v399 = vld [vmem:[#allocation7 + $0x760] sm:$0xff]
    %v400 = vld [vmem:[#allocation7 + $0x768] sm:$0xff]
    %v401 = vld [vmem:[#allocation7 + $0x770] sm:$0xff]
    %v402 = vld [vmem:[#allocation7 + $0x778] sm:$0xff]
    %v403 = vld [vmem:[#allocation7 + $0x780] sm:$0xff]
    %v404 = vld [vmem:[#allocation7 + $0x788] sm:$0xff]
    %v405 = vld [vmem:[#allocation7 + $0x790] sm:$0xff]
    %v406 = vld [vmem:[#allocation7 + $0x798] sm:$0xff]
    %v407 = vld [vmem:[#allocation7 + $0x7a0] sm:$0xff]
    %v408 = vld [vmem:[#allocation7 + $0x7a8] sm:$0xff]
    %v409 = vld [vmem:[#allocation7 + $0x7b0] sm:$0xff]
    %v410 = vld [vmem:[#allocation7 + $0x7b8] sm:$0xff]
    %v411 = vld [vmem:[#allocation7 + $0x7c0] sm:$0xff]
    %v412 = vld [vmem:[#allocation7 + $0x7c8] sm:$0xff]
    %v413 = vld [vmem:[#allocation7 + $0x7d0] sm:$0xff]
    %v414 = vld [vmem:[#allocation7 + $0x7d8] sm:$0xff]
    %v415 = vld [vmem:[#allocation7 + $0x7e0] sm:$0xff]
    %v416 = vld [vmem:[#allocation7 + $0x7e8] sm:$0xff]
    %v417 = vld [vmem:[#allocation7 + $0x7f0] sm:$0xff]
    %v418 = vld [vmem:[#allocation7 + $0x7f8] sm:$0xff]
    %v675 = vunpack.c.l.b16 %v163
    %v676 = vunpack.c.h.b16 %v163
    %v677 = vunpack.c.l.b16 %v164
    %v678 = vunpack.c.h.b16 %v164
    %v679 = vunpack.c.l.b16 %v165
    %v680 = vunpack.c.h.b16 %v165
    %v681 = vunpack.c.l.b16 %v166
    %v682 = vunpack.c.h.b16 %v166
    %v683 = vunpack.c.l.b16 %v167
    %v684 = vunpack.c.h.b16 %v167
    %v685 = vunpack.c.l.b16 %v168
    %v686 = vunpack.c.h.b16 %v168
    %v687 = vunpack.c.l.b16 %v169
    %v688 = vunpack.c.h.b16 %v169
    %v689 = vunpack.c.l.b16 %v170
    %v690 = vunpack.c.h.b16 %v170
    %v691 = vunpack.c.l.b16 %v171
    %v692 = vunpack.c.h.b16 %v171
    %v693 = vunpack.c.l.b16 %v172
    %v694 = vunpack.c.h.b16 %v172
    %v695 = vunpack.c.l.b16 %v173
    %v696 = vunpack.c.h.b16 %v173
    %v697 = vunpack.c.l.b16 %v174
    %v698 = vunpack.c.h.b16 %v174
    %v699 = vunpack.c.l.b16 %v175
    %v700 = vunpack.c.h.b16 %v175
    %v701 = vunpack.c.l.b16 %v176
    %v702 = vunpack.c.h.b16 %v176
    %v703 = vunpack.c.l.b16 %v177
    %v704 = vunpack.c.h.b16 %v177
    %v705 = vunpack.c.l.b16 %v178
    %v706 = vunpack.c.h.b16 %v178
    %v707 = vunpack.c.l.b16 %v179
    %v708 = vunpack.c.h.b16 %v179
    %v709 = vunpack.c.l.b16 %v180
    %v710 = vunpack.c.h.b16 %v180
    %v711 = vunpack.c.l.b16 %v181
    %v712 = vunpack.c.h.b16 %v181
    %v713 = vunpack.c.l.b16 %v182
    %v714 = vunpack.c.h.b16 %v182
    %v715 = vunpack.c.l.b16 %v183
    %v716 = vunpack.c.h.b16 %v183
    %v717 = vunpack.c.l.b16 %v184
    %v718 = vunpack.c.h.b16 %v184
    %v719 = vunpack.c.l.b16 %v185
    %v720 = vunpack.c.h.b16 %v185
    %v721 = vunpack.c.l.b16 %v186
    %v722 = vunpack.c.h.b16 %v186
    %v723 = vunpack.c.l.b16 %v187
    %v724 = vunpack.c.h.b16 %v187
    %v725 = vunpack.c.l.b16 %v188
    %v726 = vunpack.c.h.b16 %v188
    %v727 = vunpack.c.l.b16 %v189
    %v728 = vunpack.c.h.b16 %v189
    %v729 = vunpack.c.l.b16 %v190
    %v730 = vunpack.c.h.b16 %v190
    %v731 = vunpack.c.l.b16 %v191
    %v732 = vunpack.c.h.b16 %v191
    %v733 = vunpack.c.l.b16 %v192
    %v734 = vunpack.c.h.b16 %v192
    %v735 = vunpack.c.l.b16 %v193
    %v736 = vunpack.c.h.b16 %v193
    %v737 = vunpack.c.l.b16 %v194
    %v738 = vunpack.c.h.b16 %v194
    %v739 = vunpack.c.l.b16 %v195
    %v740 = vunpack.c.h.b16 %v195
    %v741 = vunpack.c.l.b16 %v196
    %v742 = vunpack.c.h.b16 %v196
    %v743 = vunpack.c.l.b16 %v197
    %v744 = vunpack.c.h.b16 %v197
    %v745 = vunpack.c.l.b16 %v198
    %v746 = vunpack.c.h.b16 %v198
    %v747 = vunpack.c.l.b16 %v199
    %v748 = vunpack.c.h.b16 %v199
    %v749 = vunpack.c.l.b16 %v200
    %v750 = vunpack.c.h.b16 %v200
    %v751 = vunpack.c.l.b16 %v201
    %v752 = vunpack.c.h.b16 %v201
    %v753 = vunpack.c.l.b16 %v202
    %v754 = vunpack.c.h.b16 %v202
    %v755 = vunpack.c.l.b16 %v203
    %v756 = vunpack.c.h.b16 %v203
    %v757 = vunpack.c.l.b16 %v204
    %v758 = vunpack.c.h.b16 %v204
    %v759 = vunpack.c.l.b16 %v205
    %v760 = vunpack.c.h.b16 %v205
    %v761 = vunpack.c.l.b16 %v206
    %v762 = vunpack.c.h.b16 %v206
    %v763 = vunpack.c.l.b16 %v207
    %v764 = vunpack.c.h.b16 %v207
    %v765 = vunpack.c.l.b16 %v208
    %v766 = vunpack.c.h.b16 %v208
    %v767 = vunpack.c.l.b16 %v209
    %v768 = vunpack.c.h.b16 %v209
    %v769 = vunpack.c.l.b16 %v210
    %v770 = vunpack.c.h.b16 %v210
    %v771 = vunpack.c.l.b16 %v211
    %v772 = vunpack.c.h.b16 %v211
    %v773 = vunpack.c.l.b16 %v212
    %v774 = vunpack.c.h.b16 %v212
    %v775 = vunpack.c.l.b16 %v213
    %v776 = vunpack.c.h.b16 %v213
    %v777 = vunpack.c.l.b16 %v214
    %v778 = vunpack.c.h.b16 %v214
    %v779 = vunpack.c.l.b16 %v215
    %v780 = vunpack.c.h.b16 %v215
    %v781 = vunpack.c.l.b16 %v216
    %v782 = vunpack.c.h.b16 %v216
    %v783 = vunpack.c.l.b16 %v217
    %v784 = vunpack.c.h.b16 %v217
    %v785 = vunpack.c.l.b16 %v218
    %v786 = vunpack.c.h.b16 %v218
    %v787 = vunpack.c.l.b16 %v219
    %v788 = vunpack.c.h.b16 %v219
    %v789 = vunpack.c.l.b16 %v220
    %v790 = vunpack.c.h.b16 %v220
    %v791 = vunpack.c.l.b16 %v221
    %v792 = vunpack.c.h.b16 %v221
    %v793 = vunpack.c.l.b16 %v222
    %v794 = vunpack.c.h.b16 %v222
    %v795 = vunpack.c.l.b16 %v223
    %v796 = vunpack.c.h.b16 %v223
    %v797 = vunpack.c.l.b16 %v224
    %v798 = vunpack.c.h.b16 %v224
    %v799 = vunpack.c.l.b16 %v225
    %v800 = vunpack.c.h.b16 %v225
    %v801 = vunpack.c.l.b16 %v226
    %v802 = vunpack.c.h.b16 %v226
    %v803 = vunpack.c.l.b16 %v227
    %v804 = vunpack.c.h.b16 %v227
    %v805 = vunpack.c.l.b16 %v228
    %v806 = vunpack.c.h.b16 %v228
    %v807 = vunpack.c.l.b16 %v229
    %v808 = vunpack.c.h.b16 %v229
    %v809 = vunpack.c.l.b16 %v230
    %v810 = vunpack.c.h.b16 %v230
    %v811 = vunpack.c.l.b16 %v231
    %v812 = vunpack.c.h.b16 %v231
    %v813 = vunpack.c.l.b16 %v232
    %v814 = vunpack.c.h.b16 %v232
    %v815 = vunpack.c.l.b16 %v233
    %v816 = vunpack.c.h.b16 %v233
    %v817 = vunpack.c.l.b16 %v234
    %v818 = vunpack.c.h.b16 %v234
    %v819 = vunpack.c.l.b16 %v235
    %v820 = vunpack.c.h.b16 %v235
    %v821 = vunpack.c.l.b16 %v236
    %v822 = vunpack.c.h.b16 %v236
    %v823 = vunpack.c.l.b16 %v237
    %v824 = vunpack.c.h.b16 %v237
    %v825 = vunpack.c.l.b16 %v238
    %v826 = vunpack.c.h.b16 %v238
    %v827 = vunpack.c.l.b16 %v239
    %v828 = vunpack.c.h.b16 %v239
    %v829 = vunpack.c.l.b16 %v240
    %v830 = vunpack.c.h.b16 %v240
    %v831 = vunpack.c.l.b16 %v241
    %v832 = vunpack.c.h.b16 %v241
    %v833 = vunpack.c.l.b16 %v242
    %v834 = vunpack.c.h.b16 %v242
    %v835 = vunpack.c.l.b16 %v243
    %v836 = vunpack.c.h.b16 %v243
    %v837 = vunpack.c.l.b16 %v244
    %v838 = vunpack.c.h.b16 %v244
    %v839 = vunpack.c.l.b16 %v245
    %v840 = vunpack.c.h.b16 %v245
    %v841 = vunpack.c.l.b16 %v246
    %v842 = vunpack.c.h.b16 %v246
    %v843 = vunpack.c.l.b16 %v247
    %v844 = vunpack.c.h.b16 %v247
    %v845 = vunpack.c.l.b16 %v248
    %v846 = vunpack.c.h.b16 %v248
    %v847 = vunpack.c.l.b16 %v249
    %v848 = vunpack.c.h.b16 %v249
    %v849 = vunpack.c.l.b16 %v250
    %v850 = vunpack.c.h.b16 %v250
    %v851 = vunpack.c.l.b16 %v251
    %v852 = vunpack.c.h.b16 %v251
    %v853 = vunpack.c.l.b16 %v252
    %v854 = vunpack.c.h.b16 %v252
    %v855 = vunpack.c.l.b16 %v253
    %v856 = vunpack.c.h.b16 %v253
    %v857 = vunpack.c.l.b16 %v254
    %v858 = vunpack.c.h.b16 %v254
    %v859 = vunpack.c.l.b16 %v255
    %v860 = vunpack.c.h.b16 %v255
    %v861 = vunpack.c.l.b16 %v256
    %v862 = vunpack.c.h.b16 %v256
    %v863 = vunpack.c.l.b16 %v257
    %v864 = vunpack.c.h.b16 %v257
    %v865 = vunpack.c.l.b16 %v258
    %v866 = vunpack.c.h.b16 %v258
    %v867 = vunpack.c.l.b16 %v259
    %v868 = vunpack.c.h.b16 %v259
    %v869 = vunpack.c.l.b16 %v260
    %v870 = vunpack.c.h.b16 %v260
    %v871 = vunpack.c.l.b16 %v261
    %v872 = vunpack.c.h.b16 %v261
    %v873 = vunpack.c.l.b16 %v262
    %v874 = vunpack.c.h.b16 %v262
    %v875 = vunpack.c.l.b16 %v263
    %v876 = vunpack.c.h.b16 %v263
    %v877 = vunpack.c.l.b16 %v264
    %v878 = vunpack.c.h.b16 %v264
    %v879 = vunpack.c.l.b16 %v265
    %v880 = vunpack.c.h.b16 %v265
    %v881 = vunpack.c.l.b16 %v266
    %v882 = vunpack.c.h.b16 %v266
    %v883 = vunpack.c.l.b16 %v267
    %v884 = vunpack.c.h.b16 %v267
    %v885 = vunpack.c.l.b16 %v268
    %v886 = vunpack.c.h.b16 %v268
    %v887 = vunpack.c.l.b16 %v269
    %v888 = vunpack.c.h.b16 %v269
    %v889 = vunpack.c.l.b16 %v270
    %v890 = vunpack.c.h.b16 %v270
    %v891 = vunpack.c.l.b16 %v271
    %v892 = vunpack.c.h.b16 %v271
    %v893 = vunpack.c.l.b16 %v272
    %v894 = vunpack.c.h.b16 %v272
    %v895 = vunpack.c.l.b16 %v273
    %v896 = vunpack.c.h.b16 %v273
    %v897 = vunpack.c.l.b16 %v274
    %v898 = vunpack.c.h.b16 %v274
    %v899 = vunpack.c.l.b16 %v275
    %v900 = vunpack.c.h.b16 %v275
    %v901 = vunpack.c.l.b16 %v276
    %v902 = vunpack.c.h.b16 %v276
    %v903 = vunpack.c.l.b16 %v277
    %v904 = vunpack.c.h.b16 %v277
    %v905 = vunpack.c.l.b16 %v278
    %v906 = vunpack.c.h.b16 %v278
    %v907 = vunpack.c.l.b16 %v279
    %v908 = vunpack.c.h.b16 %v279
    %v909 = vunpack.c.l.b16 %v280
    %v910 = vunpack.c.h.b16 %v280
    %v911 = vunpack.c.l.b16 %v281
    %v912 = vunpack.c.h.b16 %v281
    %v913 = vunpack.c.l.b16 %v282
    %v914 = vunpack.c.h.b16 %v282
    %v915 = vunpack.c.l.b16 %v283
    %v916 = vunpack.c.h.b16 %v283
    %v917 = vunpack.c.l.b16 %v284
    %v918 = vunpack.c.h.b16 %v284
    %v919 = vunpack.c.l.b16 %v285
    %v920 = vunpack.c.h.b16 %v285
    %v921 = vunpack.c.l.b16 %v286
    %v922 = vunpack.c.h.b16 %v286
    %v923 = vunpack.c.l.b16 %v287
    %v924 = vunpack.c.h.b16 %v287
    %v925 = vunpack.c.l.b16 %v288
    %v926 = vunpack.c.h.b16 %v288
    %v927 = vunpack.c.l.b16 %v289
    %v928 = vunpack.c.h.b16 %v289
    %v929 = vunpack.c.l.b16 %v290
    %v930 = vunpack.c.h.b16 %v290
    %v931 = vunpack.c.l.b16 %v291
    %v932 = vunpack.c.h.b16 %v291
    %v933 = vunpack.c.l.b16 %v292
    %v934 = vunpack.c.h.b16 %v292
    %v935 = vunpack.c.l.b16 %v293
    %v936 = vunpack.c.h.b16 %v293
    %v937 = vunpack.c.l.b16 %v294
    %v938 = vunpack.c.h.b16 %v294
    %v939 = vunpack.c.l.b16 %v295
    %v940 = vunpack.c.h.b16 %v295
    %v941 = vunpack.c.l.b16 %v296
    %v942 = vunpack.c.h.b16 %v296
    %v943 = vunpack.c.l.b16 %v297
    %v944 = vunpack.c.h.b16 %v297
    %v945 = vunpack.c.l.b16 %v298
    %v946 = vunpack.c.h.b16 %v298
    %v947 = vunpack.c.l.b16 %v299
    %v948 = vunpack.c.h.b16 %v299
    %v949 = vunpack.c.l.b16 %v300
    %v950 = vunpack.c.h.b16 %v300
    %v951 = vunpack.c.l.b16 %v301
    %v952 = vunpack.c.h.b16 %v301
    %v953 = vunpack.c.l.b16 %v302
    %v954 = vunpack.c.h.b16 %v302
    %v955 = vunpack.c.l.b16 %v303
    %v956 = vunpack.c.h.b16 %v303
    %v957 = vunpack.c.l.b16 %v304
    %v958 = vunpack.c.h.b16 %v304
    %v959 = vunpack.c.l.b16 %v305
    %v960 = vunpack.c.h.b16 %v305
    %v961 = vunpack.c.l.b16 %v306
    %v962 = vunpack.c.h.b16 %v306
    %v963 = vunpack.c.l.b16 %v307
    %v964 = vunpack.c.h.b16 %v307
    %v965 = vunpack.c.l.b16 %v308
    %v966 = vunpack.c.h.b16 %v308
    %v967 = vunpack.c.l.b16 %v309
    %v968 = vunpack.c.h.b16 %v309
    %v969 = vunpack.c.l.b16 %v310
    %v970 = vunpack.c.h.b16 %v310
    %v971 = vunpack.c.l.b16 %v311
    %v972 = vunpack.c.h.b16 %v311
    %v973 = vunpack.c.l.b16 %v312
    %v974 = vunpack.c.h.b16 %v312
    %v975 = vunpack.c.l.b16 %v313
    %v976 = vunpack.c.h.b16 %v313
    %v977 = vunpack.c.l.b16 %v314
    %v978 = vunpack.c.h.b16 %v314
    %v979 = vunpack.c.l.b16 %v315
    %v980 = vunpack.c.h.b16 %v315
    %v981 = vunpack.c.l.b16 %v316
    %v982 = vunpack.c.h.b16 %v316
    %v983 = vunpack.c.l.b16 %v317
    %v984 = vunpack.c.h.b16 %v317
    %v985 = vunpack.c.l.b16 %v318
    %v986 = vunpack.c.h.b16 %v318
    %v987 = vunpack.c.l.b16 %v319
    %v988 = vunpack.c.h.b16 %v319
    %v989 = vunpack.c.l.b16 %v320
    %v990 = vunpack.c.h.b16 %v320
    %v991 = vunpack.c.l.b16 %v321
    %v992 = vunpack.c.h.b16 %v321
    %v993 = vunpack.c.l.b16 %v322
    %v994 = vunpack.c.h.b16 %v322
    %v995 = vunpack.c.l.b16 %v323
    %v996 = vunpack.c.h.b16 %v323
    %v997 = vunpack.c.l.b16 %v324
    %v998 = vunpack.c.h.b16 %v324
    %v999 = vunpack.c.l.b16 %v325
    %v1000 = vunpack.c.h.b16 %v325
    %v1001 = vunpack.c.l.b16 %v326
    %v1002 = vunpack.c.h.b16 %v326
    %v1003 = vunpack.c.l.b16 %v327
    %v1004 = vunpack.c.h.b16 %v327
    %v1005 = vunpack.c.l.b16 %v328
    %v1006 = vunpack.c.h.b16 %v328
    %v1007 = vunpack.c.l.b16 %v329
    %v1008 = vunpack.c.h.b16 %v329
    %v1009 = vunpack.c.l.b16 %v330
    %v1010 = vunpack.c.h.b16 %v330
    %v1011 = vunpack.c.l.b16 %v331
    %v1012 = vunpack.c.h.b16 %v331
    %v1013 = vunpack.c.l.b16 %v332
    %v1014 = vunpack.c.h.b16 %v332
    %v1015 = vunpack.c.l.b16 %v333
    %v1016 = vunpack.c.h.b16 %v333
    %v1017 = vunpack.c.l.b16 %v334
    %v1018 = vunpack.c.h.b16 %v334
    %v1019 = vunpack.c.l.b16 %v335
    %v1020 = vunpack.c.h.b16 %v335
    %v1021 = vunpack.c.l.b16 %v336
    %v1022 = vunpack.c.h.b16 %v336
    %v1023 = vunpack.c.l.b16 %v337
    %v1024 = vunpack.c.h.b16 %v337
    %v1025 = vunpack.c.l.b16 %v338
    %v1026 = vunpack.c.h.b16 %v338
    %v1027 = vunpack.c.l.b16 %v339
    %v1028 = vunpack.c.h.b16 %v339
    %v1029 = vunpack.c.l.b16 %v340
    %v1030 = vunpack.c.h.b16 %v340
    %v1031 = vunpack.c.l.b16 %v341
    %v1032 = vunpack.c.h.b16 %v341
    %v1033 = vunpack.c.l.b16 %v342
    %v1034 = vunpack.c.h.b16 %v342
    %v1035 = vunpack.c.l.b16 %v343
    %v1036 = vunpack.c.h.b16 %v343
    %v1037 = vunpack.c.l.b16 %v344
    %v1038 = vunpack.c.h.b16 %v344
    %v1039 = vunpack.c.l.b16 %v345
    %v1040 = vunpack.c.h.b16 %v345
    %v1041 = vunpack.c.l.b16 %v346
    %v1042 = vunpack.c.h.b16 %v346
    %v1043 = vunpack.c.l.b16 %v347
    %v1044 = vunpack.c.h.b16 %v347
    %v1045 = vunpack.c.l.b16 %v348
    %v1046 = vunpack.c.h.b16 %v348
    %v1047 = vunpack.c.l.b16 %v349
    %v1048 = vunpack.c.h.b16 %v349
    %v1049 = vunpack.c.l.b16 %v350
    %v1050 = vunpack.c.h.b16 %v350
    %v1051 = vunpack.c.l.b16 %v351
    %v1052 = vunpack.c.h.b16 %v351
    %v1053 = vunpack.c.l.b16 %v352
    %v1054 = vunpack.c.h.b16 %v352
    %v1055 = vunpack.c.l.b16 %v353
    %v1056 = vunpack.c.h.b16 %v353
    %v1057 = vunpack.c.l.b16 %v354
    %v1058 = vunpack.c.h.b16 %v354
    %v1059 = vunpack.c.l.b16 %v355
    %v1060 = vunpack.c.h.b16 %v355
    %v1061 = vunpack.c.l.b16 %v356
    %v1062 = vunpack.c.h.b16 %v356
    %v1063 = vunpack.c.l.b16 %v357
    %v1064 = vunpack.c.h.b16 %v357
    %v1065 = vunpack.c.l.b16 %v358
    %v1066 = vunpack.c.h.b16 %v358
    %v1067 = vunpack.c.l.b16 %v359
    %v1068 = vunpack.c.h.b16 %v359
    %v1069 = vunpack.c.l.b16 %v360
    %v1070 = vunpack.c.h.b16 %v360
    %v1071 = vunpack.c.l.b16 %v361
    %v1072 = vunpack.c.h.b16 %v361
    %v1073 = vunpack.c.l.b16 %v362
    %v1074 = vunpack.c.h.b16 %v362
    %v1075 = vunpack.c.l.b16 %v363
    %v1076 = vunpack.c.h.b16 %v363
    %v1077 = vunpack.c.l.b16 %v364
    %v1078 = vunpack.c.h.b16 %v364
    %v1079 = vunpack.c.l.b16 %v365
    %v1080 = vunpack.c.h.b16 %v365
    %v1081 = vunpack.c.l.b16 %v366
    %v1082 = vunpack.c.h.b16 %v366
    %v1083 = vunpack.c.l.b16 %v367
    %v1084 = vunpack.c.h.b16 %v367
    %v1085 = vunpack.c.l.b16 %v368
    %v1086 = vunpack.c.h.b16 %v368
    %v1087 = vunpack.c.l.b16 %v369
    %v1088 = vunpack.c.h.b16 %v369
    %v1089 = vunpack.c.l.b16 %v370
    %v1090 = vunpack.c.h.b16 %v370
    %v1091 = vunpack.c.l.b16 %v371
    %v1092 = vunpack.c.h.b16 %v371
    %v1093 = vunpack.c.l.b16 %v372
    %v1094 = vunpack.c.h.b16 %v372
    %v1095 = vunpack.c.l.b16 %v373
    %v1096 = vunpack.c.h.b16 %v373
    %v1097 = vunpack.c.l.b16 %v374
    %v1098 = vunpack.c.h.b16 %v374
    %v1099 = vunpack.c.l.b16 %v375
    %v1100 = vunpack.c.h.b16 %v375
    %v1101 = vunpack.c.l.b16 %v376
    %v1102 = vunpack.c.h.b16 %v376
    %v1103 = vunpack.c.l.b16 %v377
    %v1104 = vunpack.c.h.b16 %v377
    %v1105 = vunpack.c.l.b16 %v378
    %v1106 = vunpack.c.h.b16 %v378
    %v1107 = vunpack.c.l.b16 %v379
    %v1108 = vunpack.c.h.b16 %v379
    %v1109 = vunpack.c.l.b16 %v380
    %v1110 = vunpack.c.h.b16 %v380
    %v1111 = vunpack.c.l.b16 %v381
    %v1112 = vunpack.c.h.b16 %v381
    %v1113 = vunpack.c.l.b16 %v382
    %v1114 = vunpack.c.h.b16 %v382
    %v1115 = vunpack.c.l.b16 %v383
    %v1116 = vunpack.c.h.b16 %v383
    %v1117 = vunpack.c.l.b16 %v384
    %v1118 = vunpack.c.h.b16 %v384
    %v1119 = vunpack.c.l.b16 %v385
    %v1120 = vunpack.c.h.b16 %v385
    %v1121 = vunpack.c.l.b16 %v386
    %v1122 = vunpack.c.h.b16 %v386
    %v1123 = vunpack.c.l.b16 %v387
    %v1124 = vunpack.c.h.b16 %v387
    %v1125 = vunpack.c.l.b16 %v388
    %v1126 = vunpack.c.h.b16 %v388
    %v1127 = vunpack.c.l.b16 %v389
    %v1128 = vunpack.c.h.b16 %v389
    %v1129 = vunpack.c.l.b16 %v390
    %v1130 = vunpack.c.h.b16 %v390
    %v1131 = vunpack.c.l.b16 %v391
    %v1132 = vunpack.c.h.b16 %v391
    %v1133 = vunpack.c.l.b16 %v392
    %v1134 = vunpack.c.h.b16 %v392
    %v1135 = vunpack.c.l.b16 %v393
    %v1136 = vunpack.c.h.b16 %v393
    %v1137 = vunpack.c.l.b16 %v394
    %v1138 = vunpack.c.h.b16 %v394
    %v1139 = vunpack.c.l.b16 %v395
    %v1140 = vunpack.c.h.b16 %v395
    %v1141 = vunpack.c.l.b16 %v396
    %v1142 = vunpack.c.h.b16 %v396
    %v1143 = vunpack.c.l.b16 %v397
    %v1144 = vunpack.c.h.b16 %v397
    %v1145 = vunpack.c.l.b16 %v398
    %v1146 = vunpack.c.h.b16 %v398
    %v1147 = vunpack.c.l.b16 %v399
    %v1148 = vunpack.c.h.b16 %v399
    %v1149 = vunpack.c.l.b16 %v400
    %v1150 = vunpack.c.h.b16 %v400
    %v1151 = vunpack.c.l.b16 %v401
    %v1152 = vunpack.c.h.b16 %v401
    %v1153 = vunpack.c.l.b16 %v402
    %v1154 = vunpack.c.h.b16 %v402
    %v1155 = vunpack.c.l.b16 %v403
    %v1156 = vunpack.c.h.b16 %v403
    %v1157 = vunpack.c.l.b16 %v404
    %v1158 = vunpack.c.h.b16 %v404
    %v1159 = vunpack.c.l.b16 %v405
    %v1160 = vunpack.c.h.b16 %v405
    %v1161 = vunpack.c.l.b16 %v406
    %v1162 = vunpack.c.h.b16 %v406
    %v1163 = vunpack.c.l.b16 %v407
    %v1164 = vunpack.c.h.b16 %v407
    %v1165 = vunpack.c.l.b16 %v408
    %v1166 = vunpack.c.h.b16 %v408
    %v1167 = vunpack.c.l.b16 %v409
    %v1168 = vunpack.c.h.b16 %v409
    %v1169 = vunpack.c.l.b16 %v410
    %v1170 = vunpack.c.h.b16 %v410
    %v1171 = vunpack.c.l.b16 %v411
    %v1172 = vunpack.c.h.b16 %v411
    %v1173 = vunpack.c.l.b16 %v412
    %v1174 = vunpack.c.h.b16 %v412
    %v1175 = vunpack.c.l.b16 %v413
    %v1176 = vunpack.c.h.b16 %v413
    %v1177 = vunpack.c.l.b16 %v414
    %v1178 = vunpack.c.h.b16 %v414
    %v1179 = vunpack.c.l.b16 %v415
    %v1180 = vunpack.c.h.b16 %v415
    %v1181 = vunpack.c.l.b16 %v416
    %v1182 = vunpack.c.h.b16 %v416
    %v1183 = vunpack.c.l.b16 %v417
    %v1184 = vunpack.c.h.b16 %v417
    %v1185 = vunpack.c.l.b16 %v418
    %v1186 = vunpack.c.h.b16 %v418
    %v1187 = vpack.c.b16 %v707, %v675
    %v1188 = vpack.c.b16 %v708, %v676
    %v1189 = vpack.c.b16 %v709, %v677
    %v1190 = vpack.c.b16 %v710, %v678
    %v1191 = vpack.c.b16 %v711, %v679
    %v1192 = vpack.c.b16 %v712, %v680
    %v1193 = vpack.c.b16 %v713, %v681
    %v1194 = vpack.c.b16 %v714, %v682
    %v1195 = vpack.c.b16 %v715, %v683
    %v1196 = vpack.c.b16 %v716, %v684
    %v1197 = vpack.c.b16 %v717, %v685
    %v1198 = vpack.c.b16 %v718, %v686
    %v1199 = vpack.c.b16 %v719, %v687
    %v1200 = vpack.c.b16 %v720, %v688
    %v1201 = vpack.c.b16 %v721, %v689
    %v1202 = vpack.c.b16 %v722, %v690
    %v1203 = vpack.c.b16 %v723, %v691
    %v1204 = vpack.c.b16 %v724, %v692
    %v1205 = vpack.c.b16 %v725, %v693
    %v1206 = vpack.c.b16 %v726, %v694
    %v1207 = vpack.c.b16 %v727, %v695
    %v1208 = vpack.c.b16 %v728, %v696
    %v1209 = vpack.c.b16 %v729, %v697
    %v1210 = vpack.c.b16 %v730, %v698
    %v1211 = vpack.c.b16 %v731, %v699
    %v1212 = vpack.c.b16 %v732, %v700
    %v1213 = vpack.c.b16 %v733, %v701
    %v1214 = vpack.c.b16 %v734, %v702
    %v1215 = vpack.c.b16 %v735, %v703
    %v1216 = vpack.c.b16 %v736, %v704
    %v1217 = vpack.c.b16 %v737, %v705
    %v1218 = vpack.c.b16 %v738, %v706
    %v1219 = vpack.c.b16 %v771, %v739
    %v1220 = vpack.c.b16 %v772, %v740
    %v1221 = vpack.c.b16 %v773, %v741
    %v1222 = vpack.c.b16 %v774, %v742
    %v1223 = vpack.c.b16 %v775, %v743
    %v1224 = vpack.c.b16 %v776, %v744
    %v1225 = vpack.c.b16 %v777, %v745
    %v1226 = vpack.c.b16 %v778, %v746
    %v1227 = vpack.c.b16 %v779, %v747
    %v1228 = vpack.c.b16 %v780, %v748
    %v1229 = vpack.c.b16 %v781, %v749
    %v1230 = vpack.c.b16 %v782, %v750
    %v1231 = vpack.c.b16 %v783, %v751
    %v1232 = vpack.c.b16 %v784, %v752
    %v1233 = vpack.c.b16 %v785, %v753
    %v1234 = vpack.c.b16 %v786, %v754
    %v1235 = vpack.c.b16 %v787, %v755
    %v1236 = vpack.c.b16 %v788, %v756
    %v1237 = vpack.c.b16 %v789, %v757
    %v1238 = vpack.c.b16 %v790, %v758
    %v1239 = vpack.c.b16 %v791, %v759
    %v1240 = vpack.c.b16 %v792, %v760
    %v1241 = vpack.c.b16 %v793, %v761
    %v1242 = vpack.c.b16 %v794, %v762
    %v1243 = vpack.c.b16 %v795, %v763
    %v1244 = vpack.c.b16 %v796, %v764
    %v1245 = vpack.c.b16 %v797, %v765
    %v1246 = vpack.c.b16 %v798, %v766
    %v1247 = vpack.c.b16 %v799, %v767
    %v1248 = vpack.c.b16 %v800, %v768
    %v1249 = vpack.c.b16 %v801, %v769
    %v1250 = vpack.c.b16 %v802, %v770
    %v1251 = vpack.c.b16 %v835, %v803
    %v1252 = vpack.c.b16 %v836, %v804
    %v1253 = vpack.c.b16 %v837, %v805
    %v1254 = vpack.c.b16 %v838, %v806
    %v1255 = vpack.c.b16 %v839, %v807
    %v1256 = vpack.c.b16 %v840, %v808
    %v1257 = vpack.c.b16 %v841, %v809
    %v1258 = vpack.c.b16 %v842, %v810
    %v1259 = vpack.c.b16 %v843, %v811
    %v1260 = vpack.c.b16 %v844, %v812
    %v1261 = vpack.c.b16 %v845, %v813
    %v1262 = vpack.c.b16 %v846, %v814
    %v1263 = vpack.c.b16 %v847, %v815
    %v1264 = vpack.c.b16 %v848, %v816
    %v1265 = vpack.c.b16 %v849, %v817
    %v1266 = vpack.c.b16 %v850, %v818
    %v1267 = vpack.c.b16 %v851, %v819
    %v1268 = vpack.c.b16 %v852, %v820
    %v1269 = vpack.c.b16 %v853, %v821
    %v1270 = vpack.c.b16 %v854, %v822
    %v1271 = vpack.c.b16 %v855, %v823
    %v1272 = vpack.c.b16 %v856, %v824
    %v1273 = vpack.c.b16 %v857, %v825
    %v1274 = vpack.c.b16 %v858, %v826
    %v1275 = vpack.c.b16 %v859, %v827
    %v1276 = vpack.c.b16 %v860, %v828
    %v1277 = vpack.c.b16 %v861, %v829
    %v1278 = vpack.c.b16 %v862, %v830
    %v1279 = vpack.c.b16 %v863, %v831
    %v1280 = vpack.c.b16 %v864, %v832
    %v1281 = vpack.c.b16 %v865, %v833
    %v1282 = vpack.c.b16 %v866, %v834
    %v1283 = vpack.c.b16 %v899, %v867
    %v1284 = vpack.c.b16 %v900, %v868
    %v1285 = vpack.c.b16 %v901, %v869
    %v1286 = vpack.c.b16 %v902, %v870
    %v1287 = vpack.c.b16 %v903, %v871
    %v1288 = vpack.c.b16 %v904, %v872
    %v1289 = vpack.c.b16 %v905, %v873
    %v1290 = vpack.c.b16 %v906, %v874
    %v1291 = vpack.c.b16 %v907, %v875
    %v1292 = vpack.c.b16 %v908, %v876
    %v1293 = vpack.c.b16 %v909, %v877
    %v1294 = vpack.c.b16 %v910, %v878
    %v1295 = vpack.c.b16 %v911, %v879
    %v1296 = vpack.c.b16 %v912, %v880
    %v1297 = vpack.c.b16 %v913, %v881
    %v1298 = vpack.c.b16 %v914, %v882
    %v1299 = vpack.c.b16 %v915, %v883
    %v1300 = vpack.c.b16 %v916, %v884
    %v1301 = vpack.c.b16 %v917, %v885
    %v1302 = vpack.c.b16 %v918, %v886
    %v1303 = vpack.c.b16 %v919, %v887
    %v1304 = vpack.c.b16 %v920, %v888
    %v1305 = vpack.c.b16 %v921, %v889
    %v1306 = vpack.c.b16 %v922, %v890
    %v1307 = vpack.c.b16 %v923, %v891
    %v1308 = vpack.c.b16 %v924, %v892
    %v1309 = vpack.c.b16 %v925, %v893
    %v1310 = vpack.c.b16 %v926, %v894
    %v1311 = vpack.c.b16 %v927, %v895
    %v1312 = vpack.c.b16 %v928, %v896
    %v1313 = vpack.c.b16 %v929, %v897
    %v1314 = vpack.c.b16 %v930, %v898
    %v1315 = vpack.c.b16 %v963, %v931
    %v1316 = vpack.c.b16 %v964, %v932
    %v1317 = vpack.c.b16 %v965, %v933
    %v1318 = vpack.c.b16 %v966, %v934
    %v1319 = vpack.c.b16 %v967, %v935
    %v1320 = vpack.c.b16 %v968, %v936
    %v1321 = vpack.c.b16 %v969, %v937
    %v1322 = vpack.c.b16 %v970, %v938
    %v1323 = vpack.c.b16 %v971, %v939
    %v1324 = vpack.c.b16 %v972, %v940
    %v1325 = vpack.c.b16 %v973, %v941
    %v1326 = vpack.c.b16 %v974, %v942
    %v1327 = vpack.c.b16 %v975, %v943
    %v1328 = vpack.c.b16 %v976, %v944
    %v1329 = vpack.c.b16 %v977, %v945
    %v1330 = vpack.c.b16 %v978, %v946
    %v1331 = vpack.c.b16 %v979, %v947
    %v1332 = vpack.c.b16 %v980, %v948
    %v1333 = vpack.c.b16 %v981, %v949
    %v1334 = vpack.c.b16 %v982, %v950
    %v1335 = vpack.c.b16 %v983, %v951
    %v1336 = vpack.c.b16 %v984, %v952
    %v1337 = vpack.c.b16 %v985, %v953
    %v1338 = vpack.c.b16 %v986, %v954
    %v1339 = vpack.c.b16 %v987, %v955
    %v1340 = vpack.c.b16 %v988, %v956
    %v1341 = vpack.c.b16 %v989, %v957
    %v1342 = vpack.c.b16 %v990, %v958
    %v1343 = vpack.c.b16 %v991, %v959
    %v1344 = vpack.c.b16 %v992, %v960
    %v1345 = vpack.c.b16 %v993, %v961
    %v1346 = vpack.c.b16 %v994, %v962
    %v1347 = vpack.c.b16 %v1027, %v995
    %v1348 = vpack.c.b16 %v1028, %v996
    %v1349 = vpack.c.b16 %v1029, %v997
    %v1350 = vpack.c.b16 %v1030, %v998
    %v1351 = vpack.c.b16 %v1031, %v999
    %v1352 = vpack.c.b16 %v1032, %v1000
    %v1353 = vpack.c.b16 %v1033, %v1001
    %v1354 = vpack.c.b16 %v1034, %v1002
    %v1355 = vpack.c.b16 %v1035, %v1003
    %v1356 = vpack.c.b16 %v1036, %v1004
    %v1357 = vpack.c.b16 %v1037, %v1005
    %v1358 = vpack.c.b16 %v1038, %v1006
    %v1359 = vpack.c.b16 %v1039, %v1007
    %v1360 = vpack.c.b16 %v1040, %v1008
    %v1361 = vpack.c.b16 %v1041, %v1009
    %v1362 = vpack.c.b16 %v1042, %v1010
    %v1363 = vpack.c.b16 %v1043, %v1011
    %v1364 = vpack.c.b16 %v1044, %v1012
    %v1365 = vpack.c.b16 %v1045, %v1013
    %v1366 = vpack.c.b16 %v1046, %v1014
    %v1367 = vpack.c.b16 %v1047, %v1015
    %v1368 = vpack.c.b16 %v1048, %v1016
    %v1369 = vpack.c.b16 %v1049, %v1017
    %v1370 = vpack.c.b16 %v1050, %v1018
    %v1371 = vpack.c.b16 %v1051, %v1019
    %v1372 = vpack.c.b16 %v1052, %v1020
    %v1373 = vpack.c.b16 %v1053, %v1021
    %v1374 = vpack.c.b16 %v1054, %v1022
    %v1375 = vpack.c.b16 %v1055, %v1023
    %v1376 = vpack.c.b16 %v1056, %v1024
    %v1377 = vpack.c.b16 %v1057, %v1025
    %v1378 = vpack.c.b16 %v1058, %v1026
    %v1379 = vpack.c.b16 %v1091, %v1059
    %v1380 = vpack.c.b16 %v1092, %v1060
    %v1381 = vpack.c.b16 %v1093, %v1061
    %v1382 = vpack.c.b16 %v1094, %v1062
    %v1383 = vpack.c.b16 %v1095, %v1063
    %v1384 = vpack.c.b16 %v1096, %v1064
    %v1385 = vpack.c.b16 %v1097, %v1065
    %v1386 = vpack.c.b16 %v1098, %v1066
    %v1387 = vpack.c.b16 %v1099, %v1067
    %v1388 = vpack.c.b16 %v1100, %v1068
    %v1389 = vpack.c.b16 %v1101, %v1069
    %v1390 = vpack.c.b16 %v1102, %v1070
    %v1391 = vpack.c.b16 %v1103, %v1071
    %v1392 = vpack.c.b16 %v1104, %v1072
    %v1393 = vpack.c.b16 %v1105, %v1073
    %v1394 = vpack.c.b16 %v1106, %v1074
    %v1395 = vpack.c.b16 %v1107, %v1075
    %v1396 = vpack.c.b16 %v1108, %v1076
    %v1397 = vpack.c.b16 %v1109, %v1077
    %v1398 = vpack.c.b16 %v1110, %v1078
    %v1399 = vpack.c.b16 %v1111, %v1079
    %v1400 = vpack.c.b16 %v1112, %v1080
    %v1401 = vpack.c.b16 %v1113, %v1081
    %v1402 = vpack.c.b16 %v1114, %v1082
    %v1403 = vpack.c.b16 %v1115, %v1083
    %v1404 = vpack.c.b16 %v1116, %v1084
    %v1405 = vpack.c.b16 %v1117, %v1085
    %v1406 = vpack.c.b16 %v1118, %v1086
    %v1407 = vpack.c.b16 %v1119, %v1087
    %v1408 = vpack.c.b16 %v1120, %v1088
    %v1409 = vpack.c.b16 %v1121, %v1089
    %v1410 = vpack.c.b16 %v1122, %v1090
    %v1411 = vpack.c.b16 %v1155, %v1123
    %v1412 = vpack.c.b16 %v1156, %v1124
    %v1413 = vpack.c.b16 %v1157, %v1125
    %v1414 = vpack.c.b16 %v1158, %v1126
    %v1415 = vpack.c.b16 %v1159, %v1127
    %v1416 = vpack.c.b16 %v1160, %v1128
    %v1417 = vpack.c.b16 %v1161, %v1129
    %v1418 = vpack.c.b16 %v1162, %v1130
    %v1419 = vpack.c.b16 %v1163, %v1131
    %v1420 = vpack.c.b16 %v1164, %v1132
    %v1421 = vpack.c.b16 %v1165, %v1133
    %v1422 = vpack.c.b16 %v1166, %v1134
    %v1423 = vpack.c.b16 %v1167, %v1135
    %v1424 = vpack.c.b16 %v1168, %v1136
    %v1425 = vpack.c.b16 %v1169, %v1137
    %v1426 = vpack.c.b16 %v1170, %v1138
    %v1427 = vpack.c.b16 %v1171, %v1139
    %v1428 = vpack.c.b16 %v1172, %v1140
    %v1429 = vpack.c.b16 %v1173, %v1141
    %v1430 = vpack.c.b16 %v1174, %v1142
    %v1431 = vpack.c.b16 %v1175, %v1143
    %v1432 = vpack.c.b16 %v1176, %v1144
    %v1433 = vpack.c.b16 %v1177, %v1145
    %v1434 = vpack.c.b16 %v1178, %v1146
    %v1435 = vpack.c.b16 %v1179, %v1147
    %v1436 = vpack.c.b16 %v1180, %v1148
    %v1437 = vpack.c.b16 %v1181, %v1149
    %v1438 = vpack.c.b16 %v1182, %v1150
    %v1439 = vpack.c.b16 %v1183, %v1151
    %v1440 = vpack.c.b16 %v1184, %v1152
    %v1441 = vpack.c.b16 %v1185, %v1153
    %v1442 = vpack.c.b16 %v1186, %v1154
    %1699 = vmatpush.bf16.msra.mxu0 %v1411
    %1700 = vmatpush.bf16.msra.mxu0 %v1379
    %1701 = vmatpush.bf16.msra.mxu0 %v1347
    %1702 = vmatpush.bf16.msra.mxu0 %v1315
    %1703 = vmatpush.bf16.msra.mxu0 %v1283
    %1704 = vmatpush.bf16.msra.mxu0 %v1251
    %1705 = vmatpush.bf16.msra.mxu0 %v1219
    %1706 = vmatpush.bf16.msra.mxu0 %v1187
    %1707 = vmatmul.bf16.gmra.mxu0 %v162
    %v1708 = vpop.f32.mrf.mxu0
    %v1709 = vadd.f32 0.0, %v1708
    %v1710 = vpop.f32.mrf.mxu0
    %1711 = vdwg.mxu0
    %1712 = vmatpush.bf16.msra.mxu0 %v1412
    %1713 = vmatpush.bf16.msra.mxu0 %v1380
    %1714 = vmatpush.bf16.msra.mxu0 %v1348
    %1715 = vmatpush.bf16.msra.mxu0 %v1316
    %1716 = vmatpush.bf16.msra.mxu0 %v1284
    %1717 = vmatpush.bf16.msra.mxu0 %v1252
    %1718 = vmatpush.bf16.msra.mxu0 %v1220
    %1719 = vmatpush.bf16.msra.mxu0 %v1188
    %1720 = vmatmul.bf16.gmra.mxu0 %v162
    %v1721 = vpop.f32.mrf.mxu0
    %v1722 = vadd.f32 0.0, %v1721
    %v1723 = vpop.f32.mrf.mxu0
    %1724 = vdwg.mxu0
    %1725 = vmatpush.bf16.msra.mxu0 %v1413
    %1726 = vmatpush.bf16.msra.mxu0 %v1381
    %1727 = vmatpush.bf16.msra.mxu0 %v1349
    %1728 = vmatpush.bf16.msra.mxu0 %v1317
    %1729 = vmatpush.bf16.msra.mxu0 %v1285
    %1730 = vmatpush.bf16.msra.mxu0 %v1253
    %1731 = vmatpush.bf16.msra.mxu0 %v1221
    %1732 = vmatpush.bf16.msra.mxu0 %v1189
    %1733 = vmatmul.bf16.gmra.mxu0 %v162
    %v1734 = vpop.f32.mrf.mxu0
    %v1735 = vadd.f32 0.0, %v1734
    %v1736 = vpop.f32.mrf.mxu0
    %1737 = vdwg.mxu0
    %1738 = vmatpush.bf16.msra.mxu0 %v1414
    %1739 = vmatpush.bf16.msra.mxu0 %v1382
    %1740 = vmatpush.bf16.msra.mxu0 %v1350
    %1741 = vmatpush.bf16.msra.mxu0 %v1318
    %1742 = vmatpush.bf16.msra.mxu0 %v1286
    %1743 = vmatpush.bf16.msra.mxu0 %v1254
    %1744 = vmatpush.bf16.msra.mxu0 %v1222
    %1745 = vmatpush.bf16.msra.mxu0 %v1190
    %1746 = vmatmul.bf16.gmra.mxu0 %v162
    %v1747 = vpop.f32.mrf.mxu0
    %v1748 = vadd.f32 0.0, %v1747
    %v1749 = vpop.f32.mrf.mxu0
    %1750 = vdwg.mxu0
    %1751 = vmatpush.bf16.msra.mxu0 %v1415
    %1752 = vmatpush.bf16.msra.mxu0 %v1383
    %1753 = vmatpush.bf16.msra.mxu0 %v1351
    %1754 = vmatpush.bf16.msra.mxu0 %v1319
    %1755 = vmatpush.bf16.msra.mxu0 %v1287
    %1756 = vmatpush.bf16.msra.mxu0 %v1255
    %1757 = vmatpush.bf16.msra.mxu0 %v1223
    %1758 = vmatpush.bf16.msra.mxu0 %v1191
    %1759 = vmatmul.bf16.gmra.mxu0 %v162
    %v1760 = vpop.f32.mrf.mxu0
    %v1761 = vadd.f32 0.0, %v1760
    %v1762 = vpop.f32.mrf.mxu0
    %1763 = vdwg.mxu0
    %1764 = vmatpush.bf16.msra.mxu0 %v1416
    %1765 = vmatpush.bf16.msra.mxu0 %v1384
    %1766 = vmatpush.bf16.msra.mxu0 %v1352
    %1767 = vmatpush.bf16.msra.mxu0 %v1320
    %1768 = vmatpush.bf16.msra.mxu0 %v1288
    %1769 = vmatpush.bf16.msra.mxu0 %v1256
    %1770 = vmatpush.bf16.msra.mxu0 %v1224
    %1771 = vmatpush.bf16.msra.mxu0 %v1192
    %1772 = vmatmul.bf16.gmra.mxu0 %v162
    %v1773 = vpop.f32.mrf.mxu0
    %v1774 = vadd.f32 0.0, %v1773
    %v1775 = vpop.f32.mrf.mxu0
    %1776 = vdwg.mxu0
    %1777 = vmatpush.bf16.msra.mxu0 %v1417
    %1778 = vmatpush.bf16.msra.mxu0 %v1385
    %1779 = vmatpush.bf16.msra.mxu0 %v1353
    %1780 = vmatpush.bf16.msra.mxu0 %v1321
    %1781 = vmatpush.bf16.msra.mxu0 %v1289
    %1782 = vmatpush.bf16.msra.mxu0 %v1257
    %1783 = vmatpush.bf16.msra.mxu0 %v1225
    %1784 = vmatpush.bf16.msra.mxu0 %v1193
    %1785 = vmatmul.bf16.gmra.mxu0 %v162
    %v1786 = vpop.f32.mrf.mxu0
    %v1787 = vadd.f32 0.0, %v1786
    %v1788 = vpop.f32.mrf.mxu0
    %1789 = vdwg.mxu0
    %1790 = vmatpush.bf16.msra.mxu0 %v1418
    %1791 = vmatpush.bf16.msra.mxu0 %v1386
    %1792 = vmatpush.bf16.msra.mxu0 %v1354
    %1793 = vmatpush.bf16.msra.mxu0 %v1322
    %1794 = vmatpush.bf16.msra.mxu0 %v1290
    %1795 = vmatpush.bf16.msra.mxu0 %v1258
    %1796 = vmatpush.bf16.msra.mxu0 %v1226
    %1797 = vmatpush.bf16.msra.mxu0 %v1194
    %1798 = vmatmul.bf16.gmra.mxu0 %v162
    %v1799 = vpop.f32.mrf.mxu0
    %v1800 = vadd.f32 0.0, %v1799
    %v1801 = vpop.f32.mrf.mxu0
    %1802 = vdwg.mxu0
    %1803 = vmatpush.bf16.msra.mxu0 %v1419
    %1804 = vmatpush.bf16.msra.mxu0 %v1387
    %1805 = vmatpush.bf16.msra.mxu0 %v1355
    %1806 = vmatpush.bf16.msra.mxu0 %v1323
    %1807 = vmatpush.bf16.msra.mxu0 %v1291
    %1808 = vmatpush.bf16.msra.mxu0 %v1259
    %1809 = vmatpush.bf16.msra.mxu0 %v1227
    %1810 = vmatpush.bf16.msra.mxu0 %v1195
    %1811 = vmatmul.bf16.gmra.mxu0 %v162
    %v1812 = vpop.f32.mrf.mxu0
    %v1813 = vadd.f32 0.0, %v1812
    %v1814 = vpop.f32.mrf.mxu0
    %1815 = vdwg.mxu0
    %1816 = vmatpush.bf16.msra.mxu0 %v1420
    %1817 = vmatpush.bf16.msra.mxu0 %v1388
    %1818 = vmatpush.bf16.msra.mxu0 %v1356
    %1819 = vmatpush.bf16.msra.mxu0 %v1324
    %1820 = vmatpush.bf16.msra.mxu0 %v1292
    %1821 = vmatpush.bf16.msra.mxu0 %v1260
    %1822 = vmatpush.bf16.msra.mxu0 %v1228
    %1823 = vmatpush.bf16.msra.mxu0 %v1196
    %1824 = vmatmul.bf16.gmra.mxu0 %v162
    %v1825 = vpop.f32.mrf.mxu0
    %v1826 = vadd.f32 0.0, %v1825
    %v1827 = vpop.f32.mrf.mxu0
    %1828 = vdwg.mxu0
    %1829 = vmatpush.bf16.msra.mxu0 %v1421
    %1830 = vmatpush.bf16.msra.mxu0 %v1389
    %1831 = vmatpush.bf16.msra.mxu0 %v1357
    %1832 = vmatpush.bf16.msra.mxu0 %v1325
    %1833 = vmatpush.bf16.msra.mxu0 %v1293
    %1834 = vmatpush.bf16.msra.mxu0 %v1261
    %1835 = vmatpush.bf16.msra.mxu0 %v1229
    %1836 = vmatpush.bf16.msra.mxu0 %v1197
    %1837 = vmatmul.bf16.gmra.mxu0 %v162
    %v1838 = vpop.f32.mrf.mxu0
    %v1839 = vadd.f32 0.0, %v1838
    %v1840 = vpop.f32.mrf.mxu0
    %1841 = vdwg.mxu0
    %1842 = vmatpush.bf16.msra.mxu0 %v1422
    %1843 = vmatpush.bf16.msra.mxu0 %v1390
    %1844 = vmatpush.bf16.msra.mxu0 %v1358
    %1845 = vmatpush.bf16.msra.mxu0 %v1326
    %1846 = vmatpush.bf16.msra.mxu0 %v1294
    %1847 = vmatpush.bf16.msra.mxu0 %v1262
    %1848 = vmatpush.bf16.msra.mxu0 %v1230
    %1849 = vmatpush.bf16.msra.mxu0 %v1198
    %1850 = vmatmul.bf16.gmra.mxu0 %v162
    %v1851 = vpop.f32.mrf.mxu0
    %v1852 = vadd.f32 0.0, %v1851
    %v1853 = vpop.f32.mrf.mxu0
    %1854 = vdwg.mxu0
    %1855 = vmatpush.bf16.msra.mxu0 %v1423
    %1856 = vmatpush.bf16.msra.mxu0 %v1391
    %1857 = vmatpush.bf16.msra.mxu0 %v1359
    %1858 = vmatpush.bf16.msra.mxu0 %v1327
    %1859 = vmatpush.bf16.msra.mxu0 %v1295
    %1860 = vmatpush.bf16.msra.mxu0 %v1263
    %1861 = vmatpush.bf16.msra.mxu0 %v1231
    %1862 = vmatpush.bf16.msra.mxu0 %v1199
    %1863 = vmatmul.bf16.gmra.mxu0 %v162
    %v1864 = vpop.f32.mrf.mxu0
    %v1865 = vadd.f32 0.0, %v1864
    %v1866 = vpop.f32.mrf.mxu0
    %1867 = vdwg.mxu0
    %1868 = vmatpush.bf16.msra.mxu0 %v1424
    %1869 = vmatpush.bf16.msra.mxu0 %v1392
    %1870 = vmatpush.bf16.msra.mxu0 %v1360
    %1871 = vmatpush.bf16.msra.mxu0 %v1328
    %1872 = vmatpush.bf16.msra.mxu0 %v1296
    %1873 = vmatpush.bf16.msra.mxu0 %v1264
    %1874 = vmatpush.bf16.msra.mxu0 %v1232
    %1875 = vmatpush.bf16.msra.mxu0 %v1200
    %1876 = vmatmul.bf16.gmra.mxu0 %v162
    %v1877 = vpop.f32.mrf.mxu0
    %v1878 = vadd.f32 0.0, %v1877
    %v1879 = vpop.f32.mrf.mxu0
    %1880 = vdwg.mxu0
    %1881 = vmatpush.bf16.msra.mxu0 %v1425
    %1882 = vmatpush.bf16.msra.mxu0 %v1393
    %1883 = vmatpush.bf16.msra.mxu0 %v1361
    %1884 = vmatpush.bf16.msra.mxu0 %v1329
    %1885 = vmatpush.bf16.msra.mxu0 %v1297
    %1886 = vmatpush.bf16.msra.mxu0 %v1265
    %1887 = vmatpush.bf16.msra.mxu0 %v1233
    %1888 = vmatpush.bf16.msra.mxu0 %v1201
    %1889 = vmatmul.bf16.gmra.mxu0 %v162
    %v1890 = vpop.f32.mrf.mxu0
    %v1891 = vadd.f32 0.0, %v1890
    %v1892 = vpop.f32.mrf.mxu0
    %1893 = vdwg.mxu0
    %1894 = vmatpush.bf16.msra.mxu0 %v1426
    %1895 = vmatpush.bf16.msra.mxu0 %v1394
    %1896 = vmatpush.bf16.msra.mxu0 %v1362
    %1897 = vmatpush.bf16.msra.mxu0 %v1330
    %1898 = vmatpush.bf16.msra.mxu0 %v1298
    %1899 = vmatpush.bf16.msra.mxu0 %v1266
    %1900 = vmatpush.bf16.msra.mxu0 %v1234
    %1901 = vmatpush.bf16.msra.mxu0 %v1202
    %1902 = vmatmul.bf16.gmra.mxu0 %v162
    %v1903 = vpop.f32.mrf.mxu0
    %v1904 = vadd.f32 0.0, %v1903
    %v1905 = vpop.f32.mrf.mxu0
    %1906 = vdwg.mxu0
    %1907 = vmatpush.bf16.msra.mxu0 %v1427
    %1908 = vmatpush.bf16.msra.mxu0 %v1395
    %1909 = vmatpush.bf16.msra.mxu0 %v1363
    %1910 = vmatpush.bf16.msra.mxu0 %v1331
    %1911 = vmatpush.bf16.msra.mxu0 %v1299
    %1912 = vmatpush.bf16.msra.mxu0 %v1267
    %1913 = vmatpush.bf16.msra.mxu0 %v1235
    %1914 = vmatpush.bf16.msra.mxu0 %v1203
    %1915 = vmatmul.bf16.gmra.mxu0 %v162
    %v1916 = vpop.f32.mrf.mxu0
    %v1917 = vadd.f32 0.0, %v1916
    %v1918 = vpop.f32.mrf.mxu0
    %1919 = vdwg.mxu0
    %1920 = vmatpush.bf16.msra.mxu0 %v1428
    %1921 = vmatpush.bf16.msra.mxu0 %v1396
    %1922 = vmatpush.bf16.msra.mxu0 %v1364
    %1923 = vmatpush.bf16.msra.mxu0 %v1332
    %1924 = vmatpush.bf16.msra.mxu0 %v1300
    %1925 = vmatpush.bf16.msra.mxu0 %v1268
    %1926 = vmatpush.bf16.msra.mxu0 %v1236
    %1927 = vmatpush.bf16.msra.mxu0 %v1204
    %1928 = vmatmul.bf16.gmra.mxu0 %v162
    %v1929 = vpop.f32.mrf.mxu0
    %v1930 = vadd.f32 0.0, %v1929
    %v1931 = vpop.f32.mrf.mxu0
    %1932 = vdwg.mxu0
    %1933 = vmatpush.bf16.msra.mxu0 %v1429
    %1934 = vmatpush.bf16.msra.mxu0 %v1397
    %1935 = vmatpush.bf16.msra.mxu0 %v1365
    %1936 = vmatpush.bf16.msra.mxu0 %v1333
    %1937 = vmatpush.bf16.msra.mxu0 %v1301
    %1938 = vmatpush.bf16.msra.mxu0 %v1269
    %1939 = vmatpush.bf16.msra.mxu0 %v1237
    %1940 = vmatpush.bf16.msra.mxu0 %v1205
    %1941 = vmatmul.bf16.gmra.mxu0 %v162
    %v1942 = vpop.f32.mrf.mxu0
    %v1943 = vadd.f32 0.0, %v1942
    %v1944 = vpop.f32.mrf.mxu0
    %1945 = vdwg.mxu0
    %1946 = vmatpush.bf16.msra.mxu0 %v1430
    %1947 = vmatpush.bf16.msra.mxu0 %v1398
    %1948 = vmatpush.bf16.msra.mxu0 %v1366
    %1949 = vmatpush.bf16.msra.mxu0 %v1334
    %1950 = vmatpush.bf16.msra.mxu0 %v1302
    %1951 = vmatpush.bf16.msra.mxu0 %v1270
    %1952 = vmatpush.bf16.msra.mxu0 %v1238
    %1953 = vmatpush.bf16.msra.mxu0 %v1206
    %1954 = vmatmul.bf16.gmra.mxu0 %v162
    %v1955 = vpop.f32.mrf.mxu0
    %v1956 = vadd.f32 0.0, %v1955
    %v1957 = vpop.f32.mrf.mxu0
    %1958 = vdwg.mxu0
    %1959 = vmatpush.bf16.msra.mxu0 %v1431
    %1960 = vmatpush.bf16.msra.mxu0 %v1399
    %1961 = vmatpush.bf16.msra.mxu0 %v1367
    %1962 = vmatpush.bf16.msra.mxu0 %v1335
    %1963 = vmatpush.bf16.msra.mxu0 %v1303
    %1964 = vmatpush.bf16.msra.mxu0 %v1271
    %1965 = vmatpush.bf16.msra.mxu0 %v1239
    %1966 = vmatpush.bf16.msra.mxu0 %v1207
    %1967 = vmatmul.bf16.gmra.mxu0 %v162
    %v1968 = vpop.f32.mrf.mxu0
    %v1969 = vadd.f32 0.0, %v1968
    %v1970 = vpop.f32.mrf.mxu0
    %1971 = vdwg.mxu0
    %1972 = vmatpush.bf16.msra.mxu0 %v1432
    %1973 = vmatpush.bf16.msra.mxu0 %v1400
    %1974 = vmatpush.bf16.msra.mxu0 %v1368
    %1975 = vmatpush.bf16.msra.mxu0 %v1336
    %1976 = vmatpush.bf16.msra.mxu0 %v1304
    %1977 = vmatpush.bf16.msra.mxu0 %v1272
    %1978 = vmatpush.bf16.msra.mxu0 %v1240
    %1979 = vmatpush.bf16.msra.mxu0 %v1208
    %1980 = vmatmul.bf16.gmra.mxu0 %v162
    %v1981 = vpop.f32.mrf.mxu0
    %v1982 = vadd.f32 0.0, %v1981
    %v1983 = vpop.f32.mrf.mxu0
    %1984 = vdwg.mxu0
    %1985 = vmatpush.bf16.msra.mxu0 %v1433
    %1986 = vmatpush.bf16.msra.mxu0 %v1401
    %1987 = vmatpush.bf16.msra.mxu0 %v1369
    %1988 = vmatpush.bf16.msra.mxu0 %v1337
    %1989 = vmatpush.bf16.msra.mxu0 %v1305
    %1990 = vmatpush.bf16.msra.mxu0 %v1273
    %1991 = vmatpush.bf16.msra.mxu0 %v1241
    %1992 = vmatpush.bf16.msra.mxu0 %v1209
    %1993 = vmatmul.bf16.gmra.mxu0 %v162
    %v1994 = vpop.f32.mrf.mxu0
    %v1995 = vadd.f32 0.0, %v1994
    %v1996 = vpop.f32.mrf.mxu0
    %1997 = vdwg.mxu0
    %1998 = vmatpush.bf16.msra.mxu0 %v1434
    %1999 = vmatpush.bf16.msra.mxu0 %v1402
    %2000 = vmatpush.bf16.msra.mxu0 %v1370
    %2001 = vmatpush.bf16.msra.mxu0 %v1338
    %2002 = vmatpush.bf16.msra.mxu0 %v1306
    %2003 = vmatpush.bf16.msra.mxu0 %v1274
    %2004 = vmatpush.bf16.msra.mxu0 %v1242
    %2005 = vmatpush.bf16.msra.mxu0 %v1210
    %2006 = vmatmul.bf16.gmra.mxu0 %v162
    %v2007 = vpop.f32.mrf.mxu0
    %v2008 = vadd.f32 0.0, %v2007
    %v2009 = vpop.f32.mrf.mxu0
    %2010 = vdwg.mxu0
    %2011 = vmatpush.bf16.msra.mxu0 %v1435
    %2012 = vmatpush.bf16.msra.mxu0 %v1403
    %2013 = vmatpush.bf16.msra.mxu0 %v1371
    %2014 = vmatpush.bf16.msra.mxu0 %v1339
    %2015 = vmatpush.bf16.msra.mxu0 %v1307
    %2016 = vmatpush.bf16.msra.mxu0 %v1275
    %2017 = vmatpush.bf16.msra.mxu0 %v1243
    %2018 = vmatpush.bf16.msra.mxu0 %v1211
    %2019 = vmatmul.bf16.gmra.mxu0 %v162
    %v2020 = vpop.f32.mrf.mxu0
    %v2021 = vadd.f32 0.0, %v2020
    %v2022 = vpop.f32.mrf.mxu0
    %2023 = vdwg.mxu0
    %2024 = vmatpush.bf16.msra.mxu0 %v1436
    %2025 = vmatpush.bf16.msra.mxu0 %v1404
    %2026 = vmatpush.bf16.msra.mxu0 %v1372
    %2027 = vmatpush.bf16.msra.mxu0 %v1340
    %2028 = vmatpush.bf16.msra.mxu0 %v1308
    %2029 = vmatpush.bf16.msra.mxu0 %v1276
    %2030 = vmatpush.bf16.msra.mxu0 %v1244
    %2031 = vmatpush.bf16.msra.mxu0 %v1212
    %2032 = vmatmul.bf16.gmra.mxu0 %v162
    %v2033 = vpop.f32.mrf.mxu0
    %v2034 = vadd.f32 0.0, %v2033
    %v2035 = vpop.f32.mrf.mxu0
    %2036 = vdwg.mxu0
    %2037 = vmatpush.bf16.msra.mxu0 %v1437
    %2038 = vmatpush.bf16.msra.mxu0 %v1405
    %2039 = vmatpush.bf16.msra.mxu0 %v1373
    %2040 = vmatpush.bf16.msra.mxu0 %v1341
    %2041 = vmatpush.bf16.msra.mxu0 %v1309
    %2042 = vmatpush.bf16.msra.mxu0 %v1277
    %2043 = vmatpush.bf16.msra.mxu0 %v1245
    %2044 = vmatpush.bf16.msra.mxu0 %v1213
    %2045 = vmatmul.bf16.gmra.mxu0 %v162
    %v2046 = vpop.f32.mrf.mxu0
    %v2047 = vadd.f32 0.0, %v2046
    %v2048 = vpop.f32.mrf.mxu0
    %2049 = vdwg.mxu0
    %2050 = vmatpush.bf16.msra.mxu0 %v1438
    %2051 = vmatpush.bf16.msra.mxu0 %v1406
    %2052 = vmatpush.bf16.msra.mxu0 %v1374
    %2053 = vmatpush.bf16.msra.mxu0 %v1342
    %2054 = vmatpush.bf16.msra.mxu0 %v1310
    %2055 = vmatpush.bf16.msra.mxu0 %v1278
    %2056 = vmatpush.bf16.msra.mxu0 %v1246
    %2057 = vmatpush.bf16.msra.mxu0 %v1214
    %2058 = vmatmul.bf16.gmra.mxu0 %v162
    %v2059 = vpop.f32.mrf.mxu0
    %v2060 = vadd.f32 0.0, %v2059
    %v2061 = vpop.f32.mrf.mxu0
    %2062 = vdwg.mxu0
    %2063 = vmatpush.bf16.msra.mxu0 %v1439
    %2064 = vmatpush.bf16.msra.mxu0 %v1407
    %2065 = vmatpush.bf16.msra.mxu0 %v1375
    %2066 = vmatpush.bf16.msra.mxu0 %v1343
    %2067 = vmatpush.bf16.msra.mxu0 %v1311
    %2068 = vmatpush.bf16.msra.mxu0 %v1279
    %2069 = vmatpush.bf16.msra.mxu0 %v1247
    %2070 = vmatpush.bf16.msra.mxu0 %v1215
    %2071 = vmatmul.bf16.gmra.mxu0 %v162
    %v2072 = vpop.f32.mrf.mxu0
    %v2073 = vadd.f32 0.0, %v2072
    %v2074 = vpop.f32.mrf.mxu0
    %2075 = vdwg.mxu0
    %2076 = vmatpush.bf16.msra.mxu0 %v1440
    %2077 = vmatpush.bf16.msra.mxu0 %v1408
    %2078 = vmatpush.bf16.msra.mxu0 %v1376
    %2079 = vmatpush.bf16.msra.mxu0 %v1344
    %2080 = vmatpush.bf16.msra.mxu0 %v1312
    %2081 = vmatpush.bf16.msra.mxu0 %v1280
    %2082 = vmatpush.bf16.msra.mxu0 %v1248
    %2083 = vmatpush.bf16.msra.mxu0 %v1216
    %2084 = vmatmul.bf16.gmra.mxu0 %v162
    %v2085 = vpop.f32.mrf.mxu0
    %v2086 = vadd.f32 0.0, %v2085
    %v2087 = vpop.f32.mrf.mxu0
    %2088 = vdwg.mxu0
    %2089 = vmatpush.bf16.msra.mxu0 %v1441
    %2090 = vmatpush.bf16.msra.mxu0 %v1409
    %2091 = vmatpush.bf16.msra.mxu0 %v1377
    %2092 = vmatpush.bf16.msra.mxu0 %v1345
    %2093 = vmatpush.bf16.msra.mxu0 %v1313
    %2094 = vmatpush.bf16.msra.mxu0 %v1281
    %2095 = vmatpush.bf16.msra.mxu0 %v1249
    %2096 = vmatpush.bf16.msra.mxu0 %v1217
    %2097 = vmatmul.bf16.gmra.mxu0 %v162
    %v2098 = vpop.f32.mrf.mxu0
    %v2099 = vadd.f32 0.0, %v2098
    %v2100 = vpop.f32.mrf.mxu0
    %2101 = vdwg.mxu0
    %2102 = vmatpush.bf16.msra.mxu0 %v1442
    %2103 = vmatpush.bf16.msra.mxu0 %v1410
    %2104 = vmatpush.bf16.msra.mxu0 %v1378
    %2105 = vmatpush.bf16.msra.mxu0 %v1346
    %2106 = vmatpush.bf16.msra.mxu0 %v1314
    %2107 = vmatpush.bf16.msra.mxu0 %v1282
    %2108 = vmatpush.bf16.msra.mxu0 %v1250
    %2109 = vmatpush.bf16.msra.mxu0 %v1218
    %2110 = vmatmul.bf16.gmra.mxu0 %v162
    %v2111 = vpop.f32.mrf.mxu0
    %v2112 = vadd.f32 0.0, %v2111
    %v2113 = vpop.f32.mrf.mxu0
    %2114 = vdwg.mxu0
    %v2115 = vrot.slane %v1735, 4
    %vm2116 = vcmask 1047556
    %v2117 = vsel %vm2116, %v2115, %v1709
    %v2119 = vunpack.c.l.s4 1983009808
    %v2120 = vunpack.c.0.s8 %v2119
    %v2121 = vperm.slane %v2117, %v2120
    %v2122 = vrot.slane %v1748, 4
    %v2123 = vsel %vm2116, %v2122, %v1722
    %v2125 = vunpack.c.l.s4 1983009808
    %v2126 = vunpack.c.0.s8 %v2125
    %v2127 = vperm.slane %v2123, %v2126
    %v2128 = vrot.slane %v1787, 4
    %v2129 = vsel %vm2116, %v2128, %v1761
    %v2131 = vunpack.c.l.s4 1983009808
    %v2132 = vunpack.c.0.s8 %v2131
    %v2133 = vperm.slane %v2129, %v2132
    %v2134 = vrot.slane %v1800, 4
    %v2135 = vsel %vm2116, %v2134, %v1774
    %v2137 = vunpack.c.l.s4 1983009808
    %v2138 = vunpack.c.0.s8 %v2137
    %v2139 = vperm.slane %v2135, %v2138
    %v2140 = vrot.slane %v2127, 4
    %v2141 = vsel %vm2116, %v2140, %v2121
    %v2142 = vrot.slane %v2121, 4
    %v2143 = vsel %vm2116, %v2127, %v2142
    %v2145 = vunpack.c.l.s4 1934713408
    %v2146 = vunpack.c.0.s8 %v2145
    %v2147 = vperm.slane %v2141, %v2146
    %v2149 = vunpack.c.l.s4 1934713408
    %v2150 = vunpack.c.0.s8 %v2149
    %v2151 = vperm.slane %v2143, %v2150
    %v2152 = vrot.slane %v2139, 4
    %v2153 = vsel %vm2116, %v2152, %v2133
    %v2154 = vrot.slane %v2133, 4
    %v2155 = vsel %vm2116, %v2139, %v2154
    %v2157 = vunpack.c.l.s4 1934713408
    %v2158 = vunpack.c.0.s8 %v2157
    %v2159 = vperm.slane %v2153, %v2158
    %v2161 = vunpack.c.l.s4 1934713408
    %v2162 = vunpack.c.0.s8 %v2161
    %v2163 = vperm.slane %v2155, %v2162
    %v2164 = vrot.slane %v2159, 4
    %v2165 = vsel %vm2116, %v2164, %v2147
    %v2166 = vrot.slane %v2147, 4
    %v2167 = vsel %vm2116, %v2159, %v2166
    %v2168 = vrot.slane %v2163, 4
    %v2169 = vsel %vm2116, %v2168, %v2151
    %v2170 = vrot.slane %v2151, 4
    %v2171 = vsel %vm2116, %v2163, %v2170
    %v2172 = vrot.slane %v1839, 4
    %v2173 = vsel %vm2116, %v2172, %v1813
    %v2175 = vunpack.c.l.s4 1983009808
    %v2176 = vunpack.c.0.s8 %v2175
    %v2177 = vperm.slane %v2173, %v2176
    %v2178 = vrot.slane %v1852, 4
    %v2179 = vsel %vm2116, %v2178, %v1826
    %v2181 = vunpack.c.l.s4 1983009808
    %v2182 = vunpack.c.0.s8 %v2181
    %v2183 = vperm.slane %v2179, %v2182
    %v2184 = vrot.slane %v1891, 4
    %v2185 = vsel %vm2116, %v2184, %v1865
    %v2187 = vunpack.c.l.s4 1983009808
    %v2188 = vunpack.c.0.s8 %v2187
    %v2189 = vperm.slane %v2185, %v2188
    %v2190 = vrot.slane %v1904, 4
    %v2191 = vsel %vm2116, %v2190, %v1878
    %v2193 = vunpack.c.l.s4 1983009808
    %v2194 = vunpack.c.0.s8 %v2193
    %v2195 = vperm.slane %v2191, %v2194
    %v2196 = vrot.slane %v2183, 4
    %v2197 = vsel %vm2116, %v2196, %v2177
    %v2198 = vrot.slane %v2177, 4
    %v2199 = vsel %vm2116, %v2183, %v2198
    %v2201 = vunpack.c.l.s4 1934713408
    %v2202 = vunpack.c.0.s8 %v2201
    %v2203 = vperm.slane %v2197, %v2202
    %v2205 = vunpack.c.l.s4 1934713408
    %v2206 = vunpack.c.0.s8 %v2205
    %v2207 = vperm.slane %v2199, %v2206
    %v2208 = vrot.slane %v2195, 4
    %v2209 = vsel %vm2116, %v2208, %v2189
    %v2210 = vrot.slane %v2189, 4
    %v2211 = vsel %vm2116, %v2195, %v2210
    %v2213 = vunpack.c.l.s4 1934713408
    %v2214 = vunpack.c.0.s8 %v2213
    %v2215 = vperm.slane %v2209, %v2214
    %v2217 = vunpack.c.l.s4 1934713408
    %v2218 = vunpack.c.0.s8 %v2217
    %v2219 = vperm.slane %v2211, %v2218
    %v2220 = vrot.slane %v2215, 4
    %v2221 = vsel %vm2116, %v2220, %v2203
    %v2222 = vrot.slane %v2203, 4
    %v2223 = vsel %vm2116, %v2215, %v2222
    %v2224 = vrot.slane %v2219, 4
    %v2225 = vsel %vm2116, %v2224, %v2207
    %v2226 = vrot.slane %v2207, 4
    %v2227 = vsel %vm2116, %v2219, %v2226
    %v2228 = vrot.slane %v1943, 4
    %v2229 = vsel %vm2116, %v2228, %v1917
    %v2231 = vunpack.c.l.s4 1983009808
    %v2232 = vunpack.c.0.s8 %v2231
    %v2233 = vperm.slane %v2229, %v2232
    %v2234 = vrot.slane %v1956, 4
    %v2235 = vsel %vm2116, %v2234, %v1930
    %v2237 = vunpack.c.l.s4 1983009808
    %v2238 = vunpack.c.0.s8 %v2237
    %v2239 = vperm.slane %v2235, %v2238
    %v2240 = vrot.slane %v1995, 4
    %v2241 = vsel %vm2116, %v2240, %v1969
    %v2243 = vunpack.c.l.s4 1983009808
    %v2244 = vunpack.c.0.s8 %v2243
    %v2245 = vperm.slane %v2241, %v2244
    %v2246 = vrot.slane %v2008, 4
    %v2247 = vsel %vm2116, %v2246, %v1982
    %v2249 = vunpack.c.l.s4 1983009808
    %v2250 = vunpack.c.0.s8 %v2249
    %v2251 = vperm.slane %v2247, %v2250
    %v2252 = vrot.slane %v2239, 4
    %v2253 = vsel %vm2116, %v2252, %v2233
    %v2254 = vrot.slane %v2233, 4
    %v2255 = vsel %vm2116, %v2239, %v2254
    %v2257 = vunpack.c.l.s4 1934713408
    %v2258 = vunpack.c.0.s8 %v2257
    %v2259 = vperm.slane %v2253, %v2258
    %v2261 = vunpack.c.l.s4 1934713408
    %v2262 = vunpack.c.0.s8 %v2261
    %v2263 = vperm.slane %v2255, %v2262
    %v2264 = vrot.slane %v2251, 4
    %v2265 = vsel %vm2116, %v2264, %v2245
    %v2266 = vrot.slane %v2245, 4
    %v2267 = vsel %vm2116, %v2251, %v2266
    %v2269 = vunpack.c.l.s4 1934713408
    %v2270 = vunpack.c.0.s8 %v2269
    %v2271 = vperm.slane %v2265, %v2270
    %v2273 = vunpack.c.l.s4 1934713408
    %v2274 = vunpack.c.0.s8 %v2273
    %v2275 = vperm.slane %v2267, %v2274
    %v2276 = vrot.slane %v2271, 4
    %v2277 = vsel %vm2116, %v2276, %v2259
    %v2278 = vrot.slane %v2259, 4
    %v2279 = vsel %vm2116, %v2271, %v2278
    %v2280 = vrot.slane %v2275, 4
    %v2281 = vsel %vm2116, %v2280, %v2263
    %v2282 = vrot.slane %v2263, 4
    %v2283 = vsel %vm2116, %v2275, %v2282
    %v2284 = vrot.slane %v2047, 4
    %v2285 = vsel %vm2116, %v2284, %v2021
    %v2287 = vunpack.c.l.s4 1983009808
    %v2288 = vunpack.c.0.s8 %v2287
    %v2289 = vperm.slane %v2285, %v2288
    %v2290 = vrot.slane %v2060, 4
    %v2291 = vsel %vm2116, %v2290, %v2034
    %v2293 = vunpack.c.l.s4 1983009808
    %v2294 = vunpack.c.0.s8 %v2293
    %v2295 = vperm.slane %v2291, %v2294
    %v2296 = vrot.slane %v2099, 4
    %v2297 = vsel %vm2116, %v2296, %v2073
    %v2299 = vunpack.c.l.s4 1983009808
    %v2300 = vunpack.c.0.s8 %v2299
    %v2301 = vperm.slane %v2297, %v2300
    %v2302 = vrot.slane %v2112, 4
    %v2303 = vsel %vm2116, %v2302, %v2086
    %v2305 = vunpack.c.l.s4 1983009808
    %v2306 = vunpack.c.0.s8 %v2305
    %v2307 = vperm.slane %v2303, %v2306
    %v2308 = vrot.slane %v2295, 4
    %v2309 = vsel %vm2116, %v2308, %v2289
    %v2310 = vrot.slane %v2289, 4
    %v2311 = vsel %vm2116, %v2295, %v2310
    %v2313 = vunpack.c.l.s4 1934713408
    %v2314 = vunpack.c.0.s8 %v2313
    %v2315 = vperm.slane %v2309, %v2314
    %v2317 = vunpack.c.l.s4 1934713408
    %v2318 = vunpack.c.0.s8 %v2317
    %v2319 = vperm.slane %v2311, %v2318
    %v2320 = vrot.slane %v2307, 4
    %v2321 = vsel %vm2116, %v2320, %v2301
    %v2322 = vrot.slane %v2301, 4
    %v2323 = vsel %vm2116, %v2307, %v2322
    %v2325 = vunpack.c.l.s4 1934713408
    %v2326 = vunpack.c.0.s8 %v2325
    %v2327 = vperm.slane %v2321, %v2326
    %v2329 = vunpack.c.l.s4 1934713408
    %v2330 = vunpack.c.0.s8 %v2329
    %v2331 = vperm.slane %v2323, %v2330
    %v2332 = vrot.slane %v2327, 4
    %v2333 = vsel %vm2116, %v2332, %v2315
    %v2334 = vrot.slane %v2315, 4
    %v2335 = vsel %vm2116, %v2327, %v2334
    %v2336 = vrot.slane %v2331, 4
    %v2337 = vsel %vm2116, %v2336, %v2319
    %v2338 = vrot.slane %v2319, 4
    %v2339 = vsel %vm2116, %v2331, %v2338
    %v2341 = vrot.slane %v115, 1
    %v2342 = vrot.slane %v115, 2
    %v2343 = vrot.slane %v115, 3
    %v2344 = vperm.slane %v115, 0
    %v2345 = vperm.slane %v2341, 0
    %v2346 = vperm.slane %v2342, 0
    %v2347 = vperm.slane %v2343, 0
    %v2352 = vmul.f32 %v2165, %v2344
    %v2353 = vmul.f32 %v2221, %v2344
    %v2354 = vmul.f32 %v2277, %v2344
    %v2355 = vmul.f32 %v2333, %v2344
    %v2356 = vmul.f32 %v2167, %v2345
    %v2357 = vmul.f32 %v2223, %v2345
    %v2358 = vmul.f32 %v2279, %v2345
    %v2359 = vmul.f32 %v2335, %v2345
    %v2360 = vmul.f32 %v2169, %v2346
    %v2361 = vmul.f32 %v2225, %v2346
    %v2362 = vmul.f32 %v2281, %v2346
    %v2363 = vmul.f32 %v2337, %v2346
    %v2364 = vmul.f32 %v2171, %v2347
    %v2365 = vmul.f32 %v2227, %v2347
    %v2366 = vmul.f32 %v2283, %v2347
    %v2367 = vmul.f32 %v2339, %v2347
    %2368 = vadd.xlane.f32.xlu0 %v2352
    %v2369 = vpop.xlane.xlu0 %2368
    %2370 = vadd.xlane.f32.xlu0 %v2353
    %v2371 = vpop.xlane.xlu0 %2370
    %2372 = vadd.xlane.f32.xlu0 %v2354
    %v2373 = vpop.xlane.xlu0 %2372
    %2374 = vadd.xlane.f32.xlu0 %v2355
    %v2375 = vpop.xlane.xlu0 %2374
    %2376 = vadd.xlane.f32.xlu0 %v2356
    %v2377 = vpop.xlane.xlu0 %2376
    %2378 = vadd.xlane.f32.xlu0 %v2357
    %v2379 = vpop.xlane.xlu0 %2378
    %2380 = vadd.xlane.f32.xlu0 %v2358
    %v2381 = vpop.xlane.xlu0 %2380
    %2382 = vadd.xlane.f32.xlu0 %v2359
    %v2383 = vpop.xlane.xlu0 %2382
    %2384 = vadd.xlane.f32.xlu0 %v2360
    %v2385 = vpop.xlane.xlu0 %2384
    %2386 = vadd.xlane.f32.xlu0 %v2361
    %v2387 = vpop.xlane.xlu0 %2386
    %2388 = vadd.xlane.f32.xlu0 %v2362
    %v2389 = vpop.xlane.xlu0 %2388
    %2390 = vadd.xlane.f32.xlu0 %v2363
    %v2391 = vpop.xlane.xlu0 %2390
    %2392 = vadd.xlane.f32.xlu0 %v2364
    %v2393 = vpop.xlane.xlu0 %2392
    %2394 = vadd.xlane.f32.xlu0 %v2365
    %v2395 = vpop.xlane.xlu0 %2394
    %2396 = vadd.xlane.f32.xlu0 %v2366
    %v2397 = vpop.xlane.xlu0 %2396
    %2398 = vadd.xlane.f32.xlu0 %v2367
    %v2399 = vpop.xlane.xlu0 %2398
    %v2400 = vperm.slane %v134, 0
    %v2402 = vlaneseq
    %v2403 = vshrl.u32 %v2402, 7
    %2405 = vset.pattern.permute.xlu0 %v2403
    %2406 = vperm.xlu0 %2405, %v2400
    %v2407 = vpop.permute.xlu0 %2406
    %v2408 = vlaneseq
    %v2409 = vshrl.u32 %v2408, 7
    %v2410 = vadd.s32 %v2409, 8
    %2411 = vset.pattern.permute.xlu0 %v2410
    %2412 = vperm.xlu0 %2411, %v2400
    %v2413 = vpop.permute.xlu0 %2412
    %v2414 = vlaneseq
    %v2415 = vshrl.u32 %v2414, 7
    %v2416 = vadd.s32 %v2415, 16
    %2417 = vset.pattern.permute.xlu0 %v2416
    %2418 = vperm.xlu0 %2417, %v2400
    %v2419 = vpop.permute.xlu0 %2418
    %v2420 = vlaneseq
    %v2421 = vshrl.u32 %v2420, 7
    %v2422 = vadd.s32 %v2421, 24
    %2423 = vset.pattern.permute.xlu0 %v2422
    %2424 = vperm.xlu0 %2423, %v2400
    %v2425 = vpop.permute.xlu0 %2424
    %v2430 = vadd.f32 %v2369, %v2407
    %v2431 = vadd.f32 %v2371, %v2413
    %v2432 = vadd.f32 %v2373, %v2419
    %v2433 = vadd.f32 %v2375, %v2425
    %v2434 = vadd.f32 %v2377, %v2407
    %v2435 = vadd.f32 %v2379, %v2413
    %v2436 = vadd.f32 %v2381, %v2419
    %v2437 = vadd.f32 %v2383, %v2425
    %v2438 = vadd.f32 %v2385, %v2407
    %v2439 = vadd.f32 %v2387, %v2413
    %v2440 = vadd.f32 %v2389, %v2419
    %v2441 = vadd.f32 %v2391, %v2425
    %v2442 = vadd.f32 %v2393, %v2407
    %v2443 = vadd.f32 %v2395, %v2413
    %v2444 = vadd.f32 %v2397, %v2419
    %v2445 = vadd.f32 %v2399, %v2425
    %v2446 = vsub.f32 0.0, %v2430
    %v2447 = vsub.f32 0.0, %v2431
    %v2448 = vsub.f32 0.0, %v2432
    %v2449 = vsub.f32 0.0, %v2433
    %v2450 = vsub.f32 0.0, %v2434
    %v2451 = vsub.f32 0.0, %v2435
    %v2452 = vsub.f32 0.0, %v2436
    %v2453 = vsub.f32 0.0, %v2437
    %v2454 = vsub.f32 0.0, %v2438
    %v2455 = vsub.f32 0.0, %v2439
    %v2456 = vsub.f32 0.0, %v2440
    %v2457 = vsub.f32 0.0, %v2441
    %v2458 = vsub.f32 0.0, %v2442
    %v2459 = vsub.f32 0.0, %v2443
    %v2460 = vsub.f32 0.0, %v2444
    %v2461 = vsub.f32 0.0, %v2445
    %v2462 = vmul.f32 %v2446, 1.442695
    %v2463 = vpow.pop %v2462
    %v2464 = vmul.f32 %v2447, 1.442695
    %v2465 = vpow.pop %v2464
    %v2466 = vmul.f32 %v2448, 1.442695
    %v2467 = vpow.pop %v2466
    %v2468 = vmul.f32 %v2449, 1.442695
    %v2469 = vpow.pop %v2468
    %v2470 = vmul.f32 %v2450, 1.442695
    %v2471 = vpow.pop %v2470
    %v2472 = vmul.f32 %v2451, 1.442695
    %v2473 = vpow.pop %v2472
    %v2474 = vmul.f32 %v2452, 1.442695
    %v2475 = vpow.pop %v2474
    %v2476 = vmul.f32 %v2453, 1.442695
    %v2477 = vpow.pop %v2476
    %v2478 = vmul.f32 %v2454, 1.442695
    %v2479 = vpow.pop %v2478
    %v2480 = vmul.f32 %v2455, 1.442695
    %v2481 = vpow.pop %v2480
    %v2482 = vmul.f32 %v2456, 1.442695
    %v2483 = vpow.pop %v2482
    %v2484 = vmul.f32 %v2457, 1.442695
    %v2485 = vpow.pop %v2484
    %v2486 = vmul.f32 %v2458, 1.442695
    %v2487 = vpow.pop %v2486
    %v2488 = vmul.f32 %v2459, 1.442695
    %v2489 = vpow.pop %v2488
    %v2490 = vmul.f32 %v2460, 1.442695
    %v2491 = vpow.pop %v2490
    %v2492 = vmul.f32 %v2461, 1.442695
    %v2493 = vpow.pop %v2492
    %v2494 = vadd.f32 %v2463, 1.0
    %v2495 = vadd.f32 %v2465, 1.0
    %v2496 = vadd.f32 %v2467, 1.0
    %v2497 = vadd.f32 %v2469, 1.0
    %v2498 = vadd.f32 %v2471, 1.0
    %v2499 = vadd.f32 %v2473, 1.0
    %v2500 = vadd.f32 %v2475, 1.0
    %v2501 = vadd.f32 %v2477, 1.0
    %v2502 = vadd.f32 %v2479, 1.0
    %v2503 = vadd.f32 %v2481, 1.0
    %v2504 = vadd.f32 %v2483, 1.0
    %v2505 = vadd.f32 %v2485, 1.0
    %v2506 = vadd.f32 %v2487, 1.0
    %v2507 = vadd.f32 %v2489, 1.0
    %v2508 = vadd.f32 %v2491, 1.0
    %v2509 = vadd.f32 %v2493, 1.0
    %v2510 = vrcp.pop %v2494
    %v2511 = vrcp.pop %v2495
    %v2512 = vrcp.pop %v2496
    %v2513 = vrcp.pop %v2497
    %v2514 = vrcp.pop %v2498
    %v2515 = vrcp.pop %v2499
    %v2516 = vrcp.pop %v2500
    %v2517 = vrcp.pop %v2501
    %v2518 = vrcp.pop %v2502
    %v2519 = vrcp.pop %v2503
    %v2520 = vrcp.pop %v2504
    %v2521 = vrcp.pop %v2505
    %v2522 = vrcp.pop %v2506
    %v2523 = vrcp.pop %v2507
    %v2524 = vrcp.pop %v2508
    %v2525 = vrcp.pop %v2509
    %v2527 = vperm.slane %v161, 0
    %v2528 = vlaneseq
    %v2529 = vshrl.u32 %v2528, 7
    %2531 = vset.pattern.permute.xlu0 %v2529
    %2532 = vperm.xlu0 %2531, %v2527
    %v2533 = vpop.permute.xlu0 %2532
    %v2534 = vlaneseq
    %v2535 = vshrl.u32 %v2534, 7
    %v2536 = vadd.s32 %v2535, 8
    %2537 = vset.pattern.permute.xlu0 %v2536
    %2538 = vperm.xlu0 %2537, %v2527
    %v2539 = vpop.permute.xlu0 %2538
    %v2540 = vlaneseq
    %v2541 = vshrl.u32 %v2540, 7
    %v2542 = vadd.s32 %v2541, 16
    %2543 = vset.pattern.permute.xlu0 %v2542
    %2544 = vperm.xlu0 %2543, %v2527
    %v2545 = vpop.permute.xlu0 %2544
    %v2546 = vlaneseq
    %v2547 = vshrl.u32 %v2546, 7
    %v2548 = vadd.s32 %v2547, 24
    %2549 = vset.pattern.permute.xlu0 %v2548
    %2550 = vperm.xlu0 %2549, %v2527
    %v2551 = vpop.permute.xlu0 %2550
    %v2552 = vperm.slane %v161, 1
    %v2553 = vlaneseq
    %v2554 = vshrl.u32 %v2553, 7
    %2556 = vset.pattern.permute.xlu0 %v2554
    %2557 = vperm.xlu0 %2556, %v2552
    %v2558 = vpop.permute.xlu0 %2557
    %v2559 = vlaneseq
    %v2560 = vshrl.u32 %v2559, 7
    %v2561 = vadd.s32 %v2560, 8
    %2562 = vset.pattern.permute.xlu0 %v2561
    %2563 = vperm.xlu0 %2562, %v2552
    %v2564 = vpop.permute.xlu0 %2563
    %v2565 = vlaneseq
    %v2566 = vshrl.u32 %v2565, 7
    %v2567 = vadd.s32 %v2566, 16
    %2568 = vset.pattern.permute.xlu0 %v2567
    %2569 = vperm.xlu0 %2568, %v2552
    %v2570 = vpop.permute.xlu0 %2569
    %v2571 = vlaneseq
    %v2572 = vshrl.u32 %v2571, 7
    %v2573 = vadd.s32 %v2572, 24
    %2574 = vset.pattern.permute.xlu0 %v2573
    %2575 = vperm.xlu0 %2574, %v2552
    %v2576 = vpop.permute.xlu0 %2575
    %v2577 = vperm.slane %v161, 2
    %v2578 = vlaneseq
    %v2579 = vshrl.u32 %v2578, 7
    %2581 = vset.pattern.permute.xlu0 %v2579
    %2582 = vperm.xlu0 %2581, %v2577
    %v2583 = vpop.permute.xlu0 %2582
    %v2584 = vlaneseq
    %v2585 = vshrl.u32 %v2584, 7
    %v2586 = vadd.s32 %v2585, 8
    %2587 = vset.pattern.permute.xlu0 %v2586
    %2588 = vperm.xlu0 %2587, %v2577
    %v2589 = vpop.permute.xlu0 %2588
    %v2590 = vlaneseq
    %v2591 = vshrl.u32 %v2590, 7
    %v2592 = vadd.s32 %v2591, 16
    %2593 = vset.pattern.permute.xlu0 %v2592
    %2594 = vperm.xlu0 %2593, %v2577
    %v2595 = vpop.permute.xlu0 %2594
    %v2596 = vlaneseq
    %v2597 = vshrl.u32 %v2596, 7
    %v2598 = vadd.s32 %v2597, 24
    %2599 = vset.pattern.permute.xlu0 %v2598
    %2600 = vperm.xlu0 %2599, %v2577
    %v2601 = vpop.permute.xlu0 %2600
    %v2602 = vperm.slane %v161, 3
    %v2603 = vlaneseq
    %v2604 = vshrl.u32 %v2603, 7
    %2606 = vset.pattern.permute.xlu0 %v2604
    %2607 = vperm.xlu0 %2606, %v2602
    %v2608 = vpop.permute.xlu0 %2607
    %v2609 = vlaneseq
    %v2610 = vshrl.u32 %v2609, 7
    %v2611 = vadd.s32 %v2610, 8
    %2612 = vset.pattern.permute.xlu0 %v2611
    %2613 = vperm.xlu0 %2612, %v2602
    %v2614 = vpop.permute.xlu0 %2613
    %v2615 = vlaneseq
    %v2616 = vshrl.u32 %v2615, 7
    %v2617 = vadd.s32 %v2616, 16
    %2618 = vset.pattern.permute.xlu0 %v2617
    %2619 = vperm.xlu0 %2618, %v2602
    %v2620 = vpop.permute.xlu0 %2619
    %v2621 = vlaneseq
    %v2622 = vshrl.u32 %v2621, 7
    %v2623 = vadd.s32 %v2622, 24
    %2624 = vset.pattern.permute.xlu0 %v2623
    %2625 = vperm.xlu0 %2624, %v2602
    %v2626 = vpop.permute.xlu0 %2625
    %v2643 = vmul.f32 %v2510, %v2533
    %v2644 = vmul.f32 %v2511, %v2539
    %v2645 = vmul.f32 %v2512, %v2545
    %v2646 = vmul.f32 %v2513, %v2551
    %v2647 = vmul.f32 %v2514, %v2558
    %v2648 = vmul.f32 %v2515, %v2564
    %v2649 = vmul.f32 %v2516, %v2570
    %v2650 = vmul.f32 %v2517, %v2576
    %v2651 = vmul.f32 %v2518, %v2583
    %v2652 = vmul.f32 %v2519, %v2589
    %v2653 = vmul.f32 %v2520, %v2595
    %v2654 = vmul.f32 %v2521, %v2601
    %v2655 = vmul.f32 %v2522, %v2608
    %v2656 = vmul.f32 %v2523, %v2614
    %v2657 = vmul.f32 %v2524, %v2620
    %v2658 = vmul.f32 %v2525, %v2626
    %v2659 = vperm.slane %v139, 0
    %2676 = vset.pattern.permute.xlu0 0
    %2677 = vperm.xlu0 %2676, %v2643
    %v2678 = vpop.permute.xlu0 %2677
    %2679 = vset.pattern.permute.xlu0 0
    %2680 = vperm.xlu0 %2679, %v2644
    %v2681 = vpop.permute.xlu0 %2680
    %2682 = vset.pattern.permute.xlu0 0
    %2683 = vperm.xlu0 %2682, %v2645
    %v2684 = vpop.permute.xlu0 %2683
    %2685 = vset.pattern.permute.xlu0 0
    %2686 = vperm.xlu0 %2685, %v2646
    %v2687 = vpop.permute.xlu0 %2686
    %2688 = vset.pattern.permute.xlu0 0
    %2689 = vperm.xlu0 %2688, %v2647
    %v2690 = vpop.permute.xlu0 %2689
    %2691 = vset.pattern.permute.xlu0 0
    %2692 = vperm.xlu0 %2691, %v2648
    %v2693 = vpop.permute.xlu0 %2692
    %2694 = vset.pattern.permute.xlu0 0
    %2695 = vperm.xlu0 %2694, %v2649
    %v2696 = vpop.permute.xlu0 %2695
    %2697 = vset.pattern.permute.xlu0 0
    %2698 = vperm.xlu0 %2697, %v2650
    %v2699 = vpop.permute.xlu0 %2698
    %2700 = vset.pattern.permute.xlu0 0
    %2701 = vperm.xlu0 %2700, %v2651
    %v2702 = vpop.permute.xlu0 %2701
    %2703 = vset.pattern.permute.xlu0 0
    %2704 = vperm.xlu0 %2703, %v2652
    %v2705 = vpop.permute.xlu0 %2704
    %2706 = vset.pattern.permute.xlu0 0
    %2707 = vperm.xlu0 %2706, %v2653
    %v2708 = vpop.permute.xlu0 %2707
    %2709 = vset.pattern.permute.xlu0 0
    %2710 = vperm.xlu0 %2709, %v2654
    %v2711 = vpop.permute.xlu0 %2710
    %2712 = vset.pattern.permute.xlu0 0
    %2713 = vperm.xlu0 %2712, %v2655
    %v2714 = vpop.permute.xlu0 %2713
    %2715 = vset.pattern.permute.xlu0 0
    %2716 = vperm.xlu0 %2715, %v2656
    %v2717 = vpop.permute.xlu0 %2716
    %2718 = vset.pattern.permute.xlu0 0
    %2719 = vperm.xlu0 %2718, %v2657
    %v2720 = vpop.permute.xlu0 %2719
    %2721 = vset.pattern.permute.xlu0 0
    %2722 = vperm.xlu0 %2721, %v2658
    %v2723 = vpop.permute.xlu0 %2722
    %v2724 = vlaneseq
    %v2725 = vand.u32 %v2724, 127
    %v2726 = vperm.slane %v2678, %v2725
    %v2727 = vadd.s32 %v2725, 4294967288
    %v2728 = vperm.slane %v2681, %v2727
    %vm2729 = vcmask 130112
    %v2730 = vsel %vm2729, %v2728, %v2726
    %v2731 = vadd.s32 %v2725, 4294967280
    %v2732 = vperm.slane %v2684, %v2731
    %vm2733 = vcmask 195712
    %v2734 = vsel %vm2733, %v2732, %v2730
    %v2735 = vadd.s32 %v2725, 4294967272
    %v2736 = vperm.slane %v2687, %v2735
    %vm2737 = vcmask 261312
    %v2738 = vsel %vm2737, %v2736, %v2734
    %v2739 = vperm.slane %v2690, %v2725
    %v2740 = vperm.slane %v2693, %v2727
    %v2741 = vsel %vm2729, %v2740, %v2739
    %v2742 = vperm.slane %v2696, %v2731
    %v2743 = vsel %vm2733, %v2742, %v2741
    %v2744 = vperm.slane %v2699, %v2735
    %v2745 = vsel %vm2737, %v2744, %v2743
    %v2746 = vperm.slane %v2702, %v2725
    %v2747 = vperm.slane %v2705, %v2727
    %v2748 = vsel %vm2729, %v2747, %v2746
    %v2749 = vperm.slane %v2708, %v2731
    %v2750 = vsel %vm2733, %v2749, %v2748
    %v2751 = vperm.slane %v2711, %v2735
    %v2752 = vsel %vm2737, %v2751, %v2750
    %v2753 = vperm.slane %v2714, %v2725
    %v2754 = vperm.slane %v2717, %v2727
    %v2755 = vsel %vm2729, %v2754, %v2753
    %v2756 = vperm.slane %v2720, %v2731
    %v2757 = vsel %vm2733, %v2756, %v2755
    %v2758 = vperm.slane %v2723, %v2735
    %v2759 = vsel %vm2737, %v2758, %v2757
    %vm2760 = vcmask 1041409
    %v2761 = vsel %vm2760, %v2745, %v2738
    %vm2762 = vcmask 1042434
    %v2763 = vsel %vm2762, %v2752, %v2761
    %vm2764 = vcmask 1043459
    %v2765 = vsel %vm2764, %v2759, %v2763
    %vm2766 = vcmask 261120
    %v2767 = vsel %vm2766, %v2765, 0
    %2769 = vmatpush.msra.mxu0 0.0
    %2770 = vmatpush.msra.mxu0 0.0
    %2771 = vmatpush.msra.mxu0 0.0
    %2772 = vmatpush.msra.mxu0 0.0
    %2773 = vmatpush.msra.mxu0 0.0
    %2774 = vmatpush.msra.mxu0 0.0
    %2775 = vmatpush.msra.mxu0 0.0
    %2776 = vmatpush.msra.mxu0 0.0
    %2777 = vmatpush.msra.mxu0 0.0
    %2778 = vmatpush.msra.mxu0 0.0
    %2779 = vmatpush.msra.mxu0 0.0
    %2780 = vmatpush.msra.mxu0 0.0
    %2781 = vmatpush.msra.mxu0 %v138
    %2782 = vmatpush.msra.mxu0 %v137
    %2783 = vmatpush.msra.mxu0 %v136
    %2784 = vmatpush.msra.mxu0 %v135
    %2785 = vmatmul.f32.gmra.mxu0 %v2767
    %v2786 = vpop.f32.mrf.mxu0
    %v2787 = vadd.f32 %v2659, %v2786
    %2788 = vdwg.mxu0
    %v2789 = vmax.f32 %v2787, 0.0
    %v2790 = vld [vmem:[#allocation11 + $0x80] sm:$0xff]
    %v2791 = vld [vmem:[#allocation11 + $0x88] sm:$0xff]
    %v2792 = vld [vmem:[#allocation11 + $0x90] sm:$0xff]
    %v2793 = vld [vmem:[#allocation11 + $0x98] sm:$0xff]
    %v2794 = vld [vmem:[#allocation11 + $0xa0] sm:$0xff]
    %v2795 = vld [vmem:[#allocation11 + $0xa8] sm:$0xff]
    %v2796 = vld [vmem:[#allocation11 + $0xb0] sm:$0xff]
    %v2797 = vld [vmem:[#allocation11 + $0xb8] sm:$0xff]
    %v2798 = vld [vmem:[#allocation11 + $0xc0] sm:$0xff]
    %v2799 = vld [vmem:[#allocation11 + $0xc8] sm:$0xff]
    %v2800 = vld [vmem:[#allocation11 + $0xd0] sm:$0xff]
    %v2801 = vld [vmem:[#allocation11 + $0xd8] sm:$0xff]
    %v2802 = vld [vmem:[#allocation11 + $0xe0] sm:$0xff]
    %v2803 = vld [vmem:[#allocation11 + $0xe8] sm:$0xff]
    %v2804 = vld [vmem:[#allocation11 + $0xf0] sm:$0xff]
    %v2805 = vld [vmem:[#allocation11 + $0xf8] sm:$0xff]
    %v2806 = vld [vmem:[#allocation11 + $0x213] sm:$0x1]
    %v2807 = vld [vmem:[#allocation11 + $0x214] sm:$0x1]
    %v2808 = vld [vmem:[#allocation11 + $0x120] sm:$0xff]
    %v2809 = vld [vmem:[#allocation11 + $0x128] sm:$0xff]
    %v2810 = vld [vmem:[#allocation11 + $0x130] sm:$0xff]
    %v2811 = vld [vmem:[#allocation11 + $0x138] sm:$0xff]
    %v2812 = vld [vmem:[#allocation11 + $0x215] sm:$0x1]
    %v2813 = vperm.slane %v2806, 0
    %2814 = vmatpush.msra.mxu0 %v2805
    %2815 = vmatpush.msra.mxu0 %v2804
    %2816 = vmatpush.msra.mxu0 %v2803
    %2817 = vmatpush.msra.mxu0 %v2802
    %2818 = vmatpush.msra.mxu0 %v2801
    %2819 = vmatpush.msra.mxu0 %v2800
    %2820 = vmatpush.msra.mxu0 %v2799
    %2821 = vmatpush.msra.mxu0 %v2798
    %2822 = vmatpush.msra.mxu0 %v2797
    %2823 = vmatpush.msra.mxu0 %v2796
    %2824 = vmatpush.msra.mxu0 %v2795
    %2825 = vmatpush.msra.mxu0 %v2794
    %2826 = vmatpush.msra.mxu0 %v2793
    %2827 = vmatpush.msra.mxu0 %v2792
    %2828 = vmatpush.msra.mxu0 %v2791
    %2829 = vmatpush.msra.mxu0 %v2790
    %2830 = vmatmul.f32.gmra.mxu0 %v116
    %v2831 = vpop.f32.mrf.mxu0
    %v2832 = vadd.f32 %v2813, %v2831
    %2833 = vdwg.mxu0
    %v2834 = vmax.f32 %v2832, 0.0
    %v2835 = vpack.c.bf16 %v115, %v115
    %v2836 = vld [vmem:[#allocation8] sm:$0xff]
    %v2837 = vld [vmem:[#allocation8 + $0x8] sm:$0xff]
    %v2838 = vld [vmem:[#allocation8 + $0x10] sm:$0xff]
    %v2839 = vld [vmem:[#allocation8 + $0x18] sm:$0xff]
    %v2840 = vld [vmem:[#allocation8 + $0x20] sm:$0xff]
    %v2841 = vld [vmem:[#allocation8 + $0x28] sm:$0xff]
    %v2842 = vld [vmem:[#allocation8 + $0x30] sm:$0xff]
    %v2843 = vld [vmem:[#allocation8 + $0x38] sm:$0xff]
    %v2844 = vld [vmem:[#allocation8 + $0x40] sm:$0xff]
    %v2845 = vld [vmem:[#allocation8 + $0x48] sm:$0xff]
    %v2846 = vld [vmem:[#allocation8 + $0x50] sm:$0xff]
    %v2847 = vld [vmem:[#allocation8 + $0x58] sm:$0xff]
    %v2848 = vld [vmem:[#allocation8 + $0x60] sm:$0xff]
    %v2849 = vld [vmem:[#allocation8 + $0x68] sm:$0xff]
    %v2850 = vld [vmem:[#allocation8 + $0x70] sm:$0xff]
    %v2851 = vld [vmem:[#allocation8 + $0x78] sm:$0xff]
    %v2852 = vld [vmem:[#allocation8 + $0x80] sm:$0xff]
    %v2853 = vld [vmem:[#allocation8 + $0x88] sm:$0xff]
    %v2854 = vld [vmem:[#allocation8 + $0x90] sm:$0xff]
    %v2855 = vld [vmem:[#allocation8 + $0x98] sm:$0xff]
    %v2856 = vld [vmem:[#allocation8 + $0xa0] sm:$0xff]
    %v2857 = vld [vmem:[#allocation8 + $0xa8] sm:$0xff]
    %v2858 = vld [vmem:[#allocation8 + $0xb0] sm:$0xff]
    %v2859 = vld [vmem:[#allocation8 + $0xb8] sm:$0xff]
    %v2860 = vld [vmem:[#allocation8 + $0xc0] sm:$0xff]
    %v2861 = vld [vmem:[#allocation8 + $0xc8] sm:$0xff]
    %v2862 = vld [vmem:[#allocation8 + $0xd0] sm:$0xff]
    %v2863 = vld [vmem:[#allocation8 + $0xd8] sm:$0xff]
    %v2864 = vld [vmem:[#allocation8 + $0xe0] sm:$0xff]
    %v2865 = vld [vmem:[#allocation8 + $0xe8] sm:$0xff]
    %v2866 = vld [vmem:[#allocation8 + $0xf0] sm:$0xff]
    %v2867 = vld [vmem:[#allocation8 + $0xf8] sm:$0xff]
    %v2868 = vld [vmem:[#allocation8 + $0x100] sm:$0xff]
    %v2869 = vld [vmem:[#allocation8 + $0x108] sm:$0xff]
    %v2870 = vld [vmem:[#allocation8 + $0x110] sm:$0xff]
    %v2871 = vld [vmem:[#allocation8 + $0x118] sm:$0xff]
    %v2872 = vld [vmem:[#allocation8 + $0x120] sm:$0xff]
    %v2873 = vld [vmem:[#allocation8 + $0x128] sm:$0xff]
    %v2874 = vld [vmem:[#allocation8 + $0x130] sm:$0xff]
    %v2875 = vld [vmem:[#allocation8 + $0x138] sm:$0xff]
    %v2876 = vld [vmem:[#allocation8 + $0x140] sm:$0xff]
    %v2877 = vld [vmem:[#allocation8 + $0x148] sm:$0xff]
    %v2878 = vld [vmem:[#allocation8 + $0x150] sm:$0xff]
    %v2879 = vld [vmem:[#allocation8 + $0x158] sm:$0xff]
    %v2880 = vld [vmem:[#allocation8 + $0x160] sm:$0xff]
    %v2881 = vld [vmem:[#allocation8 + $0x168] sm:$0xff]
    %v2882 = vld [vmem:[#allocation8 + $0x170] sm:$0xff]
    %v2883 = vld [vmem:[#allocation8 + $0x178] sm:$0xff]
    %v2884 = vld [vmem:[#allocation8 + $0x180] sm:$0xff]
    %v2885 = vld [vmem:[#allocation8 + $0x188] sm:$0xff]
    %v2886 = vld [vmem:[#allocation8 + $0x190] sm:$0xff]
    %v2887 = vld [vmem:[#allocation8 + $0x198] sm:$0xff]
    %v2888 = vld [vmem:[#allocation8 + $0x1a0] sm:$0xff]
    %v2889 = vld [vmem:[#allocation8 + $0x1a8] sm:$0xff]
    %v2890 = vld [vmem:[#allocation8 + $0x1b0] sm:$0xff]
    %v2891 = vld [vmem:[#allocation8 + $0x1b8] sm:$0xff]
    %v2892 = vld [vmem:[#allocation8 + $0x1c0] sm:$0xff]
    %v2893 = vld [vmem:[#allocation8 + $0x1c8] sm:$0xff]
    %v2894 = vld [vmem:[#allocation8 + $0x1d0] sm:$0xff]
    %v2895 = vld [vmem:[#allocation8 + $0x1d8] sm:$0xff]
    %v2896 = vld [vmem:[#allocation8 + $0x1e0] sm:$0xff]
    %v2897 = vld [vmem:[#allocation8 + $0x1e8] sm:$0xff]
    %v2898 = vld [vmem:[#allocation8 + $0x1f0] sm:$0xff]
    %v2899 = vld [vmem:[#allocation8 + $0x1f8] sm:$0xff]
    %v2900 = vld [vmem:[#allocation8 + $0x200] sm:$0xff]
    %v2901 = vld [vmem:[#allocation8 + $0x208] sm:$0xff]
    %v2902 = vld [vmem:[#allocation8 + $0x210] sm:$0xff]
    %v2903 = vld [vmem:[#allocation8 + $0x218] sm:$0xff]
    %v2904 = vld [vmem:[#allocation8 + $0x220] sm:$0xff]
    %v2905 = vld [vmem:[#allocation8 + $0x228] sm:$0xff]
    %v2906 = vld [vmem:[#allocation8 + $0x230] sm:$0xff]
    %v2907 = vld [vmem:[#allocation8 + $0x238] sm:$0xff]
    %v2908 = vld [vmem:[#allocation8 + $0x240] sm:$0xff]
    %v2909 = vld [vmem:[#allocation8 + $0x248] sm:$0xff]
    %v2910 = vld [vmem:[#allocation8 + $0x250] sm:$0xff]
    %v2911 = vld [vmem:[#allocation8 + $0x258] sm:$0xff]
    %v2912 = vld [vmem:[#allocation8 + $0x260] sm:$0xff]
    %v2913 = vld [vmem:[#allocation8 + $0x268] sm:$0xff]
    %v2914 = vld [vmem:[#allocation8 + $0x270] sm:$0xff]
    %v2915 = vld [vmem:[#allocation8 + $0x278] sm:$0xff]
    %v2916 = vld [vmem:[#allocation8 + $0x280] sm:$0xff]
    %v2917 = vld [vmem:[#allocation8 + $0x288] sm:$0xff]
    %v2918 = vld [vmem:[#allocation8 + $0x290] sm:$0xff]
    %v2919 = vld [vmem:[#allocation8 + $0x298] sm:$0xff]
    %v2920 = vld [vmem:[#allocation8 + $0x2a0] sm:$0xff]
    %v2921 = vld [vmem:[#allocation8 + $0x2a8] sm:$0xff]
    %v2922 = vld [vmem:[#allocation8 + $0x2b0] sm:$0xff]
    %v2923 = vld [vmem:[#allocation8 + $0x2b8] sm:$0xff]
    %v2924 = vld [vmem:[#allocation8 + $0x2c0] sm:$0xff]
    %v2925 = vld [vmem:[#allocation8 + $0x2c8] sm:$0xff]
    %v2926 = vld [vmem:[#allocation8 + $0x2d0] sm:$0xff]
    %v2927 = vld [vmem:[#allocation8 + $0x2d8] sm:$0xff]
    %v2928 = vld [vmem:[#allocation8 + $0x2e0] sm:$0xff]
    %v2929 = vld [vmem:[#allocation8 + $0x2e8] sm:$0xff]
    %v2930 = vld [vmem:[#allocation8 + $0x2f0] sm:$0xff]
    %v2931 = vld [vmem:[#allocation8 + $0x2f8] sm:$0xff]
    %v2932 = vld [vmem:[#allocation8 + $0x300] sm:$0xff]
    %v2933 = vld [vmem:[#allocation8 + $0x308] sm:$0xff]
    %v2934 = vld [vmem:[#allocation8 + $0x310] sm:$0xff]
    %v2935 = vld [vmem:[#allocation8 + $0x318] sm:$0xff]
    %v2936 = vld [vmem:[#allocation8 + $0x320] sm:$0xff]
    %v2937 = vld [vmem:[#allocation8 + $0x328] sm:$0xff]
    %v2938 = vld [vmem:[#allocation8 + $0x330] sm:$0xff]
    %v2939 = vld [vmem:[#allocation8 + $0x338] sm:$0xff]
    %v2940 = vld [vmem:[#allocation8 + $0x340] sm:$0xff]
    %v2941 = vld [vmem:[#allocation8 + $0x348] sm:$0xff]
    %v2942 = vld [vmem:[#allocation8 + $0x350] sm:$0xff]
    %v2943 = vld [vmem:[#allocation8 + $0x358] sm:$0xff]
    %v2944 = vld [vmem:[#allocation8 + $0x360] sm:$0xff]
    %v2945 = vld [vmem:[#allocation8 + $0x368] sm:$0xff]
    %v2946 = vld [vmem:[#allocation8 + $0x370] sm:$0xff]
    %v2947 = vld [vmem:[#allocation8 + $0x378] sm:$0xff]
    %v2948 = vld [vmem:[#allocation8 + $0x380] sm:$0xff]
    %v2949 = vld [vmem:[#allocation8 + $0x388] sm:$0xff]
    %v2950 = vld [vmem:[#allocation8 + $0x390] sm:$0xff]
    %v2951 = vld [vmem:[#allocation8 + $0x398] sm:$0xff]
    %v2952 = vld [vmem:[#allocation8 + $0x3a0] sm:$0xff]
    %v2953 = vld [vmem:[#allocation8 + $0x3a8] sm:$0xff]
    %v2954 = vld [vmem:[#allocation8 + $0x3b0] sm:$0xff]
    %v2955 = vld [vmem:[#allocation8 + $0x3b8] sm:$0xff]
    %v2956 = vld [vmem:[#allocation8 + $0x3c0] sm:$0xff]
    %v2957 = vld [vmem:[#allocation8 + $0x3c8] sm:$0xff]
    %v2958 = vld [vmem:[#allocation8 + $0x3d0] sm:$0xff]
    %v2959 = vld [vmem:[#allocation8 + $0x3d8] sm:$0xff]
    %v2960 = vld [vmem:[#allocation8 + $0x3e0] sm:$0xff]
    %v2961 = vld [vmem:[#allocation8 + $0x3e8] sm:$0xff]
    %v2962 = vld [vmem:[#allocation8 + $0x3f0] sm:$0xff]
    %v2963 = vld [vmem:[#allocation8 + $0x3f8] sm:$0xff]
    %v2964 = vld [vmem:[#allocation8 + $0x400] sm:$0xff]
    %v2965 = vld [vmem:[#allocation8 + $0x408] sm:$0xff]
    %v2966 = vld [vmem:[#allocation8 + $0x410] sm:$0xff]
    %v2967 = vld [vmem:[#allocation8 + $0x418] sm:$0xff]
    %v2968 = vld [vmem:[#allocation8 + $0x420] sm:$0xff]
    %v2969 = vld [vmem:[#allocation8 + $0x428] sm:$0xff]
    %v2970 = vld [vmem:[#allocation8 + $0x430] sm:$0xff]
    %v2971 = vld [vmem:[#allocation8 + $0x438] sm:$0xff]
    %v2972 = vld [vmem:[#allocation8 + $0x440] sm:$0xff]
    %v2973 = vld [vmem:[#allocation8 + $0x448] sm:$0xff]
    %v2974 = vld [vmem:[#allocation8 + $0x450] sm:$0xff]
    %v2975 = vld [vmem:[#allocation8 + $0x458] sm:$0xff]
    %v2976 = vld [vmem:[#allocation8 + $0x460] sm:$0xff]
    %v2977 = vld [vmem:[#allocation8 + $0x468] sm:$0xff]
    %v2978 = vld [vmem:[#allocation8 + $0x470] sm:$0xff]
    %v2979 = vld [vmem:[#allocation8 + $0x478] sm:$0xff]
    %v2980 = vld [vmem:[#allocation8 + $0x480] sm:$0xff]
    %v2981 = vld [vmem:[#allocation8 + $0x488] sm:$0xff]
    %v2982 = vld [vmem:[#allocation8 + $0x490] sm:$0xff]
    %v2983 = vld [vmem:[#allocation8 + $0x498] sm:$0xff]
    %v2984 = vld [vmem:[#allocation8 + $0x4a0] sm:$0xff]
    %v2985 = vld [vmem:[#allocation8 + $0x4a8] sm:$0xff]
    %v2986 = vld [vmem:[#allocation8 + $0x4b0] sm:$0xff]
    %v2987 = vld [vmem:[#allocation8 + $0x4b8] sm:$0xff]
    %v2988 = vld [vmem:[#allocation8 + $0x4c0] sm:$0xff]
    %v2989 = vld [vmem:[#allocation8 + $0x4c8] sm:$0xff]
    %v2990 = vld [vmem:[#allocation8 + $0x4d0] sm:$0xff]
    %v2991 = vld [vmem:[#allocation8 + $0x4d8] sm:$0xff]
    %v2992 = vld [vmem:[#allocation8 + $0x4e0] sm:$0xff]
    %v2993 = vld [vmem:[#allocation8 + $0x4e8] sm:$0xff]
    %v2994 = vld [vmem:[#allocation8 + $0x4f0] sm:$0xff]
    %v2995 = vld [vmem:[#allocation8 + $0x4f8] sm:$0xff]
    %v2996 = vld [vmem:[#allocation8 + $0x500] sm:$0xff]
    %v2997 = vld [vmem:[#allocation8 + $0x508] sm:$0xff]
    %v2998 = vld [vmem:[#allocation8 + $0x510] sm:$0xff]
    %v2999 = vld [vmem:[#allocation8 + $0x518] sm:$0xff]
    %v3000 = vld [vmem:[#allocation8 + $0x520] sm:$0xff]
    %v3001 = vld [vmem:[#allocation8 + $0x528] sm:$0xff]
    %v3002 = vld [vmem:[#allocation8 + $0x530] sm:$0xff]
    %v3003 = vld [vmem:[#allocation8 + $0x538] sm:$0xff]
    %v3004 = vld [vmem:[#allocation8 + $0x540] sm:$0xff]
    %v3005 = vld [vmem:[#allocation8 + $0x548] sm:$0xff]
    %v3006 = vld [vmem:[#allocation8 + $0x550] sm:$0xff]
    %v3007 = vld [vmem:[#allocation8 + $0x558] sm:$0xff]
    %v3008 = vld [vmem:[#allocation8 + $0x560] sm:$0xff]
    %v3009 = vld [vmem:[#allocation8 + $0x568] sm:$0xff]
    %v3010 = vld [vmem:[#allocation8 + $0x570] sm:$0xff]
    %v3011 = vld [vmem:[#allocation8 + $0x578] sm:$0xff]
    %v3012 = vld [vmem:[#allocation8 + $0x580] sm:$0xff]
    %v3013 = vld [vmem:[#allocation8 + $0x588] sm:$0xff]
    %v3014 = vld [vmem:[#allocation8 + $0x590] sm:$0xff]
    %v3015 = vld [vmem:[#allocation8 + $0x598] sm:$0xff]
    %v3016 = vld [vmem:[#allocation8 + $0x5a0] sm:$0xff]
    %v3017 = vld [vmem:[#allocation8 + $0x5a8] sm:$0xff]
    %v3018 = vld [vmem:[#allocation8 + $0x5b0] sm:$0xff]
    %v3019 = vld [vmem:[#allocation8 + $0x5b8] sm:$0xff]
    %v3020 = vld [vmem:[#allocation8 + $0x5c0] sm:$0xff]
    %v3021 = vld [vmem:[#allocation8 + $0x5c8] sm:$0xff]
    %v3022 = vld [vmem:[#allocation8 + $0x5d0] sm:$0xff]
    %v3023 = vld [vmem:[#allocation8 + $0x5d8] sm:$0xff]
    %v3024 = vld [vmem:[#allocation8 + $0x5e0] sm:$0xff]
    %v3025 = vld [vmem:[#allocation8 + $0x5e8] sm:$0xff]
    %v3026 = vld [vmem:[#allocation8 + $0x5f0] sm:$0xff]
    %v3027 = vld [vmem:[#allocation8 + $0x5f8] sm:$0xff]
    %v3028 = vld [vmem:[#allocation8 + $0x600] sm:$0xff]
    %v3029 = vld [vmem:[#allocation8 + $0x608] sm:$0xff]
    %v3030 = vld [vmem:[#allocation8 + $0x610] sm:$0xff]
    %v3031 = vld [vmem:[#allocation8 + $0x618] sm:$0xff]
    %v3032 = vld [vmem:[#allocation8 + $0x620] sm:$0xff]
    %v3033 = vld [vmem:[#allocation8 + $0x628] sm:$0xff]
    %v3034 = vld [vmem:[#allocation8 + $0x630] sm:$0xff]
    %v3035 = vld [vmem:[#allocation8 + $0x638] sm:$0xff]
    %v3036 = vld [vmem:[#allocation8 + $0x640] sm:$0xff]
    %v3037 = vld [vmem:[#allocation8 + $0x648] sm:$0xff]
    %v3038 = vld [vmem:[#allocation8 + $0x650] sm:$0xff]
    %v3039 = vld [vmem:[#allocation8 + $0x658] sm:$0xff]
    %v3040 = vld [vmem:[#allocation8 + $0x660] sm:$0xff]
    %v3041 = vld [vmem:[#allocation8 + $0x668] sm:$0xff]
    %v3042 = vld [vmem:[#allocation8 + $0x670] sm:$0xff]
    %v3043 = vld [vmem:[#allocation8 + $0x678] sm:$0xff]
    %v3044 = vld [vmem:[#allocation8 + $0x680] sm:$0xff]
    %v3045 = vld [vmem:[#allocation8 + $0x688] sm:$0xff]
    %v3046 = vld [vmem:[#allocation8 + $0x690] sm:$0xff]
    %v3047 = vld [vmem:[#allocation8 + $0x698] sm:$0xff]
    %v3048 = vld [vmem:[#allocation8 + $0x6a0] sm:$0xff]
    %v3049 = vld [vmem:[#allocation8 + $0x6a8] sm:$0xff]
    %v3050 = vld [vmem:[#allocation8 + $0x6b0] sm:$0xff]
    %v3051 = vld [vmem:[#allocation8 + $0x6b8] sm:$0xff]
    %v3052 = vld [vmem:[#allocation8 + $0x6c0] sm:$0xff]
    %v3053 = vld [vmem:[#allocation8 + $0x6c8] sm:$0xff]
    %v3054 = vld [vmem:[#allocation8 + $0x6d0] sm:$0xff]
    %v3055 = vld [vmem:[#allocation8 + $0x6d8] sm:$0xff]
    %v3056 = vld [vmem:[#allocation8 + $0x6e0] sm:$0xff]
    %v3057 = vld [vmem:[#allocation8 + $0x6e8] sm:$0xff]
    %v3058 = vld [vmem:[#allocation8 + $0x6f0] sm:$0xff]
    %v3059 = vld [vmem:[#allocation8 + $0x6f8] sm:$0xff]
    %v3060 = vld [vmem:[#allocation8 + $0x700] sm:$0xff]
    %v3061 = vld [vmem:[#allocation8 + $0x708] sm:$0xff]
    %v3062 = vld [vmem:[#allocation8 + $0x710] sm:$0xff]
    %v3063 = vld [vmem:[#allocation8 + $0x718] sm:$0xff]
    %v3064 = vld [vmem:[#allocation8 + $0x720] sm:$0xff]
    %v3065 = vld [vmem:[#allocation8 + $0x728] sm:$0xff]
    %v3066 = vld [vmem:[#allocation8 + $0x730] sm:$0xff]
    %v3067 = vld [vmem:[#allocation8 + $0x738] sm:$0xff]
    %v3068 = vld [vmem:[#allocation8 + $0x740] sm:$0xff]
    %v3069 = vld [vmem:[#allocation8 + $0x748] sm:$0xff]
    %v3070 = vld [vmem:[#allocation8 + $0x750] sm:$0xff]
    %v3071 = vld [vmem:[#allocation8 + $0x758] sm:$0xff]
    %v3072 = vld [vmem:[#allocation8 + $0x760] sm:$0xff]
    %v3073 = vld [vmem:[#allocation8 + $0x768] sm:$0xff]
    %v3074 = vld [vmem:[#allocation8 + $0x770] sm:$0xff]
    %v3075 = vld [vmem:[#allocation8 + $0x778] sm:$0xff]
    %v3076 = vld [vmem:[#allocation8 + $0x780] sm:$0xff]
    %v3077 = vld [vmem:[#allocation8 + $0x788] sm:$0xff]
    %v3078 = vld [vmem:[#allocation8 + $0x790] sm:$0xff]
    %v3079 = vld [vmem:[#allocation8 + $0x798] sm:$0xff]
    %v3080 = vld [vmem:[#allocation8 + $0x7a0] sm:$0xff]
    %v3081 = vld [vmem:[#allocation8 + $0x7a8] sm:$0xff]
    %v3082 = vld [vmem:[#allocation8 + $0x7b0] sm:$0xff]
    %v3083 = vld [vmem:[#allocation8 + $0x7b8] sm:$0xff]
    %v3084 = vld [vmem:[#allocation8 + $0x7c0] sm:$0xff]
    %v3085 = vld [vmem:[#allocation8 + $0x7c8] sm:$0xff]
    %v3086 = vld [vmem:[#allocation8 + $0x7d0] sm:$0xff]
    %v3087 = vld [vmem:[#allocation8 + $0x7d8] sm:$0xff]
    %v3088 = vld [vmem:[#allocation8 + $0x7e0] sm:$0xff]
    %v3089 = vld [vmem:[#allocation8 + $0x7e8] sm:$0xff]
    %v3090 = vld [vmem:[#allocation8 + $0x7f0] sm:$0xff]
    %v3091 = vld [vmem:[#allocation8 + $0x7f8] sm:$0xff]
    %v3348 = vunpack.c.l.b16 %v2836
    %v3349 = vunpack.c.h.b16 %v2836
    %v3350 = vunpack.c.l.b16 %v2837
    %v3351 = vunpack.c.h.b16 %v2837
    %v3352 = vunpack.c.l.b16 %v2838
    %v3353 = vunpack.c.h.b16 %v2838
    %v3354 = vunpack.c.l.b16 %v2839
    %v3355 = vunpack.c.h.b16 %v2839
    %v3356 = vunpack.c.l.b16 %v2840
    %v3357 = vunpack.c.h.b16 %v2840
    %v3358 = vunpack.c.l.b16 %v2841
    %v3359 = vunpack.c.h.b16 %v2841
    %v3360 = vunpack.c.l.b16 %v2842
    %v3361 = vunpack.c.h.b16 %v2842
    %v3362 = vunpack.c.l.b16 %v2843
    %v3363 = vunpack.c.h.b16 %v2843
    %v3364 = vunpack.c.l.b16 %v2844
    %v3365 = vunpack.c.h.b16 %v2844
    %v3366 = vunpack.c.l.b16 %v2845
    %v3367 = vunpack.c.h.b16 %v2845
    %v3368 = vunpack.c.l.b16 %v2846
    %v3369 = vunpack.c.h.b16 %v2846
    %v3370 = vunpack.c.l.b16 %v2847
    %v3371 = vunpack.c.h.b16 %v2847
    %v3372 = vunpack.c.l.b16 %v2848
    %v3373 = vunpack.c.h.b16 %v2848
    %v3374 = vunpack.c.l.b16 %v2849
    %v3375 = vunpack.c.h.b16 %v2849
    %v3376 = vunpack.c.l.b16 %v2850
    %v3377 = vunpack.c.h.b16 %v2850
    %v3378 = vunpack.c.l.b16 %v2851
    %v3379 = vunpack.c.h.b16 %v2851
    %v3380 = vunpack.c.l.b16 %v2852
    %v3381 = vunpack.c.h.b16 %v2852
    %v3382 = vunpack.c.l.b16 %v2853
    %v3383 = vunpack.c.h.b16 %v2853
    %v3384 = vunpack.c.l.b16 %v2854
    %v3385 = vunpack.c.h.b16 %v2854
    %v3386 = vunpack.c.l.b16 %v2855
    %v3387 = vunpack.c.h.b16 %v2855
    %v3388 = vunpack.c.l.b16 %v2856
    %v3389 = vunpack.c.h.b16 %v2856
    %v3390 = vunpack.c.l.b16 %v2857
    %v3391 = vunpack.c.h.b16 %v2857
    %v3392 = vunpack.c.l.b16 %v2858
    %v3393 = vunpack.c.h.b16 %v2858
    %v3394 = vunpack.c.l.b16 %v2859
    %v3395 = vunpack.c.h.b16 %v2859
    %v3396 = vunpack.c.l.b16 %v2860
    %v3397 = vunpack.c.h.b16 %v2860
    %v3398 = vunpack.c.l.b16 %v2861
    %v3399 = vunpack.c.h.b16 %v2861
    %v3400 = vunpack.c.l.b16 %v2862
    %v3401 = vunpack.c.h.b16 %v2862
    %v3402 = vunpack.c.l.b16 %v2863
    %v3403 = vunpack.c.h.b16 %v2863
    %v3404 = vunpack.c.l.b16 %v2864
    %v3405 = vunpack.c.h.b16 %v2864
    %v3406 = vunpack.c.l.b16 %v2865
    %v3407 = vunpack.c.h.b16 %v2865
    %v3408 = vunpack.c.l.b16 %v2866
    %v3409 = vunpack.c.h.b16 %v2866
    %v3410 = vunpack.c.l.b16 %v2867
    %v3411 = vunpack.c.h.b16 %v2867
    %v3412 = vunpack.c.l.b16 %v2868
    %v3413 = vunpack.c.h.b16 %v2868
    %v3414 = vunpack.c.l.b16 %v2869
    %v3415 = vunpack.c.h.b16 %v2869
    %v3416 = vunpack.c.l.b16 %v2870
    %v3417 = vunpack.c.h.b16 %v2870
    %v3418 = vunpack.c.l.b16 %v2871
    %v3419 = vunpack.c.h.b16 %v2871
    %v3420 = vunpack.c.l.b16 %v2872
    %v3421 = vunpack.c.h.b16 %v2872
    %v3422 = vunpack.c.l.b16 %v2873
    %v3423 = vunpack.c.h.b16 %v2873
    %v3424 = vunpack.c.l.b16 %v2874
    %v3425 = vunpack.c.h.b16 %v2874
    %v3426 = vunpack.c.l.b16 %v2875
    %v3427 = vunpack.c.h.b16 %v2875
    %v3428 = vunpack.c.l.b16 %v2876
    %v3429 = vunpack.c.h.b16 %v2876
    %v3430 = vunpack.c.l.b16 %v2877
    %v3431 = vunpack.c.h.b16 %v2877
    %v3432 = vunpack.c.l.b16 %v2878
    %v3433 = vunpack.c.h.b16 %v2878
    %v3434 = vunpack.c.l.b16 %v2879
    %v3435 = vunpack.c.h.b16 %v2879
    %v3436 = vunpack.c.l.b16 %v2880
    %v3437 = vunpack.c.h.b16 %v2880
    %v3438 = vunpack.c.l.b16 %v2881
    %v3439 = vunpack.c.h.b16 %v2881
    %v3440 = vunpack.c.l.b16 %v2882
    %v3441 = vunpack.c.h.b16 %v2882
    %v3442 = vunpack.c.l.b16 %v2883
    %v3443 = vunpack.c.h.b16 %v2883
    %v3444 = vunpack.c.l.b16 %v2884
    %v3445 = vunpack.c.h.b16 %v2884
    %v3446 = vunpack.c.l.b16 %v2885
    %v3447 = vunpack.c.h.b16 %v2885
    %v3448 = vunpack.c.l.b16 %v2886
    %v3449 = vunpack.c.h.b16 %v2886
    %v3450 = vunpack.c.l.b16 %v2887
    %v3451 = vunpack.c.h.b16 %v2887
    %v3452 = vunpack.c.l.b16 %v2888
    %v3453 = vunpack.c.h.b16 %v2888
    %v3454 = vunpack.c.l.b16 %v2889
    %v3455 = vunpack.c.h.b16 %v2889
    %v3456 = vunpack.c.l.b16 %v2890
    %v3457 = vunpack.c.h.b16 %v2890
    %v3458 = vunpack.c.l.b16 %v2891
    %v3459 = vunpack.c.h.b16 %v2891
    %v3460 = vunpack.c.l.b16 %v2892
    %v3461 = vunpack.c.h.b16 %v2892
    %v3462 = vunpack.c.l.b16 %v2893
    %v3463 = vunpack.c.h.b16 %v2893
    %v3464 = vunpack.c.l.b16 %v2894
    %v3465 = vunpack.c.h.b16 %v2894
    %v3466 = vunpack.c.l.b16 %v2895
    %v3467 = vunpack.c.h.b16 %v2895
    %v3468 = vunpack.c.l.b16 %v2896
    %v3469 = vunpack.c.h.b16 %v2896
    %v3470 = vunpack.c.l.b16 %v2897
    %v3471 = vunpack.c.h.b16 %v2897
    %v3472 = vunpack.c.l.b16 %v2898
    %v3473 = vunpack.c.h.b16 %v2898
    %v3474 = vunpack.c.l.b16 %v2899
    %v3475 = vunpack.c.h.b16 %v2899
    %v3476 = vunpack.c.l.b16 %v2900
    %v3477 = vunpack.c.h.b16 %v2900
    %v3478 = vunpack.c.l.b16 %v2901
    %v3479 = vunpack.c.h.b16 %v2901
    %v3480 = vunpack.c.l.b16 %v2902
    %v3481 = vunpack.c.h.b16 %v2902
    %v3482 = vunpack.c.l.b16 %v2903
    %v3483 = vunpack.c.h.b16 %v2903
    %v3484 = vunpack.c.l.b16 %v2904
    %v3485 = vunpack.c.h.b16 %v2904
    %v3486 = vunpack.c.l.b16 %v2905
    %v3487 = vunpack.c.h.b16 %v2905
    %v3488 = vunpack.c.l.b16 %v2906
    %v3489 = vunpack.c.h.b16 %v2906
    %v3490 = vunpack.c.l.b16 %v2907
    %v3491 = vunpack.c.h.b16 %v2907
    %v3492 = vunpack.c.l.b16 %v2908
    %v3493 = vunpack.c.h.b16 %v2908
    %v3494 = vunpack.c.l.b16 %v2909
    %v3495 = vunpack.c.h.b16 %v2909
    %v3496 = vunpack.c.l.b16 %v2910
    %v3497 = vunpack.c.h.b16 %v2910
    %v3498 = vunpack.c.l.b16 %v2911
    %v3499 = vunpack.c.h.b16 %v2911
    %v3500 = vunpack.c.l.b16 %v2912
    %v3501 = vunpack.c.h.b16 %v2912
    %v3502 = vunpack.c.l.b16 %v2913
    %v3503 = vunpack.c.h.b16 %v2913
    %v3504 = vunpack.c.l.b16 %v2914
    %v3505 = vunpack.c.h.b16 %v2914
    %v3506 = vunpack.c.l.b16 %v2915
    %v3507 = vunpack.c.h.b16 %v2915
    %v3508 = vunpack.c.l.b16 %v2916
    %v3509 = vunpack.c.h.b16 %v2916
    %v3510 = vunpack.c.l.b16 %v2917
    %v3511 = vunpack.c.h.b16 %v2917
    %v3512 = vunpack.c.l.b16 %v2918
    %v3513 = vunpack.c.h.b16 %v2918
    %v3514 = vunpack.c.l.b16 %v2919
    %v3515 = vunpack.c.h.b16 %v2919
    %v3516 = vunpack.c.l.b16 %v2920
    %v3517 = vunpack.c.h.b16 %v2920
    %v3518 = vunpack.c.l.b16 %v2921
    %v3519 = vunpack.c.h.b16 %v2921
    %v3520 = vunpack.c.l.b16 %v2922
    %v3521 = vunpack.c.h.b16 %v2922
    %v3522 = vunpack.c.l.b16 %v2923
    %v3523 = vunpack.c.h.b16 %v2923
    %v3524 = vunpack.c.l.b16 %v2924
    %v3525 = vunpack.c.h.b16 %v2924
    %v3526 = vunpack.c.l.b16 %v2925
    %v3527 = vunpack.c.h.b16 %v2925
    %v3528 = vunpack.c.l.b16 %v2926
    %v3529 = vunpack.c.h.b16 %v2926
    %v3530 = vunpack.c.l.b16 %v2927
    %v3531 = vunpack.c.h.b16 %v2927
    %v3532 = vunpack.c.l.b16 %v2928
    %v3533 = vunpack.c.h.b16 %v2928
    %v3534 = vunpack.c.l.b16 %v2929
    %v3535 = vunpack.c.h.b16 %v2929
    %v3536 = vunpack.c.l.b16 %v2930
    %v3537 = vunpack.c.h.b16 %v2930
    %v3538 = vunpack.c.l.b16 %v2931
    %v3539 = vunpack.c.h.b16 %v2931
    %v3540 = vunpack.c.l.b16 %v2932
    %v3541 = vunpack.c.h.b16 %v2932
    %v3542 = vunpack.c.l.b16 %v2933
    %v3543 = vunpack.c.h.b16 %v2933
    %v3544 = vunpack.c.l.b16 %v2934
    %v3545 = vunpack.c.h.b16 %v2934
    %v3546 = vunpack.c.l.b16 %v2935
    %v3547 = vunpack.c.h.b16 %v2935
    %v3548 = vunpack.c.l.b16 %v2936
    %v3549 = vunpack.c.h.b16 %v2936
    %v3550 = vunpack.c.l.b16 %v2937
    %v3551 = vunpack.c.h.b16 %v2937
    %v3552 = vunpack.c.l.b16 %v2938
    %v3553 = vunpack.c.h.b16 %v2938
    %v3554 = vunpack.c.l.b16 %v2939
    %v3555 = vunpack.c.h.b16 %v2939
    %v3556 = vunpack.c.l.b16 %v2940
    %v3557 = vunpack.c.h.b16 %v2940
    %v3558 = vunpack.c.l.b16 %v2941
    %v3559 = vunpack.c.h.b16 %v2941
    %v3560 = vunpack.c.l.b16 %v2942
    %v3561 = vunpack.c.h.b16 %v2942
    %v3562 = vunpack.c.l.b16 %v2943
    %v3563 = vunpack.c.h.b16 %v2943
    %v3564 = vunpack.c.l.b16 %v2944
    %v3565 = vunpack.c.h.b16 %v2944
    %v3566 = vunpack.c.l.b16 %v2945
    %v3567 = vunpack.c.h.b16 %v2945
    %v3568 = vunpack.c.l.b16 %v2946
    %v3569 = vunpack.c.h.b16 %v2946
    %v3570 = vunpack.c.l.b16 %v2947
    %v3571 = vunpack.c.h.b16 %v2947
    %v3572 = vunpack.c.l.b16 %v2948
    %v3573 = vunpack.c.h.b16 %v2948
    %v3574 = vunpack.c.l.b16 %v2949
    %v3575 = vunpack.c.h.b16 %v2949
    %v3576 = vunpack.c.l.b16 %v2950
    %v3577 = vunpack.c.h.b16 %v2950
    %v3578 = vunpack.c.l.b16 %v2951
    %v3579 = vunpack.c.h.b16 %v2951
    %v3580 = vunpack.c.l.b16 %v2952
    %v3581 = vunpack.c.h.b16 %v2952
    %v3582 = vunpack.c.l.b16 %v2953
    %v3583 = vunpack.c.h.b16 %v2953
    %v3584 = vunpack.c.l.b16 %v2954
    %v3585 = vunpack.c.h.b16 %v2954
    %v3586 = vunpack.c.l.b16 %v2955
    %v3587 = vunpack.c.h.b16 %v2955
    %v3588 = vunpack.c.l.b16 %v2956
    %v3589 = vunpack.c.h.b16 %v2956
    %v3590 = vunpack.c.l.b16 %v2957
    %v3591 = vunpack.c.h.b16 %v2957
    %v3592 = vunpack.c.l.b16 %v2958
    %v3593 = vunpack.c.h.b16 %v2958
    %v3594 = vunpack.c.l.b16 %v2959
    %v3595 = vunpack.c.h.b16 %v2959
    %v3596 = vunpack.c.l.b16 %v2960
    %v3597 = vunpack.c.h.b16 %v2960
    %v3598 = vunpack.c.l.b16 %v2961
    %v3599 = vunpack.c.h.b16 %v2961
    %v3600 = vunpack.c.l.b16 %v2962
    %v3601 = vunpack.c.h.b16 %v2962
    %v3602 = vunpack.c.l.b16 %v2963
    %v3603 = vunpack.c.h.b16 %v2963
    %v3604 = vunpack.c.l.b16 %v2964
    %v3605 = vunpack.c.h.b16 %v2964
    %v3606 = vunpack.c.l.b16 %v2965
    %v3607 = vunpack.c.h.b16 %v2965
    %v3608 = vunpack.c.l.b16 %v2966
    %v3609 = vunpack.c.h.b16 %v2966
    %v3610 = vunpack.c.l.b16 %v2967
    %v3611 = vunpack.c.h.b16 %v2967
    %v3612 = vunpack.c.l.b16 %v2968
    %v3613 = vunpack.c.h.b16 %v2968
    %v3614 = vunpack.c.l.b16 %v2969
    %v3615 = vunpack.c.h.b16 %v2969
    %v3616 = vunpack.c.l.b16 %v2970
    %v3617 = vunpack.c.h.b16 %v2970
    %v3618 = vunpack.c.l.b16 %v2971
    %v3619 = vunpack.c.h.b16 %v2971
    %v3620 = vunpack.c.l.b16 %v2972
    %v3621 = vunpack.c.h.b16 %v2972
    %v3622 = vunpack.c.l.b16 %v2973
    %v3623 = vunpack.c.h.b16 %v2973
    %v3624 = vunpack.c.l.b16 %v2974
    %v3625 = vunpack.c.h.b16 %v2974
    %v3626 = vunpack.c.l.b16 %v2975
    %v3627 = vunpack.c.h.b16 %v2975
    %v3628 = vunpack.c.l.b16 %v2976
    %v3629 = vunpack.c.h.b16 %v2976
    %v3630 = vunpack.c.l.b16 %v2977
    %v3631 = vunpack.c.h.b16 %v2977
    %v3632 = vunpack.c.l.b16 %v2978
    %v3633 = vunpack.c.h.b16 %v2978
    %v3634 = vunpack.c.l.b16 %v2979
    %v3635 = vunpack.c.h.b16 %v2979
    %v3636 = vunpack.c.l.b16 %v2980
    %v3637 = vunpack.c.h.b16 %v2980
    %v3638 = vunpack.c.l.b16 %v2981
    %v3639 = vunpack.c.h.b16 %v2981
    %v3640 = vunpack.c.l.b16 %v2982
    %v3641 = vunpack.c.h.b16 %v2982
    %v3642 = vunpack.c.l.b16 %v2983
    %v3643 = vunpack.c.h.b16 %v2983
    %v3644 = vunpack.c.l.b16 %v2984
    %v3645 = vunpack.c.h.b16 %v2984
    %v3646 = vunpack.c.l.b16 %v2985
    %v3647 = vunpack.c.h.b16 %v2985
    %v3648 = vunpack.c.l.b16 %v2986
    %v3649 = vunpack.c.h.b16 %v2986
    %v3650 = vunpack.c.l.b16 %v2987
    %v3651 = vunpack.c.h.b16 %v2987
    %v3652 = vunpack.c.l.b16 %v2988
    %v3653 = vunpack.c.h.b16 %v2988
    %v3654 = vunpack.c.l.b16 %v2989
    %v3655 = vunpack.c.h.b16 %v2989
    %v3656 = vunpack.c.l.b16 %v2990
    %v3657 = vunpack.c.h.b16 %v2990
    %v3658 = vunpack.c.l.b16 %v2991
    %v3659 = vunpack.c.h.b16 %v2991
    %v3660 = vunpack.c.l.b16 %v2992
    %v3661 = vunpack.c.h.b16 %v2992
    %v3662 = vunpack.c.l.b16 %v2993
    %v3663 = vunpack.c.h.b16 %v2993
    %v3664 = vunpack.c.l.b16 %v2994
    %v3665 = vunpack.c.h.b16 %v2994
    %v3666 = vunpack.c.l.b16 %v2995
    %v3667 = vunpack.c.h.b16 %v2995
    %v3668 = vunpack.c.l.b16 %v2996
    %v3669 = vunpack.c.h.b16 %v2996
    %v3670 = vunpack.c.l.b16 %v2997
    %v3671 = vunpack.c.h.b16 %v2997
    %v3672 = vunpack.c.l.b16 %v2998
    %v3673 = vunpack.c.h.b16 %v2998
    %v3674 = vunpack.c.l.b16 %v2999
    %v3675 = vunpack.c.h.b16 %v2999
    %v3676 = vunpack.c.l.b16 %v3000
    %v3677 = vunpack.c.h.b16 %v3000
    %v3678 = vunpack.c.l.b16 %v3001
    %v3679 = vunpack.c.h.b16 %v3001
    %v3680 = vunpack.c.l.b16 %v3002
    %v3681 = vunpack.c.h.b16 %v3002
    %v3682 = vunpack.c.l.b16 %v3003
    %v3683 = vunpack.c.h.b16 %v3003
    %v3684 = vunpack.c.l.b16 %v3004
    %v3685 = vunpack.c.h.b16 %v3004
    %v3686 = vunpack.c.l.b16 %v3005
    %v3687 = vunpack.c.h.b16 %v3005
    %v3688 = vunpack.c.l.b16 %v3006
    %v3689 = vunpack.c.h.b16 %v3006
    %v3690 = vunpack.c.l.b16 %v3007
    %v3691 = vunpack.c.h.b16 %v3007
    %v3692 = vunpack.c.l.b16 %v3008
    %v3693 = vunpack.c.h.b16 %v3008
    %v3694 = vunpack.c.l.b16 %v3009
    %v3695 = vunpack.c.h.b16 %v3009
    %v3696 = vunpack.c.l.b16 %v3010
    %v3697 = vunpack.c.h.b16 %v3010
    %v3698 = vunpack.c.l.b16 %v3011
    %v3699 = vunpack.c.h.b16 %v3011
    %v3700 = vunpack.c.l.b16 %v3012
    %v3701 = vunpack.c.h.b16 %v3012
    %v3702 = vunpack.c.l.b16 %v3013
    %v3703 = vunpack.c.h.b16 %v3013
    %v3704 = vunpack.c.l.b16 %v3014
    %v3705 = vunpack.c.h.b16 %v3014
    %v3706 = vunpack.c.l.b16 %v3015
    %v3707 = vunpack.c.h.b16 %v3015
    %v3708 = vunpack.c.l.b16 %v3016
    %v3709 = vunpack.c.h.b16 %v3016
    %v3710 = vunpack.c.l.b16 %v3017
    %v3711 = vunpack.c.h.b16 %v3017
    %v3712 = vunpack.c.l.b16 %v3018
    %v3713 = vunpack.c.h.b16 %v3018
    %v3714 = vunpack.c.l.b16 %v3019
    %v3715 = vunpack.c.h.b16 %v3019
    %v3716 = vunpack.c.l.b16 %v3020
    %v3717 = vunpack.c.h.b16 %v3020
    %v3718 = vunpack.c.l.b16 %v3021
    %v3719 = vunpack.c.h.b16 %v3021
    %v3720 = vunpack.c.l.b16 %v3022
    %v3721 = vunpack.c.h.b16 %v3022
    %v3722 = vunpack.c.l.b16 %v3023
    %v3723 = vunpack.c.h.b16 %v3023
    %v3724 = vunpack.c.l.b16 %v3024
    %v3725 = vunpack.c.h.b16 %v3024
    %v3726 = vunpack.c.l.b16 %v3025
    %v3727 = vunpack.c.h.b16 %v3025
    %v3728 = vunpack.c.l.b16 %v3026
    %v3729 = vunpack.c.h.b16 %v3026
    %v3730 = vunpack.c.l.b16 %v3027
    %v3731 = vunpack.c.h.b16 %v3027
    %v3732 = vunpack.c.l.b16 %v3028
    %v3733 = vunpack.c.h.b16 %v3028
    %v3734 = vunpack.c.l.b16 %v3029
    %v3735 = vunpack.c.h.b16 %v3029
    %v3736 = vunpack.c.l.b16 %v3030
    %v3737 = vunpack.c.h.b16 %v3030
    %v3738 = vunpack.c.l.b16 %v3031
    %v3739 = vunpack.c.h.b16 %v3031
    %v3740 = vunpack.c.l.b16 %v3032
    %v3741 = vunpack.c.h.b16 %v3032
    %v3742 = vunpack.c.l.b16 %v3033
    %v3743 = vunpack.c.h.b16 %v3033
    %v3744 = vunpack.c.l.b16 %v3034
    %v3745 = vunpack.c.h.b16 %v3034
    %v3746 = vunpack.c.l.b16 %v3035
    %v3747 = vunpack.c.h.b16 %v3035
    %v3748 = vunpack.c.l.b16 %v3036
    %v3749 = vunpack.c.h.b16 %v3036
    %v3750 = vunpack.c.l.b16 %v3037
    %v3751 = vunpack.c.h.b16 %v3037
    %v3752 = vunpack.c.l.b16 %v3038
    %v3753 = vunpack.c.h.b16 %v3038
    %v3754 = vunpack.c.l.b16 %v3039
    %v3755 = vunpack.c.h.b16 %v3039
    %v3756 = vunpack.c.l.b16 %v3040
    %v3757 = vunpack.c.h.b16 %v3040
    %v3758 = vunpack.c.l.b16 %v3041
    %v3759 = vunpack.c.h.b16 %v3041
    %v3760 = vunpack.c.l.b16 %v3042
    %v3761 = vunpack.c.h.b16 %v3042
    %v3762 = vunpack.c.l.b16 %v3043
    %v3763 = vunpack.c.h.b16 %v3043
    %v3764 = vunpack.c.l.b16 %v3044
    %v3765 = vunpack.c.h.b16 %v3044
    %v3766 = vunpack.c.l.b16 %v3045
    %v3767 = vunpack.c.h.b16 %v3045
    %v3768 = vunpack.c.l.b16 %v3046
    %v3769 = vunpack.c.h.b16 %v3046
    %v3770 = vunpack.c.l.b16 %v3047
    %v3771 = vunpack.c.h.b16 %v3047
    %v3772 = vunpack.c.l.b16 %v3048
    %v3773 = vunpack.c.h.b16 %v3048
    %v3774 = vunpack.c.l.b16 %v3049
    %v3775 = vunpack.c.h.b16 %v3049
    %v3776 = vunpack.c.l.b16 %v3050
    %v3777 = vunpack.c.h.b16 %v3050
    %v3778 = vunpack.c.l.b16 %v3051
    %v3779 = vunpack.c.h.b16 %v3051
    %v3780 = vunpack.c.l.b16 %v3052
    %v3781 = vunpack.c.h.b16 %v3052
    %v3782 = vunpack.c.l.b16 %v3053
    %v3783 = vunpack.c.h.b16 %v3053
    %v3784 = vunpack.c.l.b16 %v3054
    %v3785 = vunpack.c.h.b16 %v3054
    %v3786 = vunpack.c.l.b16 %v3055
    %v3787 = vunpack.c.h.b16 %v3055
    %v3788 = vunpack.c.l.b16 %v3056
    %v3789 = vunpack.c.h.b16 %v3056
    %v3790 = vunpack.c.l.b16 %v3057
    %v3791 = vunpack.c.h.b16 %v3057
    %v3792 = vunpack.c.l.b16 %v3058
    %v3793 = vunpack.c.h.b16 %v3058
    %v3794 = vunpack.c.l.b16 %v3059
    %v3795 = vunpack.c.h.b16 %v3059
    %v3796 = vunpack.c.l.b16 %v3060
    %v3797 = vunpack.c.h.b16 %v3060
    %v3798 = vunpack.c.l.b16 %v3061
    %v3799 = vunpack.c.h.b16 %v3061
    %v3800 = vunpack.c.l.b16 %v3062
    %v3801 = vunpack.c.h.b16 %v3062
    %v3802 = vunpack.c.l.b16 %v3063
    %v3803 = vunpack.c.h.b16 %v3063
    %v3804 = vunpack.c.l.b16 %v3064
    %v3805 = vunpack.c.h.b16 %v3064
    %v3806 = vunpack.c.l.b16 %v3065
    %v3807 = vunpack.c.h.b16 %v3065
    %v3808 = vunpack.c.l.b16 %v3066
    %v3809 = vunpack.c.h.b16 %v3066
    %v3810 = vunpack.c.l.b16 %v3067
    %v3811 = vunpack.c.h.b16 %v3067
    %v3812 = vunpack.c.l.b16 %v3068
    %v3813 = vunpack.c.h.b16 %v3068
    %v3814 = vunpack.c.l.b16 %v3069
    %v3815 = vunpack.c.h.b16 %v3069
    %v3816 = vunpack.c.l.b16 %v3070
    %v3817 = vunpack.c.h.b16 %v3070
    %v3818 = vunpack.c.l.b16 %v3071
    %v3819 = vunpack.c.h.b16 %v3071
    %v3820 = vunpack.c.l.b16 %v3072
    %v3821 = vunpack.c.h.b16 %v3072
    %v3822 = vunpack.c.l.b16 %v3073
    %v3823 = vunpack.c.h.b16 %v3073
    %v3824 = vunpack.c.l.b16 %v3074
    %v3825 = vunpack.c.h.b16 %v3074
    %v3826 = vunpack.c.l.b16 %v3075
    %v3827 = vunpack.c.h.b16 %v3075
    %v3828 = vunpack.c.l.b16 %v3076
    %v3829 = vunpack.c.h.b16 %v3076
    %v3830 = vunpack.c.l.b16 %v3077
    %v3831 = vunpack.c.h.b16 %v3077
    %v3832 = vunpack.c.l.b16 %v3078
    %v3833 = vunpack.c.h.b16 %v3078
    %v3834 = vunpack.c.l.b16 %v3079
    %v3835 = vunpack.c.h.b16 %v3079
    %v3836 = vunpack.c.l.b16 %v3080
    %v3837 = vunpack.c.h.b16 %v3080
    %v3838 = vunpack.c.l.b16 %v3081
    %v3839 = vunpack.c.h.b16 %v3081
    %v3840 = vunpack.c.l.b16 %v3082
    %v3841 = vunpack.c.h.b16 %v3082
    %v3842 = vunpack.c.l.b16 %v3083
    %v3843 = vunpack.c.h.b16 %v3083
    %v3844 = vunpack.c.l.b16 %v3084
    %v3845 = vunpack.c.h.b16 %v3084
    %v3846 = vunpack.c.l.b16 %v3085
    %v3847 = vunpack.c.h.b16 %v3085
    %v3848 = vunpack.c.l.b16 %v3086
    %v3849 = vunpack.c.h.b16 %v3086
    %v3850 = vunpack.c.l.b16 %v3087
    %v3851 = vunpack.c.h.b16 %v3087
    %v3852 = vunpack.c.l.b16 %v3088
    %v3853 = vunpack.c.h.b16 %v3088
    %v3854 = vunpack.c.l.b16 %v3089
    %v3855 = vunpack.c.h.b16 %v3089
    %v3856 = vunpack.c.l.b16 %v3090
    %v3857 = vunpack.c.h.b16 %v3090
    %v3858 = vunpack.c.l.b16 %v3091
    %v3859 = vunpack.c.h.b16 %v3091
    %v3860 = vpack.c.b16 %v3380, %v3348
    %v3861 = vpack.c.b16 %v3381, %v3349
    %v3862 = vpack.c.b16 %v3382, %v3350
    %v3863 = vpack.c.b16 %v3383, %v3351
    %v3864 = vpack.c.b16 %v3384, %v3352
    %v3865 = vpack.c.b16 %v3385, %v3353
    %v3866 = vpack.c.b16 %v3386, %v3354
    %v3867 = vpack.c.b16 %v3387, %v3355
    %v3868 = vpack.c.b16 %v3388, %v3356
    %v3869 = vpack.c.b16 %v3389, %v3357
    %v3870 = vpack.c.b16 %v3390, %v3358
    %v3871 = vpack.c.b16 %v3391, %v3359
    %v3872 = vpack.c.b16 %v3392, %v3360
    %v3873 = vpack.c.b16 %v3393, %v3361
    %v3874 = vpack.c.b16 %v3394, %v3362
    %v3875 = vpack.c.b16 %v3395, %v3363
    %v3876 = vpack.c.b16 %v3396, %v3364
    %v3877 = vpack.c.b16 %v3397, %v3365
    %v3878 = vpack.c.b16 %v3398, %v3366
    %v3879 = vpack.c.b16 %v3399, %v3367
    %v3880 = vpack.c.b16 %v3400, %v3368
    %v3881 = vpack.c.b16 %v3401, %v3369
    %v3882 = vpack.c.b16 %v3402, %v3370
    %v3883 = vpack.c.b16 %v3403, %v3371
    %v3884 = vpack.c.b16 %v3404, %v3372
    %v3885 = vpack.c.b16 %v3405, %v3373
    %v3886 = vpack.c.b16 %v3406, %v3374
    %v3887 = vpack.c.b16 %v3407, %v3375
    %v3888 = vpack.c.b16 %v3408, %v3376
    %v3889 = vpack.c.b16 %v3409, %v3377
    %v3890 = vpack.c.b16 %v3410, %v3378
    %v3891 = vpack.c.b16 %v3411, %v3379
    %v3892 = vpack.c.b16 %v3444, %v3412
    %v3893 = vpack.c.b16 %v3445, %v3413
    %v3894 = vpack.c.b16 %v3446, %v3414
    %v3895 = vpack.c.b16 %v3447, %v3415
    %v3896 = vpack.c.b16 %v3448, %v3416
    %v3897 = vpack.c.b16 %v3449, %v3417
    %v3898 = vpack.c.b16 %v3450, %v3418
    %v3899 = vpack.c.b16 %v3451, %v3419
    %v3900 = vpack.c.b16 %v3452, %v3420
    %v3901 = vpack.c.b16 %v3453, %v3421
    %v3902 = vpack.c.b16 %v3454, %v3422
    %v3903 = vpack.c.b16 %v3455, %v3423
    %v3904 = vpack.c.b16 %v3456, %v3424
    %v3905 = vpack.c.b16 %v3457, %v3425
    %v3906 = vpack.c.b16 %v3458, %v3426
    %v3907 = vpack.c.b16 %v3459, %v3427
    %v3908 = vpack.c.b16 %v3460, %v3428
    %v3909 = vpack.c.b16 %v3461, %v3429
    %v3910 = vpack.c.b16 %v3462, %v3430
    %v3911 = vpack.c.b16 %v3463, %v3431
    %v3912 = vpack.c.b16 %v3464, %v3432
    %v3913 = vpack.c.b16 %v3465, %v3433
    %v3914 = vpack.c.b16 %v3466, %v3434
    %v3915 = vpack.c.b16 %v3467, %v3435
    %v3916 = vpack.c.b16 %v3468, %v3436
    %v3917 = vpack.c.b16 %v3469, %v3437
    %v3918 = vpack.c.b16 %v3470, %v3438
    %v3919 = vpack.c.b16 %v3471, %v3439
    %v3920 = vpack.c.b16 %v3472, %v3440
    %v3921 = vpack.c.b16 %v3473, %v3441
    %v3922 = vpack.c.b16 %v3474, %v3442
    %v3923 = vpack.c.b16 %v3475, %v3443
    %v3924 = vpack.c.b16 %v3508, %v3476
    %v3925 = vpack.c.b16 %v3509, %v3477
    %v3926 = vpack.c.b16 %v3510, %v3478
    %v3927 = vpack.c.b16 %v3511, %v3479
    %v3928 = vpack.c.b16 %v3512, %v3480
    %v3929 = vpack.c.b16 %v3513, %v3481
    %v3930 = vpack.c.b16 %v3514, %v3482
    %v3931 = vpack.c.b16 %v3515, %v3483
    %v3932 = vpack.c.b16 %v3516, %v3484
    %v3933 = vpack.c.b16 %v3517, %v3485
    %v3934 = vpack.c.b16 %v3518, %v3486
    %v3935 = vpack.c.b16 %v3519, %v3487
    %v3936 = vpack.c.b16 %v3520, %v3488
    %v3937 = vpack.c.b16 %v3521, %v3489
    %v3938 = vpack.c.b16 %v3522, %v3490
    %v3939 = vpack.c.b16 %v3523, %v3491
    %v3940 = vpack.c.b16 %v3524, %v3492
    %v3941 = vpack.c.b16 %v3525, %v3493
    %v3942 = vpack.c.b16 %v3526, %v3494
    %v3943 = vpack.c.b16 %v3527, %v3495
    %v3944 = vpack.c.b16 %v3528, %v3496
    %v3945 = vpack.c.b16 %v3529, %v3497
    %v3946 = vpack.c.b16 %v3530, %v3498
    %v3947 = vpack.c.b16 %v3531, %v3499
    %v3948 = vpack.c.b16 %v3532, %v3500
    %v3949 = vpack.c.b16 %v3533, %v3501
    %v3950 = vpack.c.b16 %v3534, %v3502
    %v3951 = vpack.c.b16 %v3535, %v3503
    %v3952 = vpack.c.b16 %v3536, %v3504
    %v3953 = vpack.c.b16 %v3537, %v3505
    %v3954 = vpack.c.b16 %v3538, %v3506
    %v3955 = vpack.c.b16 %v3539, %v3507
    %v3956 = vpack.c.b16 %v3572, %v3540
    %v3957 = vpack.c.b16 %v3573, %v3541
    %v3958 = vpack.c.b16 %v3574, %v3542
    %v3959 = vpack.c.b16 %v3575, %v3543
    %v3960 = vpack.c.b16 %v3576, %v3544
    %v3961 = vpack.c.b16 %v3577, %v3545
    %v3962 = vpack.c.b16 %v3578, %v3546
    %v3963 = vpack.c.b16 %v3579, %v3547
    %v3964 = vpack.c.b16 %v3580, %v3548
    %v3965 = vpack.c.b16 %v3581, %v3549
    %v3966 = vpack.c.b16 %v3582, %v3550
    %v3967 = vpack.c.b16 %v3583, %v3551
    %v3968 = vpack.c.b16 %v3584, %v3552
    %v3969 = vpack.c.b16 %v3585, %v3553
    %v3970 = vpack.c.b16 %v3586, %v3554
    %v3971 = vpack.c.b16 %v3587, %v3555
    %v3972 = vpack.c.b16 %v3588, %v3556
    %v3973 = vpack.c.b16 %v3589, %v3557
    %v3974 = vpack.c.b16 %v3590, %v3558
    %v3975 = vpack.c.b16 %v3591, %v3559
    %v3976 = vpack.c.b16 %v3592, %v3560
    %v3977 = vpack.c.b16 %v3593, %v3561
    %v3978 = vpack.c.b16 %v3594, %v3562
    %v3979 = vpack.c.b16 %v3595, %v3563
    %v3980 = vpack.c.b16 %v3596, %v3564
    %v3981 = vpack.c.b16 %v3597, %v3565
    %v3982 = vpack.c.b16 %v3598, %v3566
    %v3983 = vpack.c.b16 %v3599, %v3567
    %v3984 = vpack.c.b16 %v3600, %v3568
    %v3985 = vpack.c.b16 %v3601, %v3569
    %v3986 = vpack.c.b16 %v3602, %v3570
    %v3987 = vpack.c.b16 %v3603, %v3571
    %v3988 = vpack.c.b16 %v3636, %v3604
    %v3989 = vpack.c.b16 %v3637, %v3605
    %v3990 = vpack.c.b16 %v3638, %v3606
    %v3991 = vpack.c.b16 %v3639, %v3607
    %v3992 = vpack.c.b16 %v3640, %v3608
    %v3993 = vpack.c.b16 %v3641, %v3609
    %v3994 = vpack.c.b16 %v3642, %v3610
    %v3995 = vpack.c.b16 %v3643, %v3611
    %v3996 = vpack.c.b16 %v3644, %v3612
    %v3997 = vpack.c.b16 %v3645, %v3613
    %v3998 = vpack.c.b16 %v3646, %v3614
    %v3999 = vpack.c.b16 %v3647, %v3615
    %v4000 = vpack.c.b16 %v3648, %v3616
    %v4001 = vpack.c.b16 %v3649, %v3617
    %v4002 = vpack.c.b16 %v3650, %v3618
    %v4003 = vpack.c.b16 %v3651, %v3619
    %v4004 = vpack.c.b16 %v3652, %v3620
    %v4005 = vpack.c.b16 %v3653, %v3621
    %v4006 = vpack.c.b16 %v3654, %v3622
    %v4007 = vpack.c.b16 %v3655, %v3623
    %v4008 = vpack.c.b16 %v3656, %v3624
    %v4009 = vpack.c.b16 %v3657, %v3625
    %v4010 = vpack.c.b16 %v3658, %v3626
    %v4011 = vpack.c.b16 %v3659, %v3627
    %v4012 = vpack.c.b16 %v3660, %v3628
    %v4013 = vpack.c.b16 %v3661, %v3629
    %v4014 = vpack.c.b16 %v3662, %v3630
    %v4015 = vpack.c.b16 %v3663, %v3631
    %v4016 = vpack.c.b16 %v3664, %v3632
    %v4017 = vpack.c.b16 %v3665, %v3633
    %v4018 = vpack.c.b16 %v3666, %v3634
    %v4019 = vpack.c.b16 %v3667, %v3635
    %v4020 = vpack.c.b16 %v3700, %v3668
    %v4021 = vpack.c.b16 %v3701, %v3669
    %v4022 = vpack.c.b16 %v3702, %v3670
    %v4023 = vpack.c.b16 %v3703, %v3671
    %v4024 = vpack.c.b16 %v3704, %v3672
    %v4025 = vpack.c.b16 %v3705, %v3673
    %v4026 = vpack.c.b16 %v3706, %v3674
    %v4027 = vpack.c.b16 %v3707, %v3675
    %v4028 = vpack.c.b16 %v3708, %v3676
    %v4029 = vpack.c.b16 %v3709, %v3677
    %v4030 = vpack.c.b16 %v3710, %v3678
    %v4031 = vpack.c.b16 %v3711, %v3679
    %v4032 = vpack.c.b16 %v3712, %v3680
    %v4033 = vpack.c.b16 %v3713, %v3681
    %v4034 = vpack.c.b16 %v3714, %v3682
    %v4035 = vpack.c.b16 %v3715, %v3683
    %v4036 = vpack.c.b16 %v3716, %v3684
    %v4037 = vpack.c.b16 %v3717, %v3685
    %v4038 = vpack.c.b16 %v3718, %v3686
    %v4039 = vpack.c.b16 %v3719, %v3687
    %v4040 = vpack.c.b16 %v3720, %v3688
    %v4041 = vpack.c.b16 %v3721, %v3689
    %v4042 = vpack.c.b16 %v3722, %v3690
    %v4043 = vpack.c.b16 %v3723, %v3691
    %v4044 = vpack.c.b16 %v3724, %v3692
    %v4045 = vpack.c.b16 %v3725, %v3693
    %v4046 = vpack.c.b16 %v3726, %v3694
    %v4047 = vpack.c.b16 %v3727, %v3695
    %v4048 = vpack.c.b16 %v3728, %v3696
    %v4049 = vpack.c.b16 %v3729, %v3697
    %v4050 = vpack.c.b16 %v3730, %v3698
    %v4051 = vpack.c.b16 %v3731, %v3699
    %v4052 = vpack.c.b16 %v3764, %v3732
    %v4053 = vpack.c.b16 %v3765, %v3733
    %v4054 = vpack.c.b16 %v3766, %v3734
    %v4055 = vpack.c.b16 %v3767, %v3735
    %v4056 = vpack.c.b16 %v3768, %v3736
    %v4057 = vpack.c.b16 %v3769, %v3737
    %v4058 = vpack.c.b16 %v3770, %v3738
    %v4059 = vpack.c.b16 %v3771, %v3739
    %v4060 = vpack.c.b16 %v3772, %v3740
    %v4061 = vpack.c.b16 %v3773, %v3741
    %v4062 = vpack.c.b16 %v3774, %v3742
    %v4063 = vpack.c.b16 %v3775, %v3743
    %v4064 = vpack.c.b16 %v3776, %v3744
    %v4065 = vpack.c.b16 %v3777, %v3745
    %v4066 = vpack.c.b16 %v3778, %v3746
    %v4067 = vpack.c.b16 %v3779, %v3747
    %v4068 = vpack.c.b16 %v3780, %v3748
    %v4069 = vpack.c.b16 %v3781, %v3749
    %v4070 = vpack.c.b16 %v3782, %v3750
    %v4071 = vpack.c.b16 %v3783, %v3751
    %v4072 = vpack.c.b16 %v3784, %v3752
    %v4073 = vpack.c.b16 %v3785, %v3753
    %v4074 = vpack.c.b16 %v3786, %v3754
    %v4075 = vpack.c.b16 %v3787, %v3755
    %v4076 = vpack.c.b16 %v3788, %v3756
    %v4077 = vpack.c.b16 %v3789, %v3757
    %v4078 = vpack.c.b16 %v3790, %v3758
    %v4079 = vpack.c.b16 %v3791, %v3759
    %v4080 = vpack.c.b16 %v3792, %v3760
    %v4081 = vpack.c.b16 %v3793, %v3761
    %v4082 = vpack.c.b16 %v3794, %v3762
    %v4083 = vpack.c.b16 %v3795, %v3763
    %v4084 = vpack.c.b16 %v3828, %v3796
    %v4085 = vpack.c.b16 %v3829, %v3797
    %v4086 = vpack.c.b16 %v3830, %v3798
    %v4087 = vpack.c.b16 %v3831, %v3799
    %v4088 = vpack.c.b16 %v3832, %v3800
    %v4089 = vpack.c.b16 %v3833, %v3801
    %v4090 = vpack.c.b16 %v3834, %v3802
    %v4091 = vpack.c.b16 %v3835, %v3803
    %v4092 = vpack.c.b16 %v3836, %v3804
    %v4093 = vpack.c.b16 %v3837, %v3805
    %v4094 = vpack.c.b16 %v3838, %v3806
    %v4095 = vpack.c.b16 %v3839, %v3807
    %v4096 = vpack.c.b16 %v3840, %v3808
    %v4097 = vpack.c.b16 %v3841, %v3809
    %v4098 = vpack.c.b16 %v3842, %v3810
    %v4099 = vpack.c.b16 %v3843, %v3811
    %v4100 = vpack.c.b16 %v3844, %v3812
    %v4101 = vpack.c.b16 %v3845, %v3813
    %v4102 = vpack.c.b16 %v3846, %v3814
    %v4103 = vpack.c.b16 %v3847, %v3815
    %v4104 = vpack.c.b16 %v3848, %v3816
    %v4105 = vpack.c.b16 %v3849, %v3817
    %v4106 = vpack.c.b16 %v3850, %v3818
    %v4107 = vpack.c.b16 %v3851, %v3819
    %v4108 = vpack.c.b16 %v3852, %v3820
    %v4109 = vpack.c.b16 %v3853, %v3821
    %v4110 = vpack.c.b16 %v3854, %v3822
    %v4111 = vpack.c.b16 %v3855, %v3823
    %v4112 = vpack.c.b16 %v3856, %v3824
    %v4113 = vpack.c.b16 %v3857, %v3825
    %v4114 = vpack.c.b16 %v3858, %v3826
    %v4115 = vpack.c.b16 %v3859, %v3827
    %4372 = vmatpush.bf16.msra.mxu0 %v4084
    %4373 = vmatpush.bf16.msra.mxu0 %v4052
    %4374 = vmatpush.bf16.msra.mxu0 %v4020
    %4375 = vmatpush.bf16.msra.mxu0 %v3988
    %4376 = vmatpush.bf16.msra.mxu0 %v3956
    %4377 = vmatpush.bf16.msra.mxu0 %v3924
    %4378 = vmatpush.bf16.msra.mxu0 %v3892
    %4379 = vmatpush.bf16.msra.mxu0 %v3860
    %4380 = vmatmul.bf16.gmra.mxu0 %v2835
    %v4381 = vpop.f32.mrf.mxu0
    %v4382 = vadd.f32 0.0, %v4381
    %v4383 = vpop.f32.mrf.mxu0
    %4384 = vdwg.mxu0
    %4385 = vmatpush.bf16.msra.mxu0 %v4085
    %4386 = vmatpush.bf16.msra.mxu0 %v4053
    %4387 = vmatpush.bf16.msra.mxu0 %v4021
    %4388 = vmatpush.bf16.msra.mxu0 %v3989
    %4389 = vmatpush.bf16.msra.mxu0 %v3957
    %4390 = vmatpush.bf16.msra.mxu0 %v3925
    %4391 = vmatpush.bf16.msra.mxu0 %v3893
    %4392 = vmatpush.bf16.msra.mxu0 %v3861
    %4393 = vmatmul.bf16.gmra.mxu0 %v2835
    %v4394 = vpop.f32.mrf.mxu0
    %v4395 = vadd.f32 0.0, %v4394
    %v4396 = vpop.f32.mrf.mxu0
    %4397 = vdwg.mxu0
    %4398 = vmatpush.bf16.msra.mxu0 %v4086
    %4399 = vmatpush.bf16.msra.mxu0 %v4054
    %4400 = vmatpush.bf16.msra.mxu0 %v4022
    %4401 = vmatpush.bf16.msra.mxu0 %v3990
    %4402 = vmatpush.bf16.msra.mxu0 %v3958
    %4403 = vmatpush.bf16.msra.mxu0 %v3926
    %4404 = vmatpush.bf16.msra.mxu0 %v3894
    %4405 = vmatpush.bf16.msra.mxu0 %v3862
    %4406 = vmatmul.bf16.gmra.mxu0 %v2835
    %v4407 = vpop.f32.mrf.mxu0
    %v4408 = vadd.f32 0.0, %v4407
    %v4409 = vpop.f32.mrf.mxu0
    %4410 = vdwg.mxu0
    %4411 = vmatpush.bf16.msra.mxu0 %v4087
    %4412 = vmatpush.bf16.msra.mxu0 %v4055
    %4413 = vmatpush.bf16.msra.mxu0 %v4023
    %4414 = vmatpush.bf16.msra.mxu0 %v3991
    %4415 = vmatpush.bf16.msra.mxu0 %v3959
    %4416 = vmatpush.bf16.msra.mxu0 %v3927
    %4417 = vmatpush.bf16.msra.mxu0 %v3895
    %4418 = vmatpush.bf16.msra.mxu0 %v3863
    %4419 = vmatmul.bf16.gmra.mxu0 %v2835
    %v4420 = vpop.f32.mrf.mxu0
    %v4421 = vadd.f32 0.0, %v4420
    %v4422 = vpop.f32.mrf.mxu0
    %4423 = vdwg.mxu0
    %4424 = vmatpush.bf16.msra.mxu0 %v4088
    %4425 = vmatpush.bf16.msra.mxu0 %v4056
    %4426 = vmatpush.bf16.msra.mxu0 %v4024
    %4427 = vmatpush.bf16.msra.mxu0 %v3992
    %4428 = vmatpush.bf16.msra.mxu0 %v3960
    %4429 = vmatpush.bf16.msra.mxu0 %v3928
    %4430 = vmatpush.bf16.msra.mxu0 %v3896
    %4431 = vmatpush.bf16.msra.mxu0 %v3864
    %4432 = vmatmul.bf16.gmra.mxu0 %v2835
    %v4433 = vpop.f32.mrf.mxu0
    %v4434 = vadd.f32 0.0, %v4433
    %v4435 = vpop.f32.mrf.mxu0
    %4436 = vdwg.mxu0
    %4437 = vmatpush.bf16.msra.mxu0 %v4089
    %4438 = vmatpush.bf16.msra.mxu0 %v4057
    %4439 = vmatpush.bf16.msra.mxu0 %v4025
    %4440 = vmatpush.bf16.msra.mxu0 %v3993
    %4441 = vmatpush.bf16.msra.mxu0 %v3961
    %4442 = vmatpush.bf16.msra.mxu0 %v3929
    %4443 = vmatpush.bf16.msra.mxu0 %v3897
    %4444 = vmatpush.bf16.msra.mxu0 %v3865
    %4445 = vmatmul.bf16.gmra.mxu0 %v2835
    %v4446 = vpop.f32.mrf.mxu0
    %v4447 = vadd.f32 0.0, %v4446
    %v4448 = vpop.f32.mrf.mxu0
    %4449 = vdwg.mxu0
    %4450 = vmatpush.bf16.msra.mxu0 %v4090
    %4451 = vmatpush.bf16.msra.mxu0 %v4058
    %4452 = vmatpush.bf16.msra.mxu0 %v4026
    %4453 = vmatpush.bf16.msra.mxu0 %v3994
    %4454 = vmatpush.bf16.msra.mxu0 %v3962
    %4455 = vmatpush.bf16.msra.mxu0 %v3930
    %4456 = vmatpush.bf16.msra.mxu0 %v3898
    %4457 = vmatpush.bf16.msra.mxu0 %v3866
    %4458 = vmatmul.bf16.gmra.mxu0 %v2835
    %v4459 = vpop.f32.mrf.mxu0
    %v4460 = vadd.f32 0.0, %v4459
    %v4461 = vpop.f32.mrf.mxu0
    %4462 = vdwg.mxu0
    %4463 = vmatpush.bf16.msra.mxu0 %v4091
    %4464 = vmatpush.bf16.msra.mxu0 %v4059
    %4465 = vmatpush.bf16.msra.mxu0 %v4027
    %4466 = vmatpush.bf16.msra.mxu0 %v3995
    %4467 = vmatpush.bf16.msra.mxu0 %v3963
    %4468 = vmatpush.bf16.msra.mxu0 %v3931
    %4469 = vmatpush.bf16.msra.mxu0 %v3899
    %4470 = vmatpush.bf16.msra.mxu0 %v3867
    %4471 = vmatmul.bf16.gmra.mxu0 %v2835
    %v4472 = vpop.f32.mrf.mxu0
    %v4473 = vadd.f32 0.0, %v4472
    %v4474 = vpop.f32.mrf.mxu0
    %4475 = vdwg.mxu0
    %4476 = vmatpush.bf16.msra.mxu0 %v4092
    %4477 = vmatpush.bf16.msra.mxu0 %v4060
    %4478 = vmatpush.bf16.msra.mxu0 %v4028
    %4479 = vmatpush.bf16.msra.mxu0 %v3996
    %4480 = vmatpush.bf16.msra.mxu0 %v3964
    %4481 = vmatpush.bf16.msra.mxu0 %v3932
    %4482 = vmatpush.bf16.msra.mxu0 %v3900
    %4483 = vmatpush.bf16.msra.mxu0 %v3868
    %4484 = vmatmul.bf16.gmra.mxu0 %v2835
    %v4485 = vpop.f32.mrf.mxu0
    %v4486 = vadd.f32 0.0, %v4485
    %v4487 = vpop.f32.mrf.mxu0
    %4488 = vdwg.mxu0
    %4489 = vmatpush.bf16.msra.mxu0 %v4093
    %4490 = vmatpush.bf16.msra.mxu0 %v4061
    %4491 = vmatpush.bf16.msra.mxu0 %v4029
    %4492 = vmatpush.bf16.msra.mxu0 %v3997
    %4493 = vmatpush.bf16.msra.mxu0 %v3965
    %4494 = vmatpush.bf16.msra.mxu0 %v3933
    %4495 = vmatpush.bf16.msra.mxu0 %v3901
    %4496 = vmatpush.bf16.msra.mxu0 %v3869
    %4497 = vmatmul.bf16.gmra.mxu0 %v2835
    %v4498 = vpop.f32.mrf.mxu0
    %v4499 = vadd.f32 0.0, %v4498
    %v4500 = vpop.f32.mrf.mxu0
    %4501 = vdwg.mxu0
    %4502 = vmatpush.bf16.msra.mxu0 %v4094
    %4503 = vmatpush.bf16.msra.mxu0 %v4062
    %4504 = vmatpush.bf16.msra.mxu0 %v4030
    %4505 = vmatpush.bf16.msra.mxu0 %v3998
    %4506 = vmatpush.bf16.msra.mxu0 %v3966
    %4507 = vmatpush.bf16.msra.mxu0 %v3934
    %4508 = vmatpush.bf16.msra.mxu0 %v3902
    %4509 = vmatpush.bf16.msra.mxu0 %v3870
    %4510 = vmatmul.bf16.gmra.mxu0 %v2835
    %v4511 = vpop.f32.mrf.mxu0
    %v4512 = vadd.f32 0.0, %v4511
    %v4513 = vpop.f32.mrf.mxu0
    %4514 = vdwg.mxu0
    %4515 = vmatpush.bf16.msra.mxu0 %v4095
    %4516 = vmatpush.bf16.msra.mxu0 %v4063
    %4517 = vmatpush.bf16.msra.mxu0 %v4031
    %4518 = vmatpush.bf16.msra.mxu0 %v3999
    %4519 = vmatpush.bf16.msra.mxu0 %v3967
    %4520 = vmatpush.bf16.msra.mxu0 %v3935
    %4521 = vmatpush.bf16.msra.mxu0 %v3903
    %4522 = vmatpush.bf16.msra.mxu0 %v3871
    %4523 = vmatmul.bf16.gmra.mxu0 %v2835
    %v4524 = vpop.f32.mrf.mxu0
    %v4525 = vadd.f32 0.0, %v4524
    %v4526 = vpop.f32.mrf.mxu0
    %4527 = vdwg.mxu0
    %4528 = vmatpush.bf16.msra.mxu0 %v4096
    %4529 = vmatpush.bf16.msra.mxu0 %v4064
    %4530 = vmatpush.bf16.msra.mxu0 %v4032
    %4531 = vmatpush.bf16.msra.mxu0 %v4000
    %4532 = vmatpush.bf16.msra.mxu0 %v3968
    %4533 = vmatpush.bf16.msra.mxu0 %v3936
    %4534 = vmatpush.bf16.msra.mxu0 %v3904
    %4535 = vmatpush.bf16.msra.mxu0 %v3872
    %4536 = vmatmul.bf16.gmra.mxu0 %v2835
    %v4537 = vpop.f32.mrf.mxu0
    %v4538 = vadd.f32 0.0, %v4537
    %v4539 = vpop.f32.mrf.mxu0
    %4540 = vdwg.mxu0
    %4541 = vmatpush.bf16.msra.mxu0 %v4097
    %4542 = vmatpush.bf16.msra.mxu0 %v4065
    %4543 = vmatpush.bf16.msra.mxu0 %v4033
    %4544 = vmatpush.bf16.msra.mxu0 %v4001
    %4545 = vmatpush.bf16.msra.mxu0 %v3969
    %4546 = vmatpush.bf16.msra.mxu0 %v3937
    %4547 = vmatpush.bf16.msra.mxu0 %v3905
    %4548 = vmatpush.bf16.msra.mxu0 %v3873
    %4549 = vmatmul.bf16.gmra.mxu0 %v2835
    %v4550 = vpop.f32.mrf.mxu0
    %v4551 = vadd.f32 0.0, %v4550
    %v4552 = vpop.f32.mrf.mxu0
    %4553 = vdwg.mxu0
    %4554 = vmatpush.bf16.msra.mxu0 %v4098
    %4555 = vmatpush.bf16.msra.mxu0 %v4066
    %4556 = vmatpush.bf16.msra.mxu0 %v4034
    %4557 = vmatpush.bf16.msra.mxu0 %v4002
    %4558 = vmatpush.bf16.msra.mxu0 %v3970
    %4559 = vmatpush.bf16.msra.mxu0 %v3938
    %4560 = vmatpush.bf16.msra.mxu0 %v3906
    %4561 = vmatpush.bf16.msra.mxu0 %v3874
    %4562 = vmatmul.bf16.gmra.mxu0 %v2835
    %v4563 = vpop.f32.mrf.mxu0
    %v4564 = vadd.f32 0.0, %v4563
    %v4565 = vpop.f32.mrf.mxu0
    %4566 = vdwg.mxu0
    %4567 = vmatpush.bf16.msra.mxu0 %v4099
    %4568 = vmatpush.bf16.msra.mxu0 %v4067
    %4569 = vmatpush.bf16.msra.mxu0 %v4035
    %4570 = vmatpush.bf16.msra.mxu0 %v4003
    %4571 = vmatpush.bf16.msra.mxu0 %v3971
    %4572 = vmatpush.bf16.msra.mxu0 %v3939
    %4573 = vmatpush.bf16.msra.mxu0 %v3907
    %4574 = vmatpush.bf16.msra.mxu0 %v3875
    %4575 = vmatmul.bf16.gmra.mxu0 %v2835
    %v4576 = vpop.f32.mrf.mxu0
    %v4577 = vadd.f32 0.0, %v4576
    %v4578 = vpop.f32.mrf.mxu0
    %4579 = vdwg.mxu0
    %4580 = vmatpush.bf16.msra.mxu0 %v4100
    %4581 = vmatpush.bf16.msra.mxu0 %v4068
    %4582 = vmatpush.bf16.msra.mxu0 %v4036
    %4583 = vmatpush.bf16.msra.mxu0 %v4004
    %4584 = vmatpush.bf16.msra.mxu0 %v3972
    %4585 = vmatpush.bf16.msra.mxu0 %v3940
    %4586 = vmatpush.bf16.msra.mxu0 %v3908
    %4587 = vmatpush.bf16.msra.mxu0 %v3876
    %4588 = vmatmul.bf16.gmra.mxu0 %v2835
    %v4589 = vpop.f32.mrf.mxu0
    %v4590 = vadd.f32 0.0, %v4589
    %v4591 = vpop.f32.mrf.mxu0
    %4592 = vdwg.mxu0
    %4593 = vmatpush.bf16.msra.mxu0 %v4101
    %4594 = vmatpush.bf16.msra.mxu0 %v4069
    %4595 = vmatpush.bf16.msra.mxu0 %v4037
    %4596 = vmatpush.bf16.msra.mxu0 %v4005
    %4597 = vmatpush.bf16.msra.mxu0 %v3973
    %4598 = vmatpush.bf16.msra.mxu0 %v3941
    %4599 = vmatpush.bf16.msra.mxu0 %v3909
    %4600 = vmatpush.bf16.msra.mxu0 %v3877
    %4601 = vmatmul.bf16.gmra.mxu0 %v2835
    %v4602 = vpop.f32.mrf.mxu0
    %v4603 = vadd.f32 0.0, %v4602
    %v4604 = vpop.f32.mrf.mxu0
    %4605 = vdwg.mxu0
    %4606 = vmatpush.bf16.msra.mxu0 %v4102
    %4607 = vmatpush.bf16.msra.mxu0 %v4070
    %4608 = vmatpush.bf16.msra.mxu0 %v4038
    %4609 = vmatpush.bf16.msra.mxu0 %v4006
    %4610 = vmatpush.bf16.msra.mxu0 %v3974
    %4611 = vmatpush.bf16.msra.mxu0 %v3942
    %4612 = vmatpush.bf16.msra.mxu0 %v3910
    %4613 = vmatpush.bf16.msra.mxu0 %v3878
    %4614 = vmatmul.bf16.gmra.mxu0 %v2835
    %v4615 = vpop.f32.mrf.mxu0
    %v4616 = vadd.f32 0.0, %v4615
    %v4617 = vpop.f32.mrf.mxu0
    %4618 = vdwg.mxu0
    %4619 = vmatpush.bf16.msra.mxu0 %v4103
    %4620 = vmatpush.bf16.msra.mxu0 %v4071
    %4621 = vmatpush.bf16.msra.mxu0 %v4039
    %4622 = vmatpush.bf16.msra.mxu0 %v4007
    %4623 = vmatpush.bf16.msra.mxu0 %v3975
    %4624 = vmatpush.bf16.msra.mxu0 %v3943
    %4625 = vmatpush.bf16.msra.mxu0 %v3911
    %4626 = vmatpush.bf16.msra.mxu0 %v3879
    %4627 = vmatmul.bf16.gmra.mxu0 %v2835
    %v4628 = vpop.f32.mrf.mxu0
    %v4629 = vadd.f32 0.0, %v4628
    %v4630 = vpop.f32.mrf.mxu0
    %4631 = vdwg.mxu0
    %4632 = vmatpush.bf16.msra.mxu0 %v4104
    %4633 = vmatpush.bf16.msra.mxu0 %v4072
    %4634 = vmatpush.bf16.msra.mxu0 %v4040
    %4635 = vmatpush.bf16.msra.mxu0 %v4008
    %4636 = vmatpush.bf16.msra.mxu0 %v3976
    %4637 = vmatpush.bf16.msra.mxu0 %v3944
    %4638 = vmatpush.bf16.msra.mxu0 %v3912
    %4639 = vmatpush.bf16.msra.mxu0 %v3880
    %4640 = vmatmul.bf16.gmra.mxu0 %v2835
    %v4641 = vpop.f32.mrf.mxu0
    %v4642 = vadd.f32 0.0, %v4641
    %v4643 = vpop.f32.mrf.mxu0
    %4644 = vdwg.mxu0
    %4645 = vmatpush.bf16.msra.mxu0 %v4105
    %4646 = vmatpush.bf16.msra.mxu0 %v4073
    %4647 = vmatpush.bf16.msra.mxu0 %v4041
    %4648 = vmatpush.bf16.msra.mxu0 %v4009
    %4649 = vmatpush.bf16.msra.mxu0 %v3977
    %4650 = vmatpush.bf16.msra.mxu0 %v3945
    %4651 = vmatpush.bf16.msra.mxu0 %v3913
    %4652 = vmatpush.bf16.msra.mxu0 %v3881
    %4653 = vmatmul.bf16.gmra.mxu0 %v2835
    %v4654 = vpop.f32.mrf.mxu0
    %v4655 = vadd.f32 0.0, %v4654
    %v4656 = vpop.f32.mrf.mxu0
    %4657 = vdwg.mxu0
    %4658 = vmatpush.bf16.msra.mxu0 %v4106
    %4659 = vmatpush.bf16.msra.mxu0 %v4074
    %4660 = vmatpush.bf16.msra.mxu0 %v4042
    %4661 = vmatpush.bf16.msra.mxu0 %v4010
    %4662 = vmatpush.bf16.msra.mxu0 %v3978
    %4663 = vmatpush.bf16.msra.mxu0 %v3946
    %4664 = vmatpush.bf16.msra.mxu0 %v3914
    %4665 = vmatpush.bf16.msra.mxu0 %v3882
    %4666 = vmatmul.bf16.gmra.mxu0 %v2835
    %v4667 = vpop.f32.mrf.mxu0
    %v4668 = vadd.f32 0.0, %v4667
    %v4669 = vpop.f32.mrf.mxu0
    %4670 = vdwg.mxu0
    %4671 = vmatpush.bf16.msra.mxu0 %v4107
    %4672 = vmatpush.bf16.msra.mxu0 %v4075
    %4673 = vmatpush.bf16.msra.mxu0 %v4043
    %4674 = vmatpush.bf16.msra.mxu0 %v4011
    %4675 = vmatpush.bf16.msra.mxu0 %v3979
    %4676 = vmatpush.bf16.msra.mxu0 %v3947
    %4677 = vmatpush.bf16.msra.mxu0 %v3915
    %4678 = vmatpush.bf16.msra.mxu0 %v3883
    %4679 = vmatmul.bf16.gmra.mxu0 %v2835
    %v4680 = vpop.f32.mrf.mxu0
    %v4681 = vadd.f32 0.0, %v4680
    %v4682 = vpop.f32.mrf.mxu0
    %4683 = vdwg.mxu0
    %4684 = vmatpush.bf16.msra.mxu0 %v4108
    %4685 = vmatpush.bf16.msra.mxu0 %v4076
    %4686 = vmatpush.bf16.msra.mxu0 %v4044
    %4687 = vmatpush.bf16.msra.mxu0 %v4012
    %4688 = vmatpush.bf16.msra.mxu0 %v3980
    %4689 = vmatpush.bf16.msra.mxu0 %v3948
    %4690 = vmatpush.bf16.msra.mxu0 %v3916
    %4691 = vmatpush.bf16.msra.mxu0 %v3884
    %4692 = vmatmul.bf16.gmra.mxu0 %v2835
    %v4693 = vpop.f32.mrf.mxu0
    %v4694 = vadd.f32 0.0, %v4693
    %v4695 = vpop.f32.mrf.mxu0
    %4696 = vdwg.mxu0
    %4697 = vmatpush.bf16.msra.mxu0 %v4109
    %4698 = vmatpush.bf16.msra.mxu0 %v4077
    %4699 = vmatpush.bf16.msra.mxu0 %v4045
    %4700 = vmatpush.bf16.msra.mxu0 %v4013
    %4701 = vmatpush.bf16.msra.mxu0 %v3981
    %4702 = vmatpush.bf16.msra.mxu0 %v3949
    %4703 = vmatpush.bf16.msra.mxu0 %v3917
    %4704 = vmatpush.bf16.msra.mxu0 %v3885
    %4705 = vmatmul.bf16.gmra.mxu0 %v2835
    %v4706 = vpop.f32.mrf.mxu0
    %v4707 = vadd.f32 0.0, %v4706
    %v4708 = vpop.f32.mrf.mxu0
    %4709 = vdwg.mxu0
    %4710 = vmatpush.bf16.msra.mxu0 %v4110
    %4711 = vmatpush.bf16.msra.mxu0 %v4078
    %4712 = vmatpush.bf16.msra.mxu0 %v4046
    %4713 = vmatpush.bf16.msra.mxu0 %v4014
    %4714 = vmatpush.bf16.msra.mxu0 %v3982
    %4715 = vmatpush.bf16.msra.mxu0 %v3950
    %4716 = vmatpush.bf16.msra.mxu0 %v3918
    %4717 = vmatpush.bf16.msra.mxu0 %v3886
    %4718 = vmatmul.bf16.gmra.mxu0 %v2835
    %v4719 = vpop.f32.mrf.mxu0
    %v4720 = vadd.f32 0.0, %v4719
    %v4721 = vpop.f32.mrf.mxu0
    %4722 = vdwg.mxu0
    %4723 = vmatpush.bf16.msra.mxu0 %v4111
    %4724 = vmatpush.bf16.msra.mxu0 %v4079
    %4725 = vmatpush.bf16.msra.mxu0 %v4047
    %4726 = vmatpush.bf16.msra.mxu0 %v4015
    %4727 = vmatpush.bf16.msra.mxu0 %v3983
    %4728 = vmatpush.bf16.msra.mxu0 %v3951
    %4729 = vmatpush.bf16.msra.mxu0 %v3919
    %4730 = vmatpush.bf16.msra.mxu0 %v3887
    %4731 = vmatmul.bf16.gmra.mxu0 %v2835
    %v4732 = vpop.f32.mrf.mxu0
    %v4733 = vadd.f32 0.0, %v4732
    %v4734 = vpop.f32.mrf.mxu0
    %4735 = vdwg.mxu0
    %4736 = vmatpush.bf16.msra.mxu0 %v4112
    %4737 = vmatpush.bf16.msra.mxu0 %v4080
    %4738 = vmatpush.bf16.msra.mxu0 %v4048
    %4739 = vmatpush.bf16.msra.mxu0 %v4016
    %4740 = vmatpush.bf16.msra.mxu0 %v3984
    %4741 = vmatpush.bf16.msra.mxu0 %v3952
    %4742 = vmatpush.bf16.msra.mxu0 %v3920
    %4743 = vmatpush.bf16.msra.mxu0 %v3888
    %4744 = vmatmul.bf16.gmra.mxu0 %v2835
    %v4745 = vpop.f32.mrf.mxu0
    %v4746 = vadd.f32 0.0, %v4745
    %v4747 = vpop.f32.mrf.mxu0
    %4748 = vdwg.mxu0
    %4749 = vmatpush.bf16.msra.mxu0 %v4113
    %4750 = vmatpush.bf16.msra.mxu0 %v4081
    %4751 = vmatpush.bf16.msra.mxu0 %v4049
    %4752 = vmatpush.bf16.msra.mxu0 %v4017
    %4753 = vmatpush.bf16.msra.mxu0 %v3985
    %4754 = vmatpush.bf16.msra.mxu0 %v3953
    %4755 = vmatpush.bf16.msra.mxu0 %v3921
    %4756 = vmatpush.bf16.msra.mxu0 %v3889
    %4757 = vmatmul.bf16.gmra.mxu0 %v2835
    %v4758 = vpop.f32.mrf.mxu0
    %v4759 = vadd.f32 0.0, %v4758
    %v4760 = vpop.f32.mrf.mxu0
    %4761 = vdwg.mxu0
    %4762 = vmatpush.bf16.msra.mxu0 %v4114
    %4763 = vmatpush.bf16.msra.mxu0 %v4082
    %4764 = vmatpush.bf16.msra.mxu0 %v4050
    %4765 = vmatpush.bf16.msra.mxu0 %v4018
    %4766 = vmatpush.bf16.msra.mxu0 %v3986
    %4767 = vmatpush.bf16.msra.mxu0 %v3954
    %4768 = vmatpush.bf16.msra.mxu0 %v3922
    %4769 = vmatpush.bf16.msra.mxu0 %v3890
    %4770 = vmatmul.bf16.gmra.mxu0 %v2835
    %v4771 = vpop.f32.mrf.mxu0
    %v4772 = vadd.f32 0.0, %v4771
    %v4773 = vpop.f32.mrf.mxu0
    %4774 = vdwg.mxu0
    %4775 = vmatpush.bf16.msra.mxu0 %v4115
    %4776 = vmatpush.bf16.msra.mxu0 %v4083
    %4777 = vmatpush.bf16.msra.mxu0 %v4051
    %4778 = vmatpush.bf16.msra.mxu0 %v4019
    %4779 = vmatpush.bf16.msra.mxu0 %v3987
    %4780 = vmatpush.bf16.msra.mxu0 %v3955
    %4781 = vmatpush.bf16.msra.mxu0 %v3923
    %4782 = vmatpush.bf16.msra.mxu0 %v3891
    %4783 = vmatmul.bf16.gmra.mxu0 %v2835
    %v4784 = vpop.f32.mrf.mxu0
    %v4785 = vadd.f32 0.0, %v4784
    %v4786 = vpop.f32.mrf.mxu0
    %4787 = vdwg.mxu0
    %v4788 = vrot.slane %v4408, 4
    %v4789 = vsel %vm2116, %v4788, %v4382
    %v4791 = vunpack.c.l.s4 1983009808
    %v4792 = vunpack.c.0.s8 %v4791
    %v4793 = vperm.slane %v4789, %v4792
    %v4794 = vrot.slane %v4421, 4
    %v4795 = vsel %vm2116, %v4794, %v4395
    %v4797 = vunpack.c.l.s4 1983009808
    %v4798 = vunpack.c.0.s8 %v4797
    %v4799 = vperm.slane %v4795, %v4798
    %v4800 = vrot.slane %v4460, 4
    %v4801 = vsel %vm2116, %v4800, %v4434
    %v4803 = vunpack.c.l.s4 1983009808
    %v4804 = vunpack.c.0.s8 %v4803
    %v4805 = vperm.slane %v4801, %v4804
    %v4806 = vrot.slane %v4473, 4
    %v4807 = vsel %vm2116, %v4806, %v4447
    %v4809 = vunpack.c.l.s4 1983009808
    %v4810 = vunpack.c.0.s8 %v4809
    %v4811 = vperm.slane %v4807, %v4810
    %v4812 = vrot.slane %v4799, 4
    %v4813 = vsel %vm2116, %v4812, %v4793
    %v4814 = vrot.slane %v4793, 4
    %v4815 = vsel %vm2116, %v4799, %v4814
    %v4817 = vunpack.c.l.s4 1934713408
    %v4818 = vunpack.c.0.s8 %v4817
    %v4819 = vperm.slane %v4813, %v4818
    %v4821 = vunpack.c.l.s4 1934713408
    %v4822 = vunpack.c.0.s8 %v4821
    %v4823 = vperm.slane %v4815, %v4822
    %v4824 = vrot.slane %v4811, 4
    %v4825 = vsel %vm2116, %v4824, %v4805
    %v4826 = vrot.slane %v4805, 4
    %v4827 = vsel %vm2116, %v4811, %v4826
    %v4829 = vunpack.c.l.s4 1934713408
    %v4830 = vunpack.c.0.s8 %v4829
    %v4831 = vperm.slane %v4825, %v4830
    %v4833 = vunpack.c.l.s4 1934713408
    %v4834 = vunpack.c.0.s8 %v4833
    %v4835 = vperm.slane %v4827, %v4834
    %v4836 = vrot.slane %v4831, 4
    %v4837 = vsel %vm2116, %v4836, %v4819
    %v4838 = vrot.slane %v4819, 4
    %v4839 = vsel %vm2116, %v4831, %v4838
    %v4840 = vrot.slane %v4835, 4
    %v4841 = vsel %vm2116, %v4840, %v4823
    %v4842 = vrot.slane %v4823, 4
    %v4843 = vsel %vm2116, %v4835, %v4842
    %v4844 = vrot.slane %v4512, 4
    %v4845 = vsel %vm2116, %v4844, %v4486
    %v4847 = vunpack.c.l.s4 1983009808
    %v4848 = vunpack.c.0.s8 %v4847
    %v4849 = vperm.slane %v4845, %v4848
    %v4850 = vrot.slane %v4525, 4
    %v4851 = vsel %vm2116, %v4850, %v4499
    %v4853 = vunpack.c.l.s4 1983009808
    %v4854 = vunpack.c.0.s8 %v4853
    %v4855 = vperm.slane %v4851, %v4854
    %v4856 = vrot.slane %v4564, 4
    %v4857 = vsel %vm2116, %v4856, %v4538
    %v4859 = vunpack.c.l.s4 1983009808
    %v4860 = vunpack.c.0.s8 %v4859
    %v4861 = vperm.slane %v4857, %v4860
    %v4862 = vrot.slane %v4577, 4
    %v4863 = vsel %vm2116, %v4862, %v4551
    %v4865 = vunpack.c.l.s4 1983009808
    %v4866 = vunpack.c.0.s8 %v4865
    %v4867 = vperm.slane %v4863, %v4866
    %v4868 = vrot.slane %v4855, 4
    %v4869 = vsel %vm2116, %v4868, %v4849
    %v4870 = vrot.slane %v4849, 4
    %v4871 = vsel %vm2116, %v4855, %v4870
    %v4873 = vunpack.c.l.s4 1934713408
    %v4874 = vunpack.c.0.s8 %v4873
    %v4875 = vperm.slane %v4869, %v4874
    %v4877 = vunpack.c.l.s4 1934713408
    %v4878 = vunpack.c.0.s8 %v4877
    %v4879 = vperm.slane %v4871, %v4878
    %v4880 = vrot.slane %v4867, 4
    %v4881 = vsel %vm2116, %v4880, %v4861
    %v4882 = vrot.slane %v4861, 4
    %v4883 = vsel %vm2116, %v4867, %v4882
    %v4885 = vunpack.c.l.s4 1934713408
    %v4886 = vunpack.c.0.s8 %v4885
    %v4887 = vperm.slane %v4881, %v4886
    %v4889 = vunpack.c.l.s4 1934713408
    %v4890 = vunpack.c.0.s8 %v4889
    %v4891 = vperm.slane %v4883, %v4890
    %v4892 = vrot.slane %v4887, 4
    %v4893 = vsel %vm2116, %v4892, %v4875
    %v4894 = vrot.slane %v4875, 4
    %v4895 = vsel %vm2116, %v4887, %v4894
    %v4896 = vrot.slane %v4891, 4
    %v4897 = vsel %vm2116, %v4896, %v4879
    %v4898 = vrot.slane %v4879, 4
    %v4899 = vsel %vm2116, %v4891, %v4898
    %v4900 = vrot.slane %v4616, 4
    %v4901 = vsel %vm2116, %v4900, %v4590
    %v4903 = vunpack.c.l.s4 1983009808
    %v4904 = vunpack.c.0.s8 %v4903
    %v4905 = vperm.slane %v4901, %v4904
    %v4906 = vrot.slane %v4629, 4
    %v4907 = vsel %vm2116, %v4906, %v4603
    %v4909 = vunpack.c.l.s4 1983009808
    %v4910 = vunpack.c.0.s8 %v4909
    %v4911 = vperm.slane %v4907, %v4910
    %v4912 = vrot.slane %v4668, 4
    %v4913 = vsel %vm2116, %v4912, %v4642
    %v4915 = vunpack.c.l.s4 1983009808
    %v4916 = vunpack.c.0.s8 %v4915
    %v4917 = vperm.slane %v4913, %v4916
    %v4918 = vrot.slane %v4681, 4
    %v4919 = vsel %vm2116, %v4918, %v4655
    %v4921 = vunpack.c.l.s4 1983009808
    %v4922 = vunpack.c.0.s8 %v4921
    %v4923 = vperm.slane %v4919, %v4922
    %v4924 = vrot.slane %v4911, 4
    %v4925 = vsel %vm2116, %v4924, %v4905
    %v4926 = vrot.slane %v4905, 4
    %v4927 = vsel %vm2116, %v4911, %v4926
    %v4929 = vunpack.c.l.s4 1934713408
    %v4930 = vunpack.c.0.s8 %v4929
    %v4931 = vperm.slane %v4925, %v4930
    %v4933 = vunpack.c.l.s4 1934713408
    %v4934 = vunpack.c.0.s8 %v4933
    %v4935 = vperm.slane %v4927, %v4934
    %v4936 = vrot.slane %v4923, 4
    %v4937 = vsel %vm2116, %v4936, %v4917
    %v4938 = vrot.slane %v4917, 4
    %v4939 = vsel %vm2116, %v4923, %v4938
    %v4941 = vunpack.c.l.s4 1934713408
    %v4942 = vunpack.c.0.s8 %v4941
    %v4943 = vperm.slane %v4937, %v4942
    %v4945 = vunpack.c.l.s4 1934713408
    %v4946 = vunpack.c.0.s8 %v4945
    %v4947 = vperm.slane %v4939, %v4946
    %v4948 = vrot.slane %v4943, 4
    %v4949 = vsel %vm2116, %v4948, %v4931
    %v4950 = vrot.slane %v4931, 4
    %v4951 = vsel %vm2116, %v4943, %v4950
    %v4952 = vrot.slane %v4947, 4
    %v4953 = vsel %vm2116, %v4952, %v4935
    %v4954 = vrot.slane %v4935, 4
    %v4955 = vsel %vm2116, %v4947, %v4954
    %v4956 = vrot.slane %v4720, 4
    %v4957 = vsel %vm2116, %v4956, %v4694
    %v4959 = vunpack.c.l.s4 1983009808
    %v4960 = vunpack.c.0.s8 %v4959
    %v4961 = vperm.slane %v4957, %v4960
    %v4962 = vrot.slane %v4733, 4
    %v4963 = vsel %vm2116, %v4962, %v4707
    %v4965 = vunpack.c.l.s4 1983009808
    %v4966 = vunpack.c.0.s8 %v4965
    %v4967 = vperm.slane %v4963, %v4966
    %v4968 = vrot.slane %v4772, 4
    %v4969 = vsel %vm2116, %v4968, %v4746
    %v4971 = vunpack.c.l.s4 1983009808
    %v4972 = vunpack.c.0.s8 %v4971
    %v4973 = vperm.slane %v4969, %v4972
    %v4974 = vrot.slane %v4785, 4
    %v4975 = vsel %vm2116, %v4974, %v4759
    %v4977 = vunpack.c.l.s4 1983009808
    %v4978 = vunpack.c.0.s8 %v4977
    %v4979 = vperm.slane %v4975, %v4978
    %v4980 = vrot.slane %v4967, 4
    %v4981 = vsel %vm2116, %v4980, %v4961
    %v4982 = vrot.slane %v4961, 4
    %v4983 = vsel %vm2116, %v4967, %v4982
    %v4985 = vunpack.c.l.s4 1934713408
    %v4986 = vunpack.c.0.s8 %v4985
    %v4987 = vperm.slane %v4981, %v4986
    %v4989 = vunpack.c.l.s4 1934713408
    %v4990 = vunpack.c.0.s8 %v4989
    %v4991 = vperm.slane %v4983, %v4990
    %v4992 = vrot.slane %v4979, 4
    %v4993 = vsel %vm2116, %v4992, %v4973
    %v4994 = vrot.slane %v4973, 4
    %v4995 = vsel %vm2116, %v4979, %v4994
    %v4997 = vunpack.c.l.s4 1934713408
    %v4998 = vunpack.c.0.s8 %v4997
    %v4999 = vperm.slane %v4993, %v4998
    %v5001 = vunpack.c.l.s4 1934713408
    %v5002 = vunpack.c.0.s8 %v5001
    %v5003 = vperm.slane %v4995, %v5002
    %v5004 = vrot.slane %v4999, 4
    %v5005 = vsel %vm2116, %v5004, %v4987
    %v5006 = vrot.slane %v4987, 4
    %v5007 = vsel %vm2116, %v4999, %v5006
    %v5008 = vrot.slane %v5003, 4
    %v5009 = vsel %vm2116, %v5008, %v4991
    %v5010 = vrot.slane %v4991, 4
    %v5011 = vsel %vm2116, %v5003, %v5010
    %v5013 = vrot.slane %v116, 1
    %v5014 = vrot.slane %v116, 2
    %v5015 = vrot.slane %v116, 3
    %v5016 = vperm.slane %v116, 0
    %v5017 = vperm.slane %v5013, 0
    %v5018 = vperm.slane %v5014, 0
    %v5019 = vperm.slane %v5015, 0
    %v5024 = vmul.f32 %v4837, %v5016
    %v5025 = vmul.f32 %v4893, %v5016
    %v5026 = vmul.f32 %v4949, %v5016
    %v5027 = vmul.f32 %v5005, %v5016
    %v5028 = vmul.f32 %v4839, %v5017
    %v5029 = vmul.f32 %v4895, %v5017
    %v5030 = vmul.f32 %v4951, %v5017
    %v5031 = vmul.f32 %v5007, %v5017
    %v5032 = vmul.f32 %v4841, %v5018
    %v5033 = vmul.f32 %v4897, %v5018
    %v5034 = vmul.f32 %v4953, %v5018
    %v5035 = vmul.f32 %v5009, %v5018
    %v5036 = vmul.f32 %v4843, %v5019
    %v5037 = vmul.f32 %v4899, %v5019
    %v5038 = vmul.f32 %v4955, %v5019
    %v5039 = vmul.f32 %v5011, %v5019
    %5040 = vadd.xlane.f32.xlu0 %v5024
    %v5041 = vpop.xlane.xlu0 %5040
    %5042 = vadd.xlane.f32.xlu0 %v5025
    %v5043 = vpop.xlane.xlu0 %5042
    %5044 = vadd.xlane.f32.xlu0 %v5026
    %v5045 = vpop.xlane.xlu0 %5044
    %5046 = vadd.xlane.f32.xlu0 %v5027
    %v5047 = vpop.xlane.xlu0 %5046
    %5048 = vadd.xlane.f32.xlu0 %v5028
    %v5049 = vpop.xlane.xlu0 %5048
    %5050 = vadd.xlane.f32.xlu0 %v5029
    %v5051 = vpop.xlane.xlu0 %5050
    %5052 = vadd.xlane.f32.xlu0 %v5030
    %v5053 = vpop.xlane.xlu0 %5052
    %5054 = vadd.xlane.f32.xlu0 %v5031
    %v5055 = vpop.xlane.xlu0 %5054
    %5056 = vadd.xlane.f32.xlu0 %v5032
    %v5057 = vpop.xlane.xlu0 %5056
    %5058 = vadd.xlane.f32.xlu0 %v5033
    %v5059 = vpop.xlane.xlu0 %5058
    %5060 = vadd.xlane.f32.xlu0 %v5034
    %v5061 = vpop.xlane.xlu0 %5060
    %5062 = vadd.xlane.f32.xlu0 %v5035
    %v5063 = vpop.xlane.xlu0 %5062
    %5064 = vadd.xlane.f32.xlu0 %v5036
    %v5065 = vpop.xlane.xlu0 %5064
    %5066 = vadd.xlane.f32.xlu0 %v5037
    %v5067 = vpop.xlane.xlu0 %5066
    %5068 = vadd.xlane.f32.xlu0 %v5038
    %v5069 = vpop.xlane.xlu0 %5068
    %5070 = vadd.xlane.f32.xlu0 %v5039
    %v5071 = vpop.xlane.xlu0 %5070
    %v5072 = vperm.slane %v2807, 0
    %v5074 = vlaneseq
    %v5075 = vshrl.u32 %v5074, 7
    %5077 = vset.pattern.permute.xlu0 %v5075
    %5078 = vperm.xlu0 %5077, %v5072
    %v5079 = vpop.permute.xlu0 %5078
    %v5080 = vlaneseq
    %v5081 = vshrl.u32 %v5080, 7
    %v5082 = vadd.s32 %v5081, 8
    %5083 = vset.pattern.permute.xlu0 %v5082
    %5084 = vperm.xlu0 %5083, %v5072
    %v5085 = vpop.permute.xlu0 %5084
    %v5086 = vlaneseq
    %v5087 = vshrl.u32 %v5086, 7
    %v5088 = vadd.s32 %v5087, 16
    %5089 = vset.pattern.permute.xlu0 %v5088
    %5090 = vperm.xlu0 %5089, %v5072
    %v5091 = vpop.permute.xlu0 %5090
    %v5092 = vlaneseq
    %v5093 = vshrl.u32 %v5092, 7
    %v5094 = vadd.s32 %v5093, 24
    %5095 = vset.pattern.permute.xlu0 %v5094
    %5096 = vperm.xlu0 %5095, %v5072
    %v5097 = vpop.permute.xlu0 %5096
    %v5102 = vadd.f32 %v5041, %v5079
    %v5103 = vadd.f32 %v5043, %v5085
    %v5104 = vadd.f32 %v5045, %v5091
    %v5105 = vadd.f32 %v5047, %v5097
    %v5106 = vadd.f32 %v5049, %v5079
    %v5107 = vadd.f32 %v5051, %v5085
    %v5108 = vadd.f32 %v5053, %v5091
    %v5109 = vadd.f32 %v5055, %v5097
    %v5110 = vadd.f32 %v5057, %v5079
    %v5111 = vadd.f32 %v5059, %v5085
    %v5112 = vadd.f32 %v5061, %v5091
    %v5113 = vadd.f32 %v5063, %v5097
    %v5114 = vadd.f32 %v5065, %v5079
    %v5115 = vadd.f32 %v5067, %v5085
    %v5116 = vadd.f32 %v5069, %v5091
    %v5117 = vadd.f32 %v5071, %v5097
    %v5118 = vsub.f32 0.0, %v5102
    %v5119 = vsub.f32 0.0, %v5103
    %v5120 = vsub.f32 0.0, %v5104
    %v5121 = vsub.f32 0.0, %v5105
    %v5122 = vsub.f32 0.0, %v5106
    %v5123 = vsub.f32 0.0, %v5107
    %v5124 = vsub.f32 0.0, %v5108
    %v5125 = vsub.f32 0.0, %v5109
    %v5126 = vsub.f32 0.0, %v5110
    %v5127 = vsub.f32 0.0, %v5111
    %v5128 = vsub.f32 0.0, %v5112
    %v5129 = vsub.f32 0.0, %v5113
    %v5130 = vsub.f32 0.0, %v5114
    %v5131 = vsub.f32 0.0, %v5115
    %v5132 = vsub.f32 0.0, %v5116
    %v5133 = vsub.f32 0.0, %v5117
    %v5134 = vmul.f32 %v5118, 1.442695
    %v5135 = vpow.pop %v5134
    %v5136 = vmul.f32 %v5119, 1.442695
    %v5137 = vpow.pop %v5136
    %v5138 = vmul.f32 %v5120, 1.442695
    %v5139 = vpow.pop %v5138
    %v5140 = vmul.f32 %v5121, 1.442695
    %v5141 = vpow.pop %v5140
    %v5142 = vmul.f32 %v5122, 1.442695
    %v5143 = vpow.pop %v5142
    %v5144 = vmul.f32 %v5123, 1.442695
    %v5145 = vpow.pop %v5144
    %v5146 = vmul.f32 %v5124, 1.442695
    %v5147 = vpow.pop %v5146
    %v5148 = vmul.f32 %v5125, 1.442695
    %v5149 = vpow.pop %v5148
    %v5150 = vmul.f32 %v5126, 1.442695
    %v5151 = vpow.pop %v5150
    %v5152 = vmul.f32 %v5127, 1.442695
    %v5153 = vpow.pop %v5152
    %v5154 = vmul.f32 %v5128, 1.442695
    %v5155 = vpow.pop %v5154
    %v5156 = vmul.f32 %v5129, 1.442695
    %v5157 = vpow.pop %v5156
    %v5158 = vmul.f32 %v5130, 1.442695
    %v5159 = vpow.pop %v5158
    %v5160 = vmul.f32 %v5131, 1.442695
    %v5161 = vpow.pop %v5160
    %v5162 = vmul.f32 %v5132, 1.442695
    %v5163 = vpow.pop %v5162
    %v5164 = vmul.f32 %v5133, 1.442695
    %v5165 = vpow.pop %v5164
    %v5166 = vadd.f32 %v5135, 1.0
    %v5167 = vadd.f32 %v5137, 1.0
    %v5168 = vadd.f32 %v5139, 1.0
    %v5169 = vadd.f32 %v5141, 1.0
    %v5170 = vadd.f32 %v5143, 1.0
    %v5171 = vadd.f32 %v5145, 1.0
    %v5172 = vadd.f32 %v5147, 1.0
    %v5173 = vadd.f32 %v5149, 1.0
    %v5174 = vadd.f32 %v5151, 1.0
    %v5175 = vadd.f32 %v5153, 1.0
    %v5176 = vadd.f32 %v5155, 1.0
    %v5177 = vadd.f32 %v5157, 1.0
    %v5178 = vadd.f32 %v5159, 1.0
    %v5179 = vadd.f32 %v5161, 1.0
    %v5180 = vadd.f32 %v5163, 1.0
    %v5181 = vadd.f32 %v5165, 1.0
    %v5182 = vrcp.pop %v5166
    %v5183 = vrcp.pop %v5167
    %v5184 = vrcp.pop %v5168
    %v5185 = vrcp.pop %v5169
    %v5186 = vrcp.pop %v5170
    %v5187 = vrcp.pop %v5171
    %v5188 = vrcp.pop %v5172
    %v5189 = vrcp.pop %v5173
    %v5190 = vrcp.pop %v5174
    %v5191 = vrcp.pop %v5175
    %v5192 = vrcp.pop %v5176
    %v5193 = vrcp.pop %v5177
    %v5194 = vrcp.pop %v5178
    %v5195 = vrcp.pop %v5179
    %v5196 = vrcp.pop %v5180
    %v5197 = vrcp.pop %v5181
    %v5199 = vperm.slane %v2834, 0
    %v5200 = vlaneseq
    %v5201 = vshrl.u32 %v5200, 7
    %5203 = vset.pattern.permute.xlu0 %v5201
    %5204 = vperm.xlu0 %5203, %v5199
    %v5205 = vpop.permute.xlu0 %5204
    %v5206 = vlaneseq
    %v5207 = vshrl.u32 %v5206, 7
    %v5208 = vadd.s32 %v5207, 8
    %5209 = vset.pattern.permute.xlu0 %v5208
    %5210 = vperm.xlu0 %5209, %v5199
    %v5211 = vpop.permute.xlu0 %5210
    %v5212 = vlaneseq
    %v5213 = vshrl.u32 %v5212, 7
    %v5214 = vadd.s32 %v5213, 16
    %5215 = vset.pattern.permute.xlu0 %v5214
    %5216 = vperm.xlu0 %5215, %v5199
    %v5217 = vpop.permute.xlu0 %5216
    %v5218 = vlaneseq
    %v5219 = vshrl.u32 %v5218, 7
    %v5220 = vadd.s32 %v5219, 24
    %5221 = vset.pattern.permute.xlu0 %v5220
    %5222 = vperm.xlu0 %5221, %v5199
    %v5223 = vpop.permute.xlu0 %5222
    %v5224 = vperm.slane %v2834, 1
    %v5225 = vlaneseq
    %v5226 = vshrl.u32 %v5225, 7
    %5228 = vset.pattern.permute.xlu0 %v5226
    %5229 = vperm.xlu0 %5228, %v5224
    %v5230 = vpop.permute.xlu0 %5229
    %v5231 = vlaneseq
    %v5232 = vshrl.u32 %v5231, 7
    %v5233 = vadd.s32 %v5232, 8
    %5234 = vset.pattern.permute.xlu0 %v5233
    %5235 = vperm.xlu0 %5234, %v5224
    %v5236 = vpop.permute.xlu0 %5235
    %v5237 = vlaneseq
    %v5238 = vshrl.u32 %v5237, 7
    %v5239 = vadd.s32 %v5238, 16
    %5240 = vset.pattern.permute.xlu0 %v5239
    %5241 = vperm.xlu0 %5240, %v5224
    %v5242 = vpop.permute.xlu0 %5241
    %v5243 = vlaneseq
    %v5244 = vshrl.u32 %v5243, 7
    %v5245 = vadd.s32 %v5244, 24
    %5246 = vset.pattern.permute.xlu0 %v5245
    %5247 = vperm.xlu0 %5246, %v5224
    %v5248 = vpop.permute.xlu0 %5247
    %v5249 = vperm.slane %v2834, 2
    %v5250 = vlaneseq
    %v5251 = vshrl.u32 %v5250, 7
    %5253 = vset.pattern.permute.xlu0 %v5251
    %5254 = vperm.xlu0 %5253, %v5249
    %v5255 = vpop.permute.xlu0 %5254
    %v5256 = vlaneseq
    %v5257 = vshrl.u32 %v5256, 7
    %v5258 = vadd.s32 %v5257, 8
    %5259 = vset.pattern.permute.xlu0 %v5258
    %5260 = vperm.xlu0 %5259, %v5249
    %v5261 = vpop.permute.xlu0 %5260
    %v5262 = vlaneseq
    %v5263 = vshrl.u32 %v5262, 7
    %v5264 = vadd.s32 %v5263, 16
    %5265 = vset.pattern.permute.xlu0 %v5264
    %5266 = vperm.xlu0 %5265, %v5249
    %v5267 = vpop.permute.xlu0 %5266
    %v5268 = vlaneseq
    %v5269 = vshrl.u32 %v5268, 7
    %v5270 = vadd.s32 %v5269, 24
    %5271 = vset.pattern.permute.xlu0 %v5270
    %5272 = vperm.xlu0 %5271, %v5249
    %v5273 = vpop.permute.xlu0 %5272
    %v5274 = vperm.slane %v2834, 3
    %v5275 = vlaneseq
    %v5276 = vshrl.u32 %v5275, 7
    %5278 = vset.pattern.permute.xlu0 %v5276
    %5279 = vperm.xlu0 %5278, %v5274
    %v5280 = vpop.permute.xlu0 %5279
    %v5281 = vlaneseq
    %v5282 = vshrl.u32 %v5281, 7
    %v5283 = vadd.s32 %v5282, 8
    %5284 = vset.pattern.permute.xlu0 %v5283
    %5285 = vperm.xlu0 %5284, %v5274
    %v5286 = vpop.permute.xlu0 %5285
    %v5287 = vlaneseq
    %v5288 = vshrl.u32 %v5287, 7
    %v5289 = vadd.s32 %v5288, 16
    %5290 = vset.pattern.permute.xlu0 %v5289
    %5291 = vperm.xlu0 %5290, %v5274
    %v5292 = vpop.permute.xlu0 %5291
    %v5293 = vlaneseq
    %v5294 = vshrl.u32 %v5293, 7
    %v5295 = vadd.s32 %v5294, 24
    %5296 = vset.pattern.permute.xlu0 %v5295
    %5297 = vperm.xlu0 %5296, %v5274
    %v5298 = vpop.permute.xlu0 %5297
    %v5315 = vmul.f32 %v5182, %v5205
    %v5316 = vmul.f32 %v5183, %v5211
    %v5317 = vmul.f32 %v5184, %v5217
    %v5318 = vmul.f32 %v5185, %v5223
    %v5319 = vmul.f32 %v5186, %v5230
    %v5320 = vmul.f32 %v5187, %v5236
    %v5321 = vmul.f32 %v5188, %v5242
    %v5322 = vmul.f32 %v5189, %v5248
    %v5323 = vmul.f32 %v5190, %v5255
    %v5324 = vmul.f32 %v5191, %v5261
    %v5325 = vmul.f32 %v5192, %v5267
    %v5326 = vmul.f32 %v5193, %v5273
    %v5327 = vmul.f32 %v5194, %v5280
    %v5328 = vmul.f32 %v5195, %v5286
    %v5329 = vmul.f32 %v5196, %v5292
    %v5330 = vmul.f32 %v5197, %v5298
    %v5331 = vperm.slane %v2812, 0
    %5348 = vset.pattern.permute.xlu0 0
    %5349 = vperm.xlu0 %5348, %v5315
    %v5350 = vpop.permute.xlu0 %5349
    %5351 = vset.pattern.permute.xlu0 0
    %5352 = vperm.xlu0 %5351, %v5316
    %v5353 = vpop.permute.xlu0 %5352
    %5354 = vset.pattern.permute.xlu0 0
    %5355 = vperm.xlu0 %5354, %v5317
    %v5356 = vpop.permute.xlu0 %5355
    %5357 = vset.pattern.permute.xlu0 0
    %5358 = vperm.xlu0 %5357, %v5318
    %v5359 = vpop.permute.xlu0 %5358
    %5360 = vset.pattern.permute.xlu0 0
    %5361 = vperm.xlu0 %5360, %v5319
    %v5362 = vpop.permute.xlu0 %5361
    %5363 = vset.pattern.permute.xlu0 0
    %5364 = vperm.xlu0 %5363, %v5320
    %v5365 = vpop.permute.xlu0 %5364
    %5366 = vset.pattern.permute.xlu0 0
    %5367 = vperm.xlu0 %5366, %v5321
    %v5368 = vpop.permute.xlu0 %5367
    %5369 = vset.pattern.permute.xlu0 0
    %5370 = vperm.xlu0 %5369, %v5322
    %v5371 = vpop.permute.xlu0 %5370
    %5372 = vset.pattern.permute.xlu0 0
    %5373 = vperm.xlu0 %5372, %v5323
    %v5374 = vpop.permute.xlu0 %5373
    %5375 = vset.pattern.permute.xlu0 0
    %5376 = vperm.xlu0 %5375, %v5324
    %v5377 = vpop.permute.xlu0 %5376
    %5378 = vset.pattern.permute.xlu0 0
    %5379 = vperm.xlu0 %5378, %v5325
    %v5380 = vpop.permute.xlu0 %5379
    %5381 = vset.pattern.permute.xlu0 0
    %5382 = vperm.xlu0 %5381, %v5326
    %v5383 = vpop.permute.xlu0 %5382
    %5384 = vset.pattern.permute.xlu0 0
    %5385 = vperm.xlu0 %5384, %v5327
    %v5386 = vpop.permute.xlu0 %5385
    %5387 = vset.pattern.permute.xlu0 0
    %5388 = vperm.xlu0 %5387, %v5328
    %v5389 = vpop.permute.xlu0 %5388
    %5390 = vset.pattern.permute.xlu0 0
    %5391 = vperm.xlu0 %5390, %v5329
    %v5392 = vpop.permute.xlu0 %5391
    %5393 = vset.pattern.permute.xlu0 0
    %5394 = vperm.xlu0 %5393, %v5330
    %v5395 = vpop.permute.xlu0 %5394
    %v5396 = vperm.slane %v5350, %v2725
    %v5397 = vperm.slane %v5353, %v2727
    %v5398 = vsel %vm2729, %v5397, %v5396
    %v5399 = vperm.slane %v5356, %v2731
    %v5400 = vsel %vm2733, %v5399, %v5398
    %v5401 = vperm.slane %v5359, %v2735
    %v5402 = vsel %vm2737, %v5401, %v5400
    %v5403 = vperm.slane %v5362, %v2725
    %v5404 = vperm.slane %v5365, %v2727
    %v5405 = vsel %vm2729, %v5404, %v5403
    %v5406 = vperm.slane %v5368, %v2731
    %v5407 = vsel %vm2733, %v5406, %v5405
    %v5408 = vperm.slane %v5371, %v2735
    %v5409 = vsel %vm2737, %v5408, %v5407
    %v5410 = vperm.slane %v5374, %v2725
    %v5411 = vperm.slane %v5377, %v2727
    %v5412 = vsel %vm2729, %v5411, %v5410
    %v5413 = vperm.slane %v5380, %v2731
    %v5414 = vsel %vm2733, %v5413, %v5412
    %v5415 = vperm.slane %v5383, %v2735
    %v5416 = vsel %vm2737, %v5415, %v5414
    %v5417 = vperm.slane %v5386, %v2725
    %v5418 = vperm.slane %v5389, %v2727
    %v5419 = vsel %vm2729, %v5418, %v5417
    %v5420 = vperm.slane %v5392, %v2731
    %v5421 = vsel %vm2733, %v5420, %v5419
    %v5422 = vperm.slane %v5395, %v2735
    %v5423 = vsel %vm2737, %v5422, %v5421
    %v5424 = vsel %vm2760, %v5409, %v5402
    %v5425 = vsel %vm2762, %v5416, %v5424
    %v5426 = vsel %vm2764, %v5423, %v5425
    %v5427 = vsel %vm2766, %v5426, 0
    %5429 = vmatpush.msra.mxu0 0.0
    %5430 = vmatpush.msra.mxu0 0.0
    %5431 = vmatpush.msra.mxu0 0.0
    %5432 = vmatpush.msra.mxu0 0.0
    %5433 = vmatpush.msra.mxu0 0.0
    %5434 = vmatpush.msra.mxu0 0.0
    %5435 = vmatpush.msra.mxu0 0.0
    %5436 = vmatpush.msra.mxu0 0.0
    %5437 = vmatpush.msra.mxu0 0.0
    %5438 = vmatpush.msra.mxu0 0.0
    %5439 = vmatpush.msra.mxu0 0.0
    %5440 = vmatpush.msra.mxu0 0.0
    %5441 = vmatpush.msra.mxu0 %v2811
    %5442 = vmatpush.msra.mxu0 %v2810
    %5443 = vmatpush.msra.mxu0 %v2809
    %5444 = vmatpush.msra.mxu0 %v2808
    %5445 = vmatmul.f32.gmra.mxu0 %v5427
    %v5446 = vpop.f32.mrf.mxu0
    %v5447 = vadd.f32 %v5331, %v5446
    %5448 = vdwg.mxu0
    %v5449 = vmax.f32 %v5447, 0.0
    %v5450 = vpack.c.bf16 %v5449, %v5449
    %v5451 = vld [vmem:[#allocation10] sm:$0xff]
    %v5452 = vld [vmem:[#allocation10 + $0x8] sm:$0xff]
    %v5453 = vld [vmem:[#allocation10 + $0x10] sm:$0xff]
    %v5454 = vld [vmem:[#allocation10 + $0x18] sm:$0xff]
    %v5455 = vld [vmem:[#allocation10 + $0x20] sm:$0xff]
    %v5456 = vld [vmem:[#allocation10 + $0x28] sm:$0xff]
    %v5457 = vld [vmem:[#allocation10 + $0x30] sm:$0xff]
    %v5458 = vld [vmem:[#allocation10 + $0x38] sm:$0xff]
    %v5459 = vld [vmem:[#allocation10 + $0x40] sm:$0xff]
    %v5460 = vld [vmem:[#allocation10 + $0x48] sm:$0xff]
    %v5461 = vld [vmem:[#allocation10 + $0x50] sm:$0xff]
    %v5462 = vld [vmem:[#allocation10 + $0x58] sm:$0xff]
    %v5463 = vld [vmem:[#allocation10 + $0x60] sm:$0xff]
    %v5464 = vld [vmem:[#allocation10 + $0x68] sm:$0xff]
    %v5465 = vld [vmem:[#allocation10 + $0x70] sm:$0xff]
    %v5466 = vld [vmem:[#allocation10 + $0x78] sm:$0xff]
    %v5467 = vld [vmem:[#allocation10 + $0x80] sm:$0xf]
    %v5468 = vld [vmem:[#allocation10 + $0x84] sm:$0xff]
    %v5469 = vld [vmem:[#allocation10 + $0x8c] sm:$0xff]
    %v5470 = vld [vmem:[#allocation10 + $0x94] sm:$0xff]
    %v5471 = vld [vmem:[#allocation10 + $0x9c] sm:$0xff]
    %v5472 = vld [vmem:[#allocation10 + $0xa4] sm:$0xff]
    %v5473 = vld [vmem:[#allocation10 + $0xac] sm:$0xff]
    %v5474 = vld [vmem:[#allocation10 + $0xb4] sm:$0xff]
    %v5475 = vld [vmem:[#allocation10 + $0xbc] sm:$0xff]
    %v5476 = vld [vmem:[#allocation10 + $0xc4] sm:$0xff]
    %v5477 = vld [vmem:[#allocation10 + $0xcc] sm:$0xff]
    %v5478 = vld [vmem:[#allocation10 + $0xd4] sm:$0xff]
    %v5479 = vld [vmem:[#allocation10 + $0xdc] sm:$0xff]
    %v5480 = vld [vmem:[#allocation10 + $0xe4] sm:$0xff]
    %v5481 = vld [vmem:[#allocation10 + $0xec] sm:$0xff]
    %v5482 = vld [vmem:[#allocation10 + $0xf4] sm:$0xff]
    %v5483 = vld [vmem:[#allocation10 + $0xfc] sm:$0xff]
    %v5484 = vld [vmem:[#allocation10 + $0x104] sm:$0xf]
    %v5485 = vld [vmem:[#allocation10 + $0x108] sm:$0xff]
    %v5486 = vld [vmem:[#allocation10 + $0x110] sm:$0xff]
    %v5487 = vld [vmem:[#allocation10 + $0x118] sm:$0xff]
    %v5488 = vld [vmem:[#allocation10 + $0x120] sm:$0xff]
    %v5489 = vld [vmem:[#allocation10 + $0x128] sm:$0xff]
    %v5490 = vld [vmem:[#allocation10 + $0x130] sm:$0xff]
    %v5491 = vld [vmem:[#allocation10 + $0x138] sm:$0xff]
    %v5492 = vld [vmem:[#allocation10 + $0x140] sm:$0xff]
    %v5493 = vld [vmem:[#allocation10 + $0x148] sm:$0xff]
    %v5494 = vld [vmem:[#allocation10 + $0x150] sm:$0xff]
    %v5495 = vld [vmem:[#allocation10 + $0x158] sm:$0xff]
    %v5496 = vld [vmem:[#allocation10 + $0x160] sm:$0xff]
    %v5497 = vld [vmem:[#allocation10 + $0x168] sm:$0xff]
    %v5498 = vld [vmem:[#allocation10 + $0x170] sm:$0xff]
    %v5499 = vld [vmem:[#allocation10 + $0x178] sm:$0xff]
    %v5500 = vld [vmem:[#allocation10 + $0x180] sm:$0xff]
    %v5501 = vld [vmem:[#allocation10 + $0x188] sm:$0xf]
    %v5502 = vld [vmem:[#allocation10 + $0x18c] sm:$0xff]
    %v5503 = vld [vmem:[#allocation10 + $0x194] sm:$0xff]
    %v5504 = vld [vmem:[#allocation10 + $0x19c] sm:$0xff]
    %v5505 = vld [vmem:[#allocation10 + $0x1a4] sm:$0xff]
    %v5506 = vld [vmem:[#allocation10 + $0x1ac] sm:$0xff]
    %v5507 = vld [vmem:[#allocation10 + $0x1b4] sm:$0xff]
    %v5508 = vld [vmem:[#allocation10 + $0x1bc] sm:$0xff]
    %v5509 = vld [vmem:[#allocation10 + $0x1c4] sm:$0xff]
    %v5510 = vld [vmem:[#allocation10 + $0x1cc] sm:$0xff]
    %v5511 = vld [vmem:[#allocation10 + $0x1d4] sm:$0xff]
    %v5512 = vld [vmem:[#allocation10 + $0x1dc] sm:$0xff]
    %v5513 = vld [vmem:[#allocation10 + $0x1e4] sm:$0xff]
    %v5514 = vld [vmem:[#allocation10 + $0x1ec] sm:$0xff]
    %v5515 = vld [vmem:[#allocation10 + $0x1f4] sm:$0xff]
    %v5516 = vld [vmem:[#allocation10 + $0x1fc] sm:$0xff]
    %v5517 = vld [vmem:[#allocation10 + $0x204] sm:$0xff]
    %v5518 = vld [vmem:[#allocation10 + $0x20c] sm:$0xf]
    %v5519 = vld [vmem:[#allocation10 + $0x210] sm:$0x11]
    %v5520 = vld [vmem:[#allocation10 + $0x218] sm:$0x11]
    %v5521 = vld [vmem:[#allocation10 + $0x220] sm:$0x11]
    %v5522 = vld [vmem:[#allocation10 + $0x228] sm:$0x11]
    %v5523 = vld [vmem:[#allocation10 + $0x230] sm:$0x11]
    %v5524 = vld [vmem:[#allocation10 + $0x238] sm:$0x11]
    %v5525 = vld [vmem:[#allocation10 + $0x240] sm:$0x11]
    %v5526 = vld [vmem:[#allocation10 + $0x248] sm:$0x11]
    %v5527 = vld [vmem:[#allocation10 + $0x250] sm:$0x11]
    %v5528 = vld [vmem:[#allocation10 + $0x258] sm:$0x11]
    %v5529 = vld [vmem:[#allocation10 + $0x260] sm:$0x11]
    %v5530 = vld [vmem:[#allocation10 + $0x268] sm:$0x11]
    %v5531 = vld [vmem:[#allocation10 + $0x270] sm:$0x11]
    %v5532 = vld [vmem:[#allocation10 + $0x278] sm:$0x11]
    %v5533 = vld [vmem:[#allocation10 + $0x280] sm:$0x11]
    %v5534 = vld [vmem:[#allocation10 + $0x288] sm:$0x11]
    %v5535 = vld [vmem:[#allocation10 + $0x290] sm:$0x1]
    %v5621 = vunpack.c.l.b16 %v5451
    %v5622 = vunpack.c.h.b16 %v5451
    %v5623 = vunpack.c.l.b16 %v5452
    %v5624 = vunpack.c.h.b16 %v5452
    %v5625 = vunpack.c.l.b16 %v5453
    %v5626 = vunpack.c.h.b16 %v5453
    %v5627 = vunpack.c.l.b16 %v5454
    %v5628 = vunpack.c.h.b16 %v5454
    %v5629 = vunpack.c.l.b16 %v5455
    %v5630 = vunpack.c.h.b16 %v5455
    %v5631 = vunpack.c.l.b16 %v5456
    %v5632 = vunpack.c.h.b16 %v5456
    %v5633 = vunpack.c.l.b16 %v5457
    %v5634 = vunpack.c.h.b16 %v5457
    %v5635 = vunpack.c.l.b16 %v5458
    %v5636 = vunpack.c.h.b16 %v5458
    %v5637 = vunpack.c.l.b16 %v5459
    %v5638 = vunpack.c.h.b16 %v5459
    %v5639 = vunpack.c.l.b16 %v5460
    %v5640 = vunpack.c.h.b16 %v5460
    %v5641 = vunpack.c.l.b16 %v5461
    %v5642 = vunpack.c.h.b16 %v5461
    %v5643 = vunpack.c.l.b16 %v5462
    %v5644 = vunpack.c.h.b16 %v5462
    %v5645 = vunpack.c.l.b16 %v5463
    %v5646 = vunpack.c.h.b16 %v5463
    %v5647 = vunpack.c.l.b16 %v5464
    %v5648 = vunpack.c.h.b16 %v5464
    %v5649 = vunpack.c.l.b16 %v5465
    %v5650 = vunpack.c.h.b16 %v5465
    %v5651 = vunpack.c.l.b16 %v5466
    %v5652 = vunpack.c.h.b16 %v5466
    %v5653 = vunpack.c.l.b16 %v5467
    %v5654 = vunpack.c.l.b16 %v5468
    %v5655 = vunpack.c.h.b16 %v5468
    %v5656 = vunpack.c.l.b16 %v5469
    %v5657 = vunpack.c.h.b16 %v5469
    %v5658 = vunpack.c.l.b16 %v5470
    %v5659 = vunpack.c.h.b16 %v5470
    %v5660 = vunpack.c.l.b16 %v5471
    %v5661 = vunpack.c.h.b16 %v5471
    %v5662 = vunpack.c.l.b16 %v5472
    %v5663 = vunpack.c.h.b16 %v5472
    %v5664 = vunpack.c.l.b16 %v5473
    %v5665 = vunpack.c.h.b16 %v5473
    %v5666 = vunpack.c.l.b16 %v5474
    %v5667 = vunpack.c.h.b16 %v5474
    %v5668 = vunpack.c.l.b16 %v5475
    %v5669 = vunpack.c.h.b16 %v5475
    %v5670 = vunpack.c.l.b16 %v5476
    %v5671 = vunpack.c.h.b16 %v5476
    %v5672 = vunpack.c.l.b16 %v5477
    %v5673 = vunpack.c.h.b16 %v5477
    %v5674 = vunpack.c.l.b16 %v5478
    %v5675 = vunpack.c.h.b16 %v5478
    %v5676 = vunpack.c.l.b16 %v5479
    %v5677 = vunpack.c.h.b16 %v5479
    %v5678 = vunpack.c.l.b16 %v5480
    %v5679 = vunpack.c.h.b16 %v5480
    %v5680 = vunpack.c.l.b16 %v5481
    %v5681 = vunpack.c.h.b16 %v5481
    %v5682 = vunpack.c.l.b16 %v5482
    %v5683 = vunpack.c.h.b16 %v5482
    %v5684 = vunpack.c.l.b16 %v5483
    %v5685 = vunpack.c.h.b16 %v5483
    %v5686 = vunpack.c.l.b16 %v5484
    %v5687 = vunpack.c.l.b16 %v5485
    %v5688 = vunpack.c.h.b16 %v5485
    %v5689 = vunpack.c.l.b16 %v5486
    %v5690 = vunpack.c.h.b16 %v5486
    %v5691 = vunpack.c.l.b16 %v5487
    %v5692 = vunpack.c.h.b16 %v5487
    %v5693 = vunpack.c.l.b16 %v5488
    %v5694 = vunpack.c.h.b16 %v5488
    %v5695 = vunpack.c.l.b16 %v5489
    %v5696 = vunpack.c.h.b16 %v5489
    %v5697 = vunpack.c.l.b16 %v5490
    %v5698 = vunpack.c.h.b16 %v5490
    %v5699 = vunpack.c.l.b16 %v5491
    %v5700 = vunpack.c.h.b16 %v5491
    %v5701 = vunpack.c.l.b16 %v5492
    %v5702 = vunpack.c.h.b16 %v5492
    %v5703 = vunpack.c.l.b16 %v5493
    %v5704 = vunpack.c.h.b16 %v5493
    %v5705 = vunpack.c.l.b16 %v5494
    %v5706 = vunpack.c.h.b16 %v5494
    %v5707 = vunpack.c.l.b16 %v5495
    %v5708 = vunpack.c.h.b16 %v5495
    %v5709 = vunpack.c.l.b16 %v5496
    %v5710 = vunpack.c.h.b16 %v5496
    %v5711 = vunpack.c.l.b16 %v5497
    %v5712 = vunpack.c.h.b16 %v5497
    %v5713 = vunpack.c.l.b16 %v5498
    %v5714 = vunpack.c.h.b16 %v5498
    %v5715 = vunpack.c.l.b16 %v5499
    %v5716 = vunpack.c.h.b16 %v5499
    %v5717 = vunpack.c.l.b16 %v5500
    %v5718 = vunpack.c.h.b16 %v5500
    %v5719 = vunpack.c.l.b16 %v5501
    %v5720 = vunpack.c.l.b16 %v5502
    %v5721 = vunpack.c.h.b16 %v5502
    %v5722 = vunpack.c.l.b16 %v5503
    %v5723 = vunpack.c.h.b16 %v5503
    %v5724 = vunpack.c.l.b16 %v5504
    %v5725 = vunpack.c.h.b16 %v5504
    %v5726 = vunpack.c.l.b16 %v5505
    %v5727 = vunpack.c.h.b16 %v5505
    %v5728 = vunpack.c.l.b16 %v5506
    %v5729 = vunpack.c.h.b16 %v5506
    %v5730 = vunpack.c.l.b16 %v5507
    %v5731 = vunpack.c.h.b16 %v5507
    %v5732 = vunpack.c.l.b16 %v5508
    %v5733 = vunpack.c.h.b16 %v5508
    %v5734 = vunpack.c.l.b16 %v5509
    %v5735 = vunpack.c.h.b16 %v5509
    %v5736 = vunpack.c.l.b16 %v5510
    %v5737 = vunpack.c.h.b16 %v5510
    %v5738 = vunpack.c.l.b16 %v5511
    %v5739 = vunpack.c.h.b16 %v5511
    %v5740 = vunpack.c.l.b16 %v5512
    %v5741 = vunpack.c.h.b16 %v5512
    %v5742 = vunpack.c.l.b16 %v5513
    %v5743 = vunpack.c.h.b16 %v5513
    %v5744 = vunpack.c.l.b16 %v5514
    %v5745 = vunpack.c.h.b16 %v5514
    %v5746 = vunpack.c.l.b16 %v5515
    %v5747 = vunpack.c.h.b16 %v5515
    %v5748 = vunpack.c.l.b16 %v5516
    %v5749 = vunpack.c.h.b16 %v5516
    %v5750 = vunpack.c.l.b16 %v5517
    %v5751 = vunpack.c.h.b16 %v5517
    %v5752 = vunpack.c.l.b16 %v5518
    %v5753 = vunpack.c.l.b16 %v5519
    %v5754 = vunpack.c.h.b16 %v5519
    %v5755 = vunpack.c.l.b16 %v5520
    %v5756 = vunpack.c.h.b16 %v5520
    %v5757 = vunpack.c.l.b16 %v5521
    %v5758 = vunpack.c.h.b16 %v5521
    %v5759 = vunpack.c.l.b16 %v5522
    %v5760 = vunpack.c.h.b16 %v5522
    %v5761 = vunpack.c.l.b16 %v5523
    %v5762 = vunpack.c.h.b16 %v5523
    %v5763 = vunpack.c.l.b16 %v5524
    %v5764 = vunpack.c.h.b16 %v5524
    %v5765 = vunpack.c.l.b16 %v5525
    %v5766 = vunpack.c.h.b16 %v5525
    %v5767 = vunpack.c.l.b16 %v5526
    %v5768 = vunpack.c.h.b16 %v5526
    %v5769 = vunpack.c.l.b16 %v5527
    %v5770 = vunpack.c.h.b16 %v5527
    %v5771 = vunpack.c.l.b16 %v5528
    %v5772 = vunpack.c.h.b16 %v5528
    %v5773 = vunpack.c.l.b16 %v5529
    %v5774 = vunpack.c.h.b16 %v5529
    %v5775 = vunpack.c.l.b16 %v5530
    %v5776 = vunpack.c.h.b16 %v5530
    %v5777 = vunpack.c.l.b16 %v5531
    %v5778 = vunpack.c.h.b16 %v5531
    %v5779 = vunpack.c.l.b16 %v5532
    %v5780 = vunpack.c.h.b16 %v5532
    %v5781 = vunpack.c.l.b16 %v5533
    %v5782 = vunpack.c.h.b16 %v5533
    %v5783 = vunpack.c.l.b16 %v5534
    %v5784 = vunpack.c.h.b16 %v5534
    %v5785 = vunpack.c.l.b16 %v5535
    %v5786 = vpack.c.b16 %v5654, %v5621
    %v5787 = vpack.c.b16 %v5655, %v5622
    %v5788 = vpack.c.b16 %v5656, %v5623
    %v5789 = vpack.c.b16 %v5657, %v5624
    %v5790 = vpack.c.b16 %v5658, %v5625
    %v5791 = vpack.c.b16 %v5659, %v5626
    %v5792 = vpack.c.b16 %v5660, %v5627
    %v5793 = vpack.c.b16 %v5661, %v5628
    %v5794 = vpack.c.b16 %v5662, %v5629
    %v5795 = vpack.c.b16 %v5663, %v5630
    %v5796 = vpack.c.b16 %v5664, %v5631
    %v5797 = vpack.c.b16 %v5665, %v5632
    %v5798 = vpack.c.b16 %v5666, %v5633
    %v5799 = vpack.c.b16 %v5667, %v5634
    %v5800 = vpack.c.b16 %v5668, %v5635
    %v5801 = vpack.c.b16 %v5669, %v5636
    %v5802 = vpack.c.b16 %v5670, %v5637
    %v5803 = vpack.c.b16 %v5671, %v5638
    %v5804 = vpack.c.b16 %v5672, %v5639
    %v5805 = vpack.c.b16 %v5673, %v5640
    %v5806 = vpack.c.b16 %v5674, %v5641
    %v5807 = vpack.c.b16 %v5675, %v5642
    %v5808 = vpack.c.b16 %v5676, %v5643
    %v5809 = vpack.c.b16 %v5677, %v5644
    %v5810 = vpack.c.b16 %v5678, %v5645
    %v5811 = vpack.c.b16 %v5679, %v5646
    %v5812 = vpack.c.b16 %v5680, %v5647
    %v5813 = vpack.c.b16 %v5681, %v5648
    %v5814 = vpack.c.b16 %v5682, %v5649
    %v5815 = vpack.c.b16 %v5683, %v5650
    %v5816 = vpack.c.b16 %v5684, %v5651
    %v5817 = vpack.c.b16 %v5685, %v5652
    %v5818 = vpack.c.b16 %v5686, %v5653
    %v5819 = vpack.c.b16 %v5720, %v5687
    %v5820 = vpack.c.b16 %v5721, %v5688
    %v5821 = vpack.c.b16 %v5722, %v5689
    %v5822 = vpack.c.b16 %v5723, %v5690
    %v5823 = vpack.c.b16 %v5724, %v5691
    %v5824 = vpack.c.b16 %v5725, %v5692
    %v5825 = vpack.c.b16 %v5726, %v5693
    %v5826 = vpack.c.b16 %v5727, %v5694
    %v5827 = vpack.c.b16 %v5728, %v5695
    %v5828 = vpack.c.b16 %v5729, %v5696
    %v5829 = vpack.c.b16 %v5730, %v5697
    %v5830 = vpack.c.b16 %v5731, %v5698
    %v5831 = vpack.c.b16 %v5732, %v5699
    %v5832 = vpack.c.b16 %v5733, %v5700
    %v5833 = vpack.c.b16 %v5734, %v5701
    %v5834 = vpack.c.b16 %v5735, %v5702
    %v5835 = vpack.c.b16 %v5736, %v5703
    %v5836 = vpack.c.b16 %v5737, %v5704
    %v5837 = vpack.c.b16 %v5738, %v5705
    %v5838 = vpack.c.b16 %v5739, %v5706
    %v5839 = vpack.c.b16 %v5740, %v5707
    %v5840 = vpack.c.b16 %v5741, %v5708
    %v5841 = vpack.c.b16 %v5742, %v5709
    %v5842 = vpack.c.b16 %v5743, %v5710
    %v5843 = vpack.c.b16 %v5744, %v5711
    %v5844 = vpack.c.b16 %v5745, %v5712
    %v5845 = vpack.c.b16 %v5746, %v5713
    %v5846 = vpack.c.b16 %v5747, %v5714
    %v5847 = vpack.c.b16 %v5748, %v5715
    %v5848 = vpack.c.b16 %v5749, %v5716
    %v5849 = vpack.c.b16 %v5750, %v5717
    %v5850 = vpack.c.b16 %v5751, %v5718
    %v5851 = vpack.c.b16 %v5752, %v5719
    %v5852 = vpack.c.b16 %v5753, %v5753
    %v5853 = vpack.c.b16 %v5754, %v5754
    %v5854 = vpack.c.b16 %v5755, %v5755
    %v5855 = vpack.c.b16 %v5756, %v5756
    %v5856 = vpack.c.b16 %v5757, %v5757
    %v5857 = vpack.c.b16 %v5758, %v5758
    %v5858 = vpack.c.b16 %v5759, %v5759
    %v5859 = vpack.c.b16 %v5760, %v5760
    %v5860 = vpack.c.b16 %v5761, %v5761
    %v5861 = vpack.c.b16 %v5762, %v5762
    %v5862 = vpack.c.b16 %v5763, %v5763
    %v5863 = vpack.c.b16 %v5764, %v5764
    %v5864 = vpack.c.b16 %v5765, %v5765
    %v5865 = vpack.c.b16 %v5766, %v5766
    %v5866 = vpack.c.b16 %v5767, %v5767
    %v5867 = vpack.c.b16 %v5768, %v5768
    %v5868 = vpack.c.b16 %v5769, %v5769
    %v5869 = vpack.c.b16 %v5770, %v5770
    %v5870 = vpack.c.b16 %v5771, %v5771
    %v5871 = vpack.c.b16 %v5772, %v5772
    %v5872 = vpack.c.b16 %v5773, %v5773
    %v5873 = vpack.c.b16 %v5774, %v5774
    %v5874 = vpack.c.b16 %v5775, %v5775
    %v5875 = vpack.c.b16 %v5776, %v5776
    %v5876 = vpack.c.b16 %v5777, %v5777
    %v5877 = vpack.c.b16 %v5778, %v5778
    %v5878 = vpack.c.b16 %v5779, %v5779
    %v5879 = vpack.c.b16 %v5780, %v5780
    %v5880 = vpack.c.b16 %v5781, %v5781
    %v5881 = vpack.c.b16 %v5782, %v5782
    %v5882 = vpack.c.b16 %v5783, %v5783
    %v5883 = vpack.c.b16 %v5784, %v5784
    %v5884 = vpack.c.b16 %v5785, %v5785
    %vm5951 = vcmask 269312
    %v5953 = vsel %vm5951, %v5450, 0
    %vm5955 = vcmask 1040384
    %v5956 = vsel 0, 4294967295, 65535
    %v5957 = vsel %vm5955, %v5956, 0
    %v5959 = vand.u32 %v5852, %v5957
    %v5962 = vand.u32 %v5853, %v5957
    %v5965 = vand.u32 %v5854, %v5957
    %v5968 = vand.u32 %v5855, %v5957
    %v5971 = vand.u32 %v5856, %v5957
    %v5974 = vand.u32 %v5857, %v5957
    %v5977 = vand.u32 %v5858, %v5957
    %v5980 = vand.u32 %v5859, %v5957
    %v5983 = vand.u32 %v5860, %v5957
    %v5986 = vand.u32 %v5861, %v5957
    %v5989 = vand.u32 %v5862, %v5957
    %v5992 = vand.u32 %v5863, %v5957
    %v5995 = vand.u32 %v5864, %v5957
    %v5998 = vand.u32 %v5865, %v5957
    %v6001 = vand.u32 %v5866, %v5957
    %v6004 = vand.u32 %v5867, %v5957
    %v6007 = vand.u32 %v5868, %v5957
    %v6010 = vand.u32 %v5869, %v5957
    %v6013 = vand.u32 %v5870, %v5957
    %v6016 = vand.u32 %v5871, %v5957
    %v6019 = vand.u32 %v5872, %v5957
    %v6022 = vand.u32 %v5873, %v5957
    %v6025 = vand.u32 %v5874, %v5957
    %v6028 = vand.u32 %v5875, %v5957
    %v6031 = vand.u32 %v5876, %v5957
    %v6034 = vand.u32 %v5877, %v5957
    %v6037 = vand.u32 %v5878, %v5957
    %v6040 = vand.u32 %v5879, %v5957
    %v6043 = vand.u32 %v5880, %v5957
    %v6046 = vand.u32 %v5881, %v5957
    %v6049 = vand.u32 %v5882, %v5957
    %v6052 = vand.u32 %v5883, %v5957
    %v6055 = vand.u32 %v5884, %v5957
    %6057 = vmatpush.bf16.msra.mxu0 0
    %6058 = vmatpush.bf16.msra.mxu0 0
    %6059 = vmatpush.bf16.msra.mxu0 0
    %6060 = vmatpush.bf16.msra.mxu0 0
    %6061 = vmatpush.bf16.msra.mxu0 0
    %6062 = vmatpush.bf16.msra.mxu0 %v5959
    %6063 = vmatpush.bf16.msra.mxu0 %v5819
    %6064 = vmatpush.bf16.msra.mxu0 %v5786
    %6065 = vmatmul.bf16.gmra.mxu0 %v5953
    %v6066 = vpop.f32.mrf.mxu0
    %v6067 = vadd.f32 0.0, %v6066
    %v6068 = vpop.f32.mrf.mxu0
    %6069 = vdwg.mxu0
    %6070 = vmatpush.bf16.msra.mxu0 0
    %6071 = vmatpush.bf16.msra.mxu0 0
    %6072 = vmatpush.bf16.msra.mxu0 0
    %6073 = vmatpush.bf16.msra.mxu0 0
    %6074 = vmatpush.bf16.msra.mxu0 0
    %6075 = vmatpush.bf16.msra.mxu0 %v5962
    %6076 = vmatpush.bf16.msra.mxu0 %v5820
    %6077 = vmatpush.bf16.msra.mxu0 %v5787
    %6078 = vmatmul.bf16.gmra.mxu0 %v5953
    %v6079 = vpop.f32.mrf.mxu0
    %v6080 = vadd.f32 0.0, %v6079
    %v6081 = vpop.f32.mrf.mxu0
    %6082 = vdwg.mxu0
    %6083 = vmatpush.bf16.msra.mxu0 0
    %6084 = vmatpush.bf16.msra.mxu0 0
    %6085 = vmatpush.bf16.msra.mxu0 0
    %6086 = vmatpush.bf16.msra.mxu0 0
    %6087 = vmatpush.bf16.msra.mxu0 0
    %6088 = vmatpush.bf16.msra.mxu0 %v5965
    %6089 = vmatpush.bf16.msra.mxu0 %v5821
    %6090 = vmatpush.bf16.msra.mxu0 %v5788
    %6091 = vmatmul.bf16.gmra.mxu0 %v5953
    %v6092 = vpop.f32.mrf.mxu0
    %v6093 = vadd.f32 0.0, %v6092
    %v6094 = vpop.f32.mrf.mxu0
    %6095 = vdwg.mxu0
    %6096 = vmatpush.bf16.msra.mxu0 0
    %6097 = vmatpush.bf16.msra.mxu0 0
    %6098 = vmatpush.bf16.msra.mxu0 0
    %6099 = vmatpush.bf16.msra.mxu0 0
    %6100 = vmatpush.bf16.msra.mxu0 0
    %6101 = vmatpush.bf16.msra.mxu0 %v5968
    %6102 = vmatpush.bf16.msra.mxu0 %v5822
    %6103 = vmatpush.bf16.msra.mxu0 %v5789
    %6104 = vmatmul.bf16.gmra.mxu0 %v5953
    %v6105 = vpop.f32.mrf.mxu0
    %v6106 = vadd.f32 0.0, %v6105
    %v6107 = vpop.f32.mrf.mxu0
    %6108 = vdwg.mxu0
    %6109 = vmatpush.bf16.msra.mxu0 0
    %6110 = vmatpush.bf16.msra.mxu0 0
    %6111 = vmatpush.bf16.msra.mxu0 0
    %6112 = vmatpush.bf16.msra.mxu0 0
    %6113 = vmatpush.bf16.msra.mxu0 0
    %6114 = vmatpush.bf16.msra.mxu0 %v5971
    %6115 = vmatpush.bf16.msra.mxu0 %v5823
    %6116 = vmatpush.bf16.msra.mxu0 %v5790
    %6117 = vmatmul.bf16.gmra.mxu0 %v5953
    %v6118 = vpop.f32.mrf.mxu0
    %v6119 = vadd.f32 0.0, %v6118
    %v6120 = vpop.f32.mrf.mxu0
    %6121 = vdwg.mxu0
    %6122 = vmatpush.bf16.msra.mxu0 0
    %6123 = vmatpush.bf16.msra.mxu0 0
    %6124 = vmatpush.bf16.msra.mxu0 0
    %6125 = vmatpush.bf16.msra.mxu0 0
    %6126 = vmatpush.bf16.msra.mxu0 0
    %6127 = vmatpush.bf16.msra.mxu0 %v5974
    %6128 = vmatpush.bf16.msra.mxu0 %v5824
    %6129 = vmatpush.bf16.msra.mxu0 %v5791
    %6130 = vmatmul.bf16.gmra.mxu0 %v5953
    %v6131 = vpop.f32.mrf.mxu0
    %v6132 = vadd.f32 0.0, %v6131
    %v6133 = vpop.f32.mrf.mxu0
    %6134 = vdwg.mxu0
    %6135 = vmatpush.bf16.msra.mxu0 0
    %6136 = vmatpush.bf16.msra.mxu0 0
    %6137 = vmatpush.bf16.msra.mxu0 0
    %6138 = vmatpush.bf16.msra.mxu0 0
    %6139 = vmatpush.bf16.msra.mxu0 0
    %6140 = vmatpush.bf16.msra.mxu0 %v5977
    %6141 = vmatpush.bf16.msra.mxu0 %v5825
    %6142 = vmatpush.bf16.msra.mxu0 %v5792
    %6143 = vmatmul.bf16.gmra.mxu0 %v5953
    %v6144 = vpop.f32.mrf.mxu0
    %v6145 = vadd.f32 0.0, %v6144
    %v6146 = vpop.f32.mrf.mxu0
    %6147 = vdwg.mxu0
    %6148 = vmatpush.bf16.msra.mxu0 0
    %6149 = vmatpush.bf16.msra.mxu0 0
    %6150 = vmatpush.bf16.msra.mxu0 0
    %6151 = vmatpush.bf16.msra.mxu0 0
    %6152 = vmatpush.bf16.msra.mxu0 0
    %6153 = vmatpush.bf16.msra.mxu0 %v5980
    %6154 = vmatpush.bf16.msra.mxu0 %v5826
    %6155 = vmatpush.bf16.msra.mxu0 %v5793
    %6156 = vmatmul.bf16.gmra.mxu0 %v5953
    %v6157 = vpop.f32.mrf.mxu0
    %v6158 = vadd.f32 0.0, %v6157
    %v6159 = vpop.f32.mrf.mxu0
    %6160 = vdwg.mxu0
    %6161 = vmatpush.bf16.msra.mxu0 0
    %6162 = vmatpush.bf16.msra.mxu0 0
    %6163 = vmatpush.bf16.msra.mxu0 0
    %6164 = vmatpush.bf16.msra.mxu0 0
    %6165 = vmatpush.bf16.msra.mxu0 0
    %6166 = vmatpush.bf16.msra.mxu0 %v5983
    %6167 = vmatpush.bf16.msra.mxu0 %v5827
    %6168 = vmatpush.bf16.msra.mxu0 %v5794
    %6169 = vmatmul.bf16.gmra.mxu0 %v5953
    %v6170 = vpop.f32.mrf.mxu0
    %v6171 = vadd.f32 0.0, %v6170
    %v6172 = vpop.f32.mrf.mxu0
    %6173 = vdwg.mxu0
    %6174 = vmatpush.bf16.msra.mxu0 0
    %6175 = vmatpush.bf16.msra.mxu0 0
    %6176 = vmatpush.bf16.msra.mxu0 0
    %6177 = vmatpush.bf16.msra.mxu0 0
    %6178 = vmatpush.bf16.msra.mxu0 0
    %6179 = vmatpush.bf16.msra.mxu0 %v5986
    %6180 = vmatpush.bf16.msra.mxu0 %v5828
    %6181 = vmatpush.bf16.msra.mxu0 %v5795
    %6182 = vmatmul.bf16.gmra.mxu0 %v5953
    %v6183 = vpop.f32.mrf.mxu0
    %v6184 = vadd.f32 0.0, %v6183
    %v6185 = vpop.f32.mrf.mxu0
    %6186 = vdwg.mxu0
    %6187 = vmatpush.bf16.msra.mxu0 0
    %6188 = vmatpush.bf16.msra.mxu0 0
    %6189 = vmatpush.bf16.msra.mxu0 0
    %6190 = vmatpush.bf16.msra.mxu0 0
    %6191 = vmatpush.bf16.msra.mxu0 0
    %6192 = vmatpush.bf16.msra.mxu0 %v5989
    %6193 = vmatpush.bf16.msra.mxu0 %v5829
    %6194 = vmatpush.bf16.msra.mxu0 %v5796
    %6195 = vmatmul.bf16.gmra.mxu0 %v5953
    %v6196 = vpop.f32.mrf.mxu0
    %v6197 = vadd.f32 0.0, %v6196
    %v6198 = vpop.f32.mrf.mxu0
    %6199 = vdwg.mxu0
    %6200 = vmatpush.bf16.msra.mxu0 0
    %6201 = vmatpush.bf16.msra.mxu0 0
    %6202 = vmatpush.bf16.msra.mxu0 0
    %6203 = vmatpush.bf16.msra.mxu0 0
    %6204 = vmatpush.bf16.msra.mxu0 0
    %6205 = vmatpush.bf16.msra.mxu0 %v5992
    %6206 = vmatpush.bf16.msra.mxu0 %v5830
    %6207 = vmatpush.bf16.msra.mxu0 %v5797
    %6208 = vmatmul.bf16.gmra.mxu0 %v5953
    %v6209 = vpop.f32.mrf.mxu0
    %v6210 = vadd.f32 0.0, %v6209
    %v6211 = vpop.f32.mrf.mxu0
    %6212 = vdwg.mxu0
    %6213 = vmatpush.bf16.msra.mxu0 0
    %6214 = vmatpush.bf16.msra.mxu0 0
    %6215 = vmatpush.bf16.msra.mxu0 0
    %6216 = vmatpush.bf16.msra.mxu0 0
    %6217 = vmatpush.bf16.msra.mxu0 0
    %6218 = vmatpush.bf16.msra.mxu0 %v5995
    %6219 = vmatpush.bf16.msra.mxu0 %v5831
    %6220 = vmatpush.bf16.msra.mxu0 %v5798
    %6221 = vmatmul.bf16.gmra.mxu0 %v5953
    %v6222 = vpop.f32.mrf.mxu0
    %v6223 = vadd.f32 0.0, %v6222
    %v6224 = vpop.f32.mrf.mxu0
    %6225 = vdwg.mxu0
    %6226 = vmatpush.bf16.msra.mxu0 0
    %6227 = vmatpush.bf16.msra.mxu0 0
    %6228 = vmatpush.bf16.msra.mxu0 0
    %6229 = vmatpush.bf16.msra.mxu0 0
    %6230 = vmatpush.bf16.msra.mxu0 0
    %6231 = vmatpush.bf16.msra.mxu0 %v5998
    %6232 = vmatpush.bf16.msra.mxu0 %v5832
    %6233 = vmatpush.bf16.msra.mxu0 %v5799
    %6234 = vmatmul.bf16.gmra.mxu0 %v5953
    %v6235 = vpop.f32.mrf.mxu0
    %v6236 = vadd.f32 0.0, %v6235
    %v6237 = vpop.f32.mrf.mxu0
    %6238 = vdwg.mxu0
    %6239 = vmatpush.bf16.msra.mxu0 0
    %6240 = vmatpush.bf16.msra.mxu0 0
    %6241 = vmatpush.bf16.msra.mxu0 0
    %6242 = vmatpush.bf16.msra.mxu0 0
    %6243 = vmatpush.bf16.msra.mxu0 0
    %6244 = vmatpush.bf16.msra.mxu0 %v6001
    %6245 = vmatpush.bf16.msra.mxu0 %v5833
    %6246 = vmatpush.bf16.msra.mxu0 %v5800
    %6247 = vmatmul.bf16.gmra.mxu0 %v5953
    %v6248 = vpop.f32.mrf.mxu0
    %v6249 = vadd.f32 0.0, %v6248
    %v6250 = vpop.f32.mrf.mxu0
    %6251 = vdwg.mxu0
    %6252 = vmatpush.bf16.msra.mxu0 0
    %6253 = vmatpush.bf16.msra.mxu0 0
    %6254 = vmatpush.bf16.msra.mxu0 0
    %6255 = vmatpush.bf16.msra.mxu0 0
    %6256 = vmatpush.bf16.msra.mxu0 0
    %6257 = vmatpush.bf16.msra.mxu0 %v6004
    %6258 = vmatpush.bf16.msra.mxu0 %v5834
    %6259 = vmatpush.bf16.msra.mxu0 %v5801
    %6260 = vmatmul.bf16.gmra.mxu0 %v5953
    %v6261 = vpop.f32.mrf.mxu0
    %v6262 = vadd.f32 0.0, %v6261
    %v6263 = vpop.f32.mrf.mxu0
    %6264 = vdwg.mxu0
    %6265 = vmatpush.bf16.msra.mxu0 0
    %6266 = vmatpush.bf16.msra.mxu0 0
    %6267 = vmatpush.bf16.msra.mxu0 0
    %6268 = vmatpush.bf16.msra.mxu0 0
    %6269 = vmatpush.bf16.msra.mxu0 0
    %6270 = vmatpush.bf16.msra.mxu0 %v6007
    %6271 = vmatpush.bf16.msra.mxu0 %v5835
    %6272 = vmatpush.bf16.msra.mxu0 %v5802
    %6273 = vmatmul.bf16.gmra.mxu0 %v5953
    %v6274 = vpop.f32.mrf.mxu0
    %v6275 = vadd.f32 0.0, %v6274
    %v6276 = vpop.f32.mrf.mxu0
    %6277 = vdwg.mxu0
    %6278 = vmatpush.bf16.msra.mxu0 0
    %6279 = vmatpush.bf16.msra.mxu0 0
    %6280 = vmatpush.bf16.msra.mxu0 0
    %6281 = vmatpush.bf16.msra.mxu0 0
    %6282 = vmatpush.bf16.msra.mxu0 0
    %6283 = vmatpush.bf16.msra.mxu0 %v6010
    %6284 = vmatpush.bf16.msra.mxu0 %v5836
    %6285 = vmatpush.bf16.msra.mxu0 %v5803
    %6286 = vmatmul.bf16.gmra.mxu0 %v5953
    %v6287 = vpop.f32.mrf.mxu0
    %v6288 = vadd.f32 0.0, %v6287
    %v6289 = vpop.f32.mrf.mxu0
    %6290 = vdwg.mxu0
    %6291 = vmatpush.bf16.msra.mxu0 0
    %6292 = vmatpush.bf16.msra.mxu0 0
    %6293 = vmatpush.bf16.msra.mxu0 0
    %6294 = vmatpush.bf16.msra.mxu0 0
    %6295 = vmatpush.bf16.msra.mxu0 0
    %6296 = vmatpush.bf16.msra.mxu0 %v6013
    %6297 = vmatpush.bf16.msra.mxu0 %v5837
    %6298 = vmatpush.bf16.msra.mxu0 %v5804
    %6299 = vmatmul.bf16.gmra.mxu0 %v5953
    %v6300 = vpop.f32.mrf.mxu0
    %v6301 = vadd.f32 0.0, %v6300
    %v6302 = vpop.f32.mrf.mxu0
    %6303 = vdwg.mxu0
    %6304 = vmatpush.bf16.msra.mxu0 0
    %6305 = vmatpush.bf16.msra.mxu0 0
    %6306 = vmatpush.bf16.msra.mxu0 0
    %6307 = vmatpush.bf16.msra.mxu0 0
    %6308 = vmatpush.bf16.msra.mxu0 0
    %6309 = vmatpush.bf16.msra.mxu0 %v6016
    %6310 = vmatpush.bf16.msra.mxu0 %v5838
    %6311 = vmatpush.bf16.msra.mxu0 %v5805
    %6312 = vmatmul.bf16.gmra.mxu0 %v5953
    %v6313 = vpop.f32.mrf.mxu0
    %v6314 = vadd.f32 0.0, %v6313
    %v6315 = vpop.f32.mrf.mxu0
    %6316 = vdwg.mxu0
    %6317 = vmatpush.bf16.msra.mxu0 0
    %6318 = vmatpush.bf16.msra.mxu0 0
    %6319 = vmatpush.bf16.msra.mxu0 0
    %6320 = vmatpush.bf16.msra.mxu0 0
    %6321 = vmatpush.bf16.msra.mxu0 0
    %6322 = vmatpush.bf16.msra.mxu0 %v6019
    %6323 = vmatpush.bf16.msra.mxu0 %v5839
    %6324 = vmatpush.bf16.msra.mxu0 %v5806
    %6325 = vmatmul.bf16.gmra.mxu0 %v5953
    %v6326 = vpop.f32.mrf.mxu0
    %v6327 = vadd.f32 0.0, %v6326
    %v6328 = vpop.f32.mrf.mxu0
    %6329 = vdwg.mxu0
    %6330 = vmatpush.bf16.msra.mxu0 0
    %6331 = vmatpush.bf16.msra.mxu0 0
    %6332 = vmatpush.bf16.msra.mxu0 0
    %6333 = vmatpush.bf16.msra.mxu0 0
    %6334 = vmatpush.bf16.msra.mxu0 0
    %6335 = vmatpush.bf16.msra.mxu0 %v6022
    %6336 = vmatpush.bf16.msra.mxu0 %v5840
    %6337 = vmatpush.bf16.msra.mxu0 %v5807
    %6338 = vmatmul.bf16.gmra.mxu0 %v5953
    %v6339 = vpop.f32.mrf.mxu0
    %v6340 = vadd.f32 0.0, %v6339
    %v6341 = vpop.f32.mrf.mxu0
    %6342 = vdwg.mxu0
    %6343 = vmatpush.bf16.msra.mxu0 0
    %6344 = vmatpush.bf16.msra.mxu0 0
    %6345 = vmatpush.bf16.msra.mxu0 0
    %6346 = vmatpush.bf16.msra.mxu0 0
    %6347 = vmatpush.bf16.msra.mxu0 0
    %6348 = vmatpush.bf16.msra.mxu0 %v6025
    %6349 = vmatpush.bf16.msra.mxu0 %v5841
    %6350 = vmatpush.bf16.msra.mxu0 %v5808
    %6351 = vmatmul.bf16.gmra.mxu0 %v5953
    %v6352 = vpop.f32.mrf.mxu0
    %v6353 = vadd.f32 0.0, %v6352
    %v6354 = vpop.f32.mrf.mxu0
    %6355 = vdwg.mxu0
    %6356 = vmatpush.bf16.msra.mxu0 0
    %6357 = vmatpush.bf16.msra.mxu0 0
    %6358 = vmatpush.bf16.msra.mxu0 0
    %6359 = vmatpush.bf16.msra.mxu0 0
    %6360 = vmatpush.bf16.msra.mxu0 0
    %6361 = vmatpush.bf16.msra.mxu0 %v6028
    %6362 = vmatpush.bf16.msra.mxu0 %v5842
    %6363 = vmatpush.bf16.msra.mxu0 %v5809
    %6364 = vmatmul.bf16.gmra.mxu0 %v5953
    %v6365 = vpop.f32.mrf.mxu0
    %v6366 = vadd.f32 0.0, %v6365
    %v6367 = vpop.f32.mrf.mxu0
    %6368 = vdwg.mxu0
    %6369 = vmatpush.bf16.msra.mxu0 0
    %6370 = vmatpush.bf16.msra.mxu0 0
    %6371 = vmatpush.bf16.msra.mxu0 0
    %6372 = vmatpush.bf16.msra.mxu0 0
    %6373 = vmatpush.bf16.msra.mxu0 0
    %6374 = vmatpush.bf16.msra.mxu0 %v6031
    %6375 = vmatpush.bf16.msra.mxu0 %v5843
    %6376 = vmatpush.bf16.msra.mxu0 %v5810
    %6377 = vmatmul.bf16.gmra.mxu0 %v5953
    %v6378 = vpop.f32.mrf.mxu0
    %v6379 = vadd.f32 0.0, %v6378
    %v6380 = vpop.f32.mrf.mxu0
    %6381 = vdwg.mxu0
    %6382 = vmatpush.bf16.msra.mxu0 0
    %6383 = vmatpush.bf16.msra.mxu0 0
    %6384 = vmatpush.bf16.msra.mxu0 0
    %6385 = vmatpush.bf16.msra.mxu0 0
    %6386 = vmatpush.bf16.msra.mxu0 0
    %6387 = vmatpush.bf16.msra.mxu0 %v6034
    %6388 = vmatpush.bf16.msra.mxu0 %v5844
    %6389 = vmatpush.bf16.msra.mxu0 %v5811
    %6390 = vmatmul.bf16.gmra.mxu0 %v5953
    %v6391 = vpop.f32.mrf.mxu0
    %v6392 = vadd.f32 0.0, %v6391
    %v6393 = vpop.f32.mrf.mxu0
    %6394 = vdwg.mxu0
    %6395 = vmatpush.bf16.msra.mxu0 0
    %6396 = vmatpush.bf16.msra.mxu0 0
    %6397 = vmatpush.bf16.msra.mxu0 0
    %6398 = vmatpush.bf16.msra.mxu0 0
    %6399 = vmatpush.bf16.msra.mxu0 0
    %6400 = vmatpush.bf16.msra.mxu0 %v6037
    %6401 = vmatpush.bf16.msra.mxu0 %v5845
    %6402 = vmatpush.bf16.msra.mxu0 %v5812
    %6403 = vmatmul.bf16.gmra.mxu0 %v5953
    %v6404 = vpop.f32.mrf.mxu0
    %v6405 = vadd.f32 0.0, %v6404
    %v6406 = vpop.f32.mrf.mxu0
    %6407 = vdwg.mxu0
    %6408 = vmatpush.bf16.msra.mxu0 0
    %6409 = vmatpush.bf16.msra.mxu0 0
    %6410 = vmatpush.bf16.msra.mxu0 0
    %6411 = vmatpush.bf16.msra.mxu0 0
    %6412 = vmatpush.bf16.msra.mxu0 0
    %6413 = vmatpush.bf16.msra.mxu0 %v6040
    %6414 = vmatpush.bf16.msra.mxu0 %v5846
    %6415 = vmatpush.bf16.msra.mxu0 %v5813
    %6416 = vmatmul.bf16.gmra.mxu0 %v5953
    %v6417 = vpop.f32.mrf.mxu0
    %v6418 = vadd.f32 0.0, %v6417
    %v6419 = vpop.f32.mrf.mxu0
    %6420 = vdwg.mxu0
    %6421 = vmatpush.bf16.msra.mxu0 0
    %6422 = vmatpush.bf16.msra.mxu0 0
    %6423 = vmatpush.bf16.msra.mxu0 0
    %6424 = vmatpush.bf16.msra.mxu0 0
    %6425 = vmatpush.bf16.msra.mxu0 0
    %6426 = vmatpush.bf16.msra.mxu0 %v6043
    %6427 = vmatpush.bf16.msra.mxu0 %v5847
    %6428 = vmatpush.bf16.msra.mxu0 %v5814
    %6429 = vmatmul.bf16.gmra.mxu0 %v5953
    %v6430 = vpop.f32.mrf.mxu0
    %v6431 = vadd.f32 0.0, %v6430
    %v6432 = vpop.f32.mrf.mxu0
    %6433 = vdwg.mxu0
    %6434 = vmatpush.bf16.msra.mxu0 0
    %6435 = vmatpush.bf16.msra.mxu0 0
    %6436 = vmatpush.bf16.msra.mxu0 0
    %6437 = vmatpush.bf16.msra.mxu0 0
    %6438 = vmatpush.bf16.msra.mxu0 0
    %6439 = vmatpush.bf16.msra.mxu0 %v6046
    %6440 = vmatpush.bf16.msra.mxu0 %v5848
    %6441 = vmatpush.bf16.msra.mxu0 %v5815
    %6442 = vmatmul.bf16.gmra.mxu0 %v5953
    %v6443 = vpop.f32.mrf.mxu0
    %v6444 = vadd.f32 0.0, %v6443
    %v6445 = vpop.f32.mrf.mxu0
    %6446 = vdwg.mxu0
    %6447 = vmatpush.bf16.msra.mxu0 0
    %6448 = vmatpush.bf16.msra.mxu0 0
    %6449 = vmatpush.bf16.msra.mxu0 0
    %6450 = vmatpush.bf16.msra.mxu0 0
    %6451 = vmatpush.bf16.msra.mxu0 0
    %6452 = vmatpush.bf16.msra.mxu0 %v6049
    %6453 = vmatpush.bf16.msra.mxu0 %v5849
    %6454 = vmatpush.bf16.msra.mxu0 %v5816
    %6455 = vmatmul.bf16.gmra.mxu0 %v5953
    %v6456 = vpop.f32.mrf.mxu0
    %v6457 = vadd.f32 0.0, %v6456
    %v6458 = vpop.f32.mrf.mxu0
    %6459 = vdwg.mxu0
    %6460 = vmatpush.bf16.msra.mxu0 0
    %6461 = vmatpush.bf16.msra.mxu0 0
    %6462 = vmatpush.bf16.msra.mxu0 0
    %6463 = vmatpush.bf16.msra.mxu0 0
    %6464 = vmatpush.bf16.msra.mxu0 0
    %6465 = vmatpush.bf16.msra.mxu0 %v6052
    %6466 = vmatpush.bf16.msra.mxu0 %v5850
    %6467 = vmatpush.bf16.msra.mxu0 %v5817
    %6468 = vmatmul.bf16.gmra.mxu0 %v5953
    %v6469 = vpop.f32.mrf.mxu0
    %v6470 = vadd.f32 0.0, %v6469
    %v6471 = vpop.f32.mrf.mxu0
    %6472 = vdwg.mxu0
    %6473 = vmatpush.bf16.msra.mxu0 0
    %6474 = vmatpush.bf16.msra.mxu0 0
    %6475 = vmatpush.bf16.msra.mxu0 0
    %6476 = vmatpush.bf16.msra.mxu0 0
    %6477 = vmatpush.bf16.msra.mxu0 0
    %6478 = vmatpush.bf16.msra.mxu0 %v6055
    %6479 = vmatpush.bf16.msra.mxu0 %v5851
    %6480 = vmatpush.bf16.msra.mxu0 %v5818
    %6481 = vmatmul.bf16.gmra.mxu0 %v5953
    %v6482 = vpop.f32.mrf.mxu0
    %v6483 = vadd.f32 0.0, %v6482
    %v6484 = vpop.f32.mrf.mxu0
    %6485 = vdwg.mxu0
    %v6486 = vrot.slane %v6093, 4
    %v6487 = vsel %vm2116, %v6486, %v6067
    %v6489 = vunpack.c.l.s4 1983009808
    %v6490 = vunpack.c.0.s8 %v6489
    %v6491 = vperm.slane %v6487, %v6490
    %v6492 = vrot.slane %v6106, 4
    %v6493 = vsel %vm2116, %v6492, %v6080
    %v6495 = vunpack.c.l.s4 1983009808
    %v6496 = vunpack.c.0.s8 %v6495
    %v6497 = vperm.slane %v6493, %v6496
    %v6498 = vrot.slane %v6145, 4
    %v6499 = vsel %vm2116, %v6498, %v6119
    %v6501 = vunpack.c.l.s4 1983009808
    %v6502 = vunpack.c.0.s8 %v6501
    %v6503 = vperm.slane %v6499, %v6502
    %v6504 = vrot.slane %v6158, 4
    %v6505 = vsel %vm2116, %v6504, %v6132
    %v6507 = vunpack.c.l.s4 1983009808
    %v6508 = vunpack.c.0.s8 %v6507
    %v6509 = vperm.slane %v6505, %v6508
    %v6510 = vrot.slane %v6497, 4
    %v6511 = vsel %vm2116, %v6510, %v6491
    %v6512 = vrot.slane %v6491, 4
    %v6513 = vsel %vm2116, %v6497, %v6512
    %v6515 = vunpack.c.l.s4 1934713408
    %v6516 = vunpack.c.0.s8 %v6515
    %v6517 = vperm.slane %v6511, %v6516
    %v6519 = vunpack.c.l.s4 1934713408
    %v6520 = vunpack.c.0.s8 %v6519
    %v6521 = vperm.slane %v6513, %v6520
    %v6522 = vrot.slane %v6509, 4
    %v6523 = vsel %vm2116, %v6522, %v6503
    %v6524 = vrot.slane %v6503, 4
    %v6525 = vsel %vm2116, %v6509, %v6524
    %v6527 = vunpack.c.l.s4 1934713408
    %v6528 = vunpack.c.0.s8 %v6527
    %v6529 = vperm.slane %v6523, %v6528
    %v6531 = vunpack.c.l.s4 1934713408
    %v6532 = vunpack.c.0.s8 %v6531
    %v6533 = vperm.slane %v6525, %v6532
    %v6534 = vrot.slane %v6529, 4
    %v6535 = vsel %vm2116, %v6534, %v6517
    %v6536 = vrot.slane %v6517, 4
    %v6537 = vsel %vm2116, %v6529, %v6536
    %v6538 = vrot.slane %v6533, 4
    %v6539 = vsel %vm2116, %v6538, %v6521
    %v6540 = vrot.slane %v6521, 4
    %v6541 = vsel %vm2116, %v6533, %v6540
    %v6542 = vrot.slane %v6197, 4
    %v6543 = vsel %vm2116, %v6542, %v6171
    %v6545 = vunpack.c.l.s4 1983009808
    %v6546 = vunpack.c.0.s8 %v6545
    %v6547 = vperm.slane %v6543, %v6546
    %v6548 = vrot.slane %v6210, 4
    %v6549 = vsel %vm2116, %v6548, %v6184
    %v6551 = vunpack.c.l.s4 1983009808
    %v6552 = vunpack.c.0.s8 %v6551
    %v6553 = vperm.slane %v6549, %v6552
    %v6554 = vrot.slane %v6249, 4
    %v6555 = vsel %vm2116, %v6554, %v6223
    %v6557 = vunpack.c.l.s4 1983009808
    %v6558 = vunpack.c.0.s8 %v6557
    %v6559 = vperm.slane %v6555, %v6558
    %v6560 = vrot.slane %v6262, 4
    %v6561 = vsel %vm2116, %v6560, %v6236
    %v6563 = vunpack.c.l.s4 1983009808
    %v6564 = vunpack.c.0.s8 %v6563
    %v6565 = vperm.slane %v6561, %v6564
    %v6566 = vrot.slane %v6553, 4
    %v6567 = vsel %vm2116, %v6566, %v6547
    %v6568 = vrot.slane %v6547, 4
    %v6569 = vsel %vm2116, %v6553, %v6568
    %v6571 = vunpack.c.l.s4 1934713408
    %v6572 = vunpack.c.0.s8 %v6571
    %v6573 = vperm.slane %v6567, %v6572
    %v6575 = vunpack.c.l.s4 1934713408
    %v6576 = vunpack.c.0.s8 %v6575
    %v6577 = vperm.slane %v6569, %v6576
    %v6578 = vrot.slane %v6565, 4
    %v6579 = vsel %vm2116, %v6578, %v6559
    %v6580 = vrot.slane %v6559, 4
    %v6581 = vsel %vm2116, %v6565, %v6580
    %v6583 = vunpack.c.l.s4 1934713408
    %v6584 = vunpack.c.0.s8 %v6583
    %v6585 = vperm.slane %v6579, %v6584
    %v6587 = vunpack.c.l.s4 1934713408
    %v6588 = vunpack.c.0.s8 %v6587
    %v6589 = vperm.slane %v6581, %v6588
    %v6590 = vrot.slane %v6585, 4
    %v6591 = vsel %vm2116, %v6590, %v6573
    %v6592 = vrot.slane %v6573, 4
    %v6593 = vsel %vm2116, %v6585, %v6592
    %v6594 = vrot.slane %v6589, 4
    %v6595 = vsel %vm2116, %v6594, %v6577
    %v6596 = vrot.slane %v6577, 4
    %v6597 = vsel %vm2116, %v6589, %v6596
    %v6598 = vrot.slane %v6301, 4
    %v6599 = vsel %vm2116, %v6598, %v6275
    %v6601 = vunpack.c.l.s4 1983009808
    %v6602 = vunpack.c.0.s8 %v6601
    %v6603 = vperm.slane %v6599, %v6602
    %v6604 = vrot.slane %v6314, 4
    %v6605 = vsel %vm2116, %v6604, %v6288
    %v6607 = vunpack.c.l.s4 1983009808
    %v6608 = vunpack.c.0.s8 %v6607
    %v6609 = vperm.slane %v6605, %v6608
    %v6610 = vrot.slane %v6353, 4
    %v6611 = vsel %vm2116, %v6610, %v6327
    %v6613 = vunpack.c.l.s4 1983009808
    %v6614 = vunpack.c.0.s8 %v6613
    %v6615 = vperm.slane %v6611, %v6614
    %v6616 = vrot.slane %v6366, 4
    %v6617 = vsel %vm2116, %v6616, %v6340
    %v6619 = vunpack.c.l.s4 1983009808
    %v6620 = vunpack.c.0.s8 %v6619
    %v6621 = vperm.slane %v6617, %v6620
    %v6622 = vrot.slane %v6609, 4
    %v6623 = vsel %vm2116, %v6622, %v6603
    %v6624 = vrot.slane %v6603, 4
    %v6625 = vsel %vm2116, %v6609, %v6624
    %v6627 = vunpack.c.l.s4 1934713408
    %v6628 = vunpack.c.0.s8 %v6627
    %v6629 = vperm.slane %v6623, %v6628
    %v6631 = vunpack.c.l.s4 1934713408
    %v6632 = vunpack.c.0.s8 %v6631
    %v6633 = vperm.slane %v6625, %v6632
    %v6634 = vrot.slane %v6621, 4
    %v6635 = vsel %vm2116, %v6634, %v6615
    %v6636 = vrot.slane %v6615, 4
    %v6637 = vsel %vm2116, %v6621, %v6636
    %v6639 = vunpack.c.l.s4 1934713408
    %v6640 = vunpack.c.0.s8 %v6639
    %v6641 = vperm.slane %v6635, %v6640
    %v6643 = vunpack.c.l.s4 1934713408
    %v6644 = vunpack.c.0.s8 %v6643
    %v6645 = vperm.slane %v6637, %v6644
    %v6646 = vrot.slane %v6641, 4
    %v6647 = vsel %vm2116, %v6646, %v6629
    %v6648 = vrot.slane %v6629, 4
    %v6649 = vsel %vm2116, %v6641, %v6648
    %v6650 = vrot.slane %v6645, 4
    %v6651 = vsel %vm2116, %v6650, %v6633
    %v6652 = vrot.slane %v6633, 4
    %v6653 = vsel %vm2116, %v6645, %v6652
    %v6654 = vrot.slane %v6405, 4
    %v6655 = vsel %vm2116, %v6654, %v6379
    %v6657 = vunpack.c.l.s4 1983009808
    %v6658 = vunpack.c.0.s8 %v6657
    %v6659 = vperm.slane %v6655, %v6658
    %v6660 = vrot.slane %v6418, 4
    %v6661 = vsel %vm2116, %v6660, %v6392
    %v6663 = vunpack.c.l.s4 1983009808
    %v6664 = vunpack.c.0.s8 %v6663
    %v6665 = vperm.slane %v6661, %v6664
    %v6666 = vrot.slane %v6457, 4
    %v6667 = vsel %vm2116, %v6666, %v6431
    %v6669 = vunpack.c.l.s4 1983009808
    %v6670 = vunpack.c.0.s8 %v6669
    %v6671 = vperm.slane %v6667, %v6670
    %v6672 = vrot.slane %v6470, 4
    %v6673 = vsel %vm2116, %v6672, %v6444
    %v6675 = vunpack.c.l.s4 1983009808
    %v6676 = vunpack.c.0.s8 %v6675
    %v6677 = vperm.slane %v6673, %v6676
    %v6678 = vrot.slane %v6665, 4
    %v6679 = vsel %vm2116, %v6678, %v6659
    %v6680 = vrot.slane %v6659, 4
    %v6681 = vsel %vm2116, %v6665, %v6680
    %v6683 = vunpack.c.l.s4 1934713408
    %v6684 = vunpack.c.0.s8 %v6683
    %v6685 = vperm.slane %v6679, %v6684
    %v6687 = vunpack.c.l.s4 1934713408
    %v6688 = vunpack.c.0.s8 %v6687
    %v6689 = vperm.slane %v6681, %v6688
    %v6690 = vrot.slane %v6677, 4
    %v6691 = vsel %vm2116, %v6690, %v6671
    %v6692 = vrot.slane %v6671, 4
    %v6693 = vsel %vm2116, %v6677, %v6692
    %v6695 = vunpack.c.l.s4 1934713408
    %v6696 = vunpack.c.0.s8 %v6695
    %v6697 = vperm.slane %v6691, %v6696
    %v6699 = vunpack.c.l.s4 1934713408
    %v6700 = vunpack.c.0.s8 %v6699
    %v6701 = vperm.slane %v6693, %v6700
    %v6702 = vrot.slane %v6697, 4
    %v6703 = vsel %vm2116, %v6702, %v6685
    %v6704 = vrot.slane %v6685, 4
    %v6705 = vsel %vm2116, %v6697, %v6704
    %v6706 = vrot.slane %v6701, 4
    %v6707 = vsel %vm2116, %v6706, %v6689
    %v6708 = vrot.slane %v6689, 4
    %v6709 = vsel %vm2116, %v6701, %v6708
    %v6711 = vunpack.c.l.s4 1983009808
    %v6712 = vunpack.c.0.s8 %v6711
    %v6713 = vperm.slane %v6483, %v6712
    %v6714 = vrot.slane %v6713, 4
    %v6715 = vsel %vm2116, 0.0, %v6714
    %v6717 = vunpack.c.l.s4 1934713408
    %v6718 = vunpack.c.0.s8 %v6717
    %v6719 = vperm.slane %v6713, %v6718
    %v6721 = vunpack.c.l.s4 1934713408
    %v6722 = vunpack.c.0.s8 %v6721
    %v6723 = vperm.slane %v6715, %v6722
    %v6724 = vrot.slane %v6719, 4
    %v6725 = vsel %vm2116, 0.0, %v6724
    %v6726 = vrot.slane %v6723, 4
    %v6727 = vsel %vm2116, 0.0, %v6726
    %v6728 = vperm.slane %v2789, 0
    %v6729 = vlaneseq
    %v6730 = vshrl.u32 %v6729, 7
    %6732 = vset.pattern.permute.xlu0 %v6730
    %6733 = vperm.xlu0 %6732, %v6728
    %v6734 = vpop.permute.xlu0 %6733
    %v6735 = vlaneseq
    %v6736 = vshrl.u32 %v6735, 7
    %v6737 = vadd.s32 %v6736, 8
    %6738 = vset.pattern.permute.xlu0 %v6737
    %6739 = vperm.xlu0 %6738, %v6728
    %v6740 = vpop.permute.xlu0 %6739
    %v6741 = vlaneseq
    %v6742 = vshrl.u32 %v6741, 7
    %v6743 = vadd.s32 %v6742, 16
    %6744 = vset.pattern.permute.xlu0 %v6743
    %6745 = vperm.xlu0 %6744, %v6728
    %v6746 = vpop.permute.xlu0 %6745
    %v6747 = vlaneseq
    %v6748 = vshrl.u32 %v6747, 7
    %v6749 = vadd.s32 %v6748, 24
    %6750 = vset.pattern.permute.xlu0 %v6749
    %6751 = vperm.xlu0 %6750, %v6728
    %v6752 = vpop.permute.xlu0 %6751
    %v6753 = vlaneseq
    %v6754 = vshrl.u32 %v6753, 7
    %v6755 = vadd.s32 %v6754, 32
    %6756 = vset.pattern.permute.xlu0 %v6755
    %6757 = vperm.xlu0 %6756, %v6728
    %v6758 = vpop.permute.xlu0 %6757
    %v6759 = vperm.slane %v2789, 1
    %v6760 = vlaneseq
    %v6761 = vshrl.u32 %v6760, 7
    %6763 = vset.pattern.permute.xlu0 %v6761
    %6764 = vperm.xlu0 %6763, %v6759
    %v6765 = vpop.permute.xlu0 %6764
    %v6766 = vlaneseq
    %v6767 = vshrl.u32 %v6766, 7
    %v6768 = vadd.s32 %v6767, 8
    %6769 = vset.pattern.permute.xlu0 %v6768
    %6770 = vperm.xlu0 %6769, %v6759
    %v6771 = vpop.permute.xlu0 %6770
    %v6772 = vlaneseq
    %v6773 = vshrl.u32 %v6772, 7
    %v6774 = vadd.s32 %v6773, 16
    %6775 = vset.pattern.permute.xlu0 %v6774
    %6776 = vperm.xlu0 %6775, %v6759
    %v6777 = vpop.permute.xlu0 %6776
    %v6778 = vlaneseq
    %v6779 = vshrl.u32 %v6778, 7
    %v6780 = vadd.s32 %v6779, 24
    %6781 = vset.pattern.permute.xlu0 %v6780
    %6782 = vperm.xlu0 %6781, %v6759
    %v6783 = vpop.permute.xlu0 %6782
    %v6784 = vlaneseq
    %v6785 = vshrl.u32 %v6784, 7
    %v6786 = vadd.s32 %v6785, 32
    %6787 = vset.pattern.permute.xlu0 %v6786
    %6788 = vperm.xlu0 %6787, %v6759
    %v6789 = vpop.permute.xlu0 %6788
    %v6790 = vperm.slane %v2789, 2
    %v6791 = vlaneseq
    %v6792 = vshrl.u32 %v6791, 7
    %6794 = vset.pattern.permute.xlu0 %v6792
    %6795 = vperm.xlu0 %6794, %v6790
    %v6796 = vpop.permute.xlu0 %6795
    %v6797 = vlaneseq
    %v6798 = vshrl.u32 %v6797, 7
    %v6799 = vadd.s32 %v6798, 8
    %6800 = vset.pattern.permute.xlu0 %v6799
    %6801 = vperm.xlu0 %6800, %v6790
    %v6802 = vpop.permute.xlu0 %6801
    %v6803 = vlaneseq
    %v6804 = vshrl.u32 %v6803, 7
    %v6805 = vadd.s32 %v6804, 16
    %6806 = vset.pattern.permute.xlu0 %v6805
    %6807 = vperm.xlu0 %6806, %v6790
    %v6808 = vpop.permute.xlu0 %6807
    %v6809 = vlaneseq
    %v6810 = vshrl.u32 %v6809, 7
    %v6811 = vadd.s32 %v6810, 24
    %6812 = vset.pattern.permute.xlu0 %v6811
    %6813 = vperm.xlu0 %6812, %v6790
    %v6814 = vpop.permute.xlu0 %6813
    %v6815 = vlaneseq
    %v6816 = vshrl.u32 %v6815, 7
    %v6817 = vadd.s32 %v6816, 32
    %6818 = vset.pattern.permute.xlu0 %v6817
    %6819 = vperm.xlu0 %6818, %v6790
    %v6820 = vpop.permute.xlu0 %6819
    %v6821 = vperm.slane %v2789, 3
    %v6822 = vlaneseq
    %v6823 = vshrl.u32 %v6822, 7
    %6825 = vset.pattern.permute.xlu0 %v6823
    %6826 = vperm.xlu0 %6825, %v6821
    %v6827 = vpop.permute.xlu0 %6826
    %v6828 = vlaneseq
    %v6829 = vshrl.u32 %v6828, 7
    %v6830 = vadd.s32 %v6829, 8
    %6831 = vset.pattern.permute.xlu0 %v6830
    %6832 = vperm.xlu0 %6831, %v6821
    %v6833 = vpop.permute.xlu0 %6832
    %v6834 = vlaneseq
    %v6835 = vshrl.u32 %v6834, 7
    %v6836 = vadd.s32 %v6835, 16
    %6837 = vset.pattern.permute.xlu0 %v6836
    %6838 = vperm.xlu0 %6837, %v6821
    %v6839 = vpop.permute.xlu0 %6838
    %v6840 = vlaneseq
    %v6841 = vshrl.u32 %v6840, 7
    %v6842 = vadd.s32 %v6841, 24
    %6843 = vset.pattern.permute.xlu0 %v6842
    %6844 = vperm.xlu0 %6843, %v6821
    %v6845 = vpop.permute.xlu0 %6844
    %v6846 = vlaneseq
    %v6847 = vshrl.u32 %v6846, 7
    %v6848 = vadd.s32 %v6847, 32
    %6849 = vset.pattern.permute.xlu0 %v6848
    %6850 = vperm.xlu0 %6849, %v6821
    %v6851 = vpop.permute.xlu0 %6850
    %v6852 = vmul.f32 %v6535, %v6734
    %v6853 = vmul.f32 %v6591, %v6740
    %v6854 = vmul.f32 %v6647, %v6746
    %v6855 = vmul.f32 %v6703, %v6752
    %v6856 = vmul.f32 %v6719, %v6758
    %v6857 = vmul.f32 %v6537, %v6765
    %v6858 = vmul.f32 %v6593, %v6771
    %v6859 = vmul.f32 %v6649, %v6777
    %v6860 = vmul.f32 %v6705, %v6783
    %v6861 = vmul.f32 %v6725, %v6789
    %v6862 = vmul.f32 %v6539, %v6796
    %v6863 = vmul.f32 %v6595, %v6802
    %v6864 = vmul.f32 %v6651, %v6808
    %v6865 = vmul.f32 %v6707, %v6814
    %v6866 = vmul.f32 %v6723, %v6820
    %v6867 = vmul.f32 %v6541, %v6827
    %v6868 = vmul.f32 %v6597, %v6833
    %v6869 = vmul.f32 %v6653, %v6839
    %v6870 = vmul.f32 %v6709, %v6845
    %v6871 = vmul.f32 %v6727, %v6851
    %v6872 = vadd.f32 %v6852, %v6853
    %v6873 = vadd.f32 %v6872, %v6854
    %v6874 = vadd.f32 %v6873, %v6855
    %v6875 = vsel %vm5955, %v6856, 0.0
    %v6876 = vadd.f32 %v6874, %v6875
    %v6877 = vrot.slane %v6876, 4
    %v6878 = vadd.f32 %v6876, %v6877
    %v6879 = vrot.slane %v6878, 2
    %v6880 = vadd.f32 %v6878, %v6879
    %v6881 = vrot.slane %v6880, 1
    %v6882 = vadd.f32 %v6880, %v6881
    %v6883 = vadd.f32 %v6857, %v6858
    %v6884 = vadd.f32 %v6883, %v6859
    %v6885 = vadd.f32 %v6884, %v6860
    %v6886 = vsel %vm5955, %v6861, 0.0
    %v6887 = vadd.f32 %v6885, %v6886
    %v6888 = vrot.slane %v6887, 4
    %v6889 = vadd.f32 %v6887, %v6888
    %v6890 = vrot.slane %v6889, 2
    %v6891 = vadd.f32 %v6889, %v6890
    %v6892 = vrot.slane %v6891, 1
    %v6893 = vadd.f32 %v6891, %v6892
    %v6894 = vadd.f32 %v6862, %v6863
    %v6895 = vadd.f32 %v6894, %v6864
    %v6896 = vadd.f32 %v6895, %v6865
    %v6897 = vsel %vm5955, %v6866, 0.0
    %v6898 = vadd.f32 %v6896, %v6897
    %v6899 = vrot.slane %v6898, 4
    %v6900 = vadd.f32 %v6898, %v6899
    %v6901 = vrot.slane %v6900, 2
    %v6902 = vadd.f32 %v6900, %v6901
    %v6903 = vrot.slane %v6902, 1
    %v6904 = vadd.f32 %v6902, %v6903
    %v6905 = vadd.f32 %v6867, %v6868
    %v6906 = vadd.f32 %v6905, %v6869
    %v6907 = vadd.f32 %v6906, %v6870
    %v6908 = vsel %vm5955, %v6871, 0.0
    %v6909 = vadd.f32 %v6907, %v6908
    %v6910 = vrot.slane %v6909, 4
    %v6911 = vadd.f32 %v6909, %v6910
    %v6912 = vrot.slane %v6911, 2
    %v6913 = vadd.f32 %v6911, %v6912
    %v6914 = vrot.slane %v6913, 1
    %v6915 = vadd.f32 %v6913, %v6914
    %v6916 = vld [vmem:[#allocation11 + $0x216] sm:$0x1]
    %v6917 = vperm.slane %v6916, 0
    %v6918 = vadd.f32 %v6882, %v6917
    %v6919 = vadd.f32 %v6893, %v6917
    %v6920 = vadd.f32 %v6904, %v6917
    %v6921 = vadd.f32 %v6915, %v6917
    %v6922 = vmax.f32 %v6918, 0.0
    %v6923 = vmax.f32 %v6919, 0.0
    %v6924 = vmax.f32 %v6920, 0.0
    %v6925 = vmax.f32 %v6921, 0.0
    %v6926 = vld [vmem:[#allocation11 + $0x140] sm:$0xff]
    %v6927 = vld [vmem:[#allocation11 + $0x148] sm:$0xff]
    %v6928 = vld [vmem:[#allocation11 + $0x150] sm:$0xff]
    %v6929 = vld [vmem:[#allocation11 + $0x158] sm:$0xff]
    %v6930 = vld [vmem:[#allocation11 + $0x160] sm:$0xff]
    %v6931 = vld [vmem:[#allocation11 + $0x168] sm:$0xff]
    %v6932 = vld [vmem:[#allocation11 + $0x170] sm:$0xff]
    %v6933 = vld [vmem:[#allocation11 + $0x178] sm:$0xff]
    %v6934 = vld [vmem:[#allocation11 + $0x180] sm:$0xff]
    %v6935 = vld [vmem:[#allocation11 + $0x188] sm:$0xff]
    %v6936 = vld [vmem:[#allocation11 + $0x190] sm:$0xff]
    %v6937 = vld [vmem:[#allocation11 + $0x198] sm:$0xff]
    %v6938 = vld [vmem:[#allocation11 + $0x1a0] sm:$0xff]
    %v6939 = vld [vmem:[#allocation11 + $0x1a8] sm:$0xff]
    %v6940 = vld [vmem:[#allocation11 + $0x1b0] sm:$0xff]
    %v6941 = vld [vmem:[#allocation11 + $0x1b8] sm:$0xff]
    %v6942 = vld [vmem:[#allocation11 + $0x1c0] sm:$0xff]
    %v6943 = vld [vmem:[#allocation11 + $0x1c8] sm:$0xff]
    %v6944 = vld [vmem:[#allocation11 + $0x1d0] sm:$0xff]
    %v6945 = vld [vmem:[#allocation11 + $0x1d8] sm:$0xff]
    %v6946 = vld [vmem:[#allocation11 + $0x1e0] sm:$0x1]
    %v6948 = vsel %vm5951, %v2789, 0
    %v6951 = vsel %vm5955, %v6946, 0
    %6953 = vmatpush.msra.mxu0 0.0
    %6954 = vmatpush.msra.mxu0 0.0
    %6955 = vmatpush.msra.mxu0 0.0
    %6956 = vmatpush.msra.mxu0 0.0
    %6957 = vmatpush.msra.mxu0 0.0
    %6958 = vmatpush.msra.mxu0 0.0
    %6959 = vmatpush.msra.mxu0 0.0
    %6960 = vmatpush.msra.mxu0 0.0
    %6961 = vmatpush.msra.mxu0 0.0
    %6962 = vmatpush.msra.mxu0 0.0
    %6963 = vmatpush.msra.mxu0 0.0
    %6964 = vmatpush.msra.mxu0 %v6951
    %6965 = vmatpush.msra.mxu0 %v6945
    %6966 = vmatpush.msra.mxu0 %v6944
    %6967 = vmatpush.msra.mxu0 %v6943
    %6968 = vmatpush.msra.mxu0 %v6942
    %6969 = vmatmul.f32.gmra.mxu0 %v6948
    %v6970 = vpop.f32.mrf.mxu0
    %v6971 = vadd.f32 0.0, %v6970
    %6972 = vdwg.mxu0
    %v6977 = vrot.slane %v6923, 7
    %v6978 = vsel %vm2760, %v6977, %v6922
    %v6979 = vrot.slane %v6924, 6
    %v6980 = vsel %vm2762, %v6979, %v6978
    %v6981 = vrot.slane %v6925, 5
    %v6982 = vsel %vm2764, %v6981, %v6980
    %6984 = vmatpush.msra.mxu0 %v6941
    %6985 = vmatpush.msra.mxu0 %v6940
    %6986 = vmatpush.msra.mxu0 %v6939
    %6987 = vmatpush.msra.mxu0 %v6938
    %6988 = vmatpush.msra.mxu0 %v6937
    %6989 = vmatpush.msra.mxu0 %v6936
    %6990 = vmatpush.msra.mxu0 %v6935
    %6991 = vmatpush.msra.mxu0 %v6934
    %6992 = vmatpush.msra.mxu0 %v6933
    %6993 = vmatpush.msra.mxu0 %v6932
    %6994 = vmatpush.msra.mxu0 %v6931
    %6995 = vmatpush.msra.mxu0 %v6930
    %6996 = vmatpush.msra.mxu0 %v6929
    %6997 = vmatpush.msra.mxu0 %v6928
    %6998 = vmatpush.msra.mxu0 %v6927
    %6999 = vmatpush.msra.mxu0 %v6926
    %7000 = vmatmul.f32.gmra.mxu0 %v6982
    %v7001 = vpop.f32.mrf.mxu0
    %v7002 = vadd.f32 %v6971, %v7001
    %7003 = vdwg.mxu0
    %v7004 = vld [vmem:[#allocation11 + $0x1e8] sm:$0xff]
    %v7005 = vld [vmem:[#allocation11 + $0x1f0] sm:$0xff]
    %v7006 = vld [vmem:[#allocation11 + $0x1f8] sm:$0xff]
    %v7007 = vld [vmem:[#allocation11 + $0x200] sm:$0xff]
    %v7008 = vld [vmem:[#allocation11 + $0x208] sm:$0x1]
    %v7010 = vsel %vm5951, %v5449, 0
    %v7013 = vsel %vm5955, %v7008, 0
    %7015 = vmatpush.msra.mxu0 0.0
    %7016 = vmatpush.msra.mxu0 0.0
    %7017 = vmatpush.msra.mxu0 0.0
    %7018 = vmatpush.msra.mxu0 0.0
    %7019 = vmatpush.msra.mxu0 0.0
    %7020 = vmatpush.msra.mxu0 0.0
    %7021 = vmatpush.msra.mxu0 0.0
    %7022 = vmatpush.msra.mxu0 0.0
    %7023 = vmatpush.msra.mxu0 0.0
    %7024 = vmatpush.msra.mxu0 0.0
    %7025 = vmatpush.msra.mxu0 0.0
    %7026 = vmatpush.msra.mxu0 %v7013
    %7027 = vmatpush.msra.mxu0 %v7007
    %7028 = vmatpush.msra.mxu0 %v7006
    %7029 = vmatpush.msra.mxu0 %v7005
    %7030 = vmatpush.msra.mxu0 %v7004
    %7031 = vmatmul.f32.gmra.mxu0 %v7010
    %v7032 = vpop.f32.mrf.mxu0
    %v7033 = vadd.f32 0.0, %v7032
    %7034 = vdwg.mxu0
    %v7035 = vadd.f32 %v7002, %v7033
    %v7036 = vld [vmem:[#allocation11 + $0x217] sm:$0x1]
    %v7037 = vperm.slane %v7036, 0
    %v7038 = vadd.f32 %v7035, %v7037
    %v7039 = vmax.f32 %v7038, 0.0
    %vm7040 = vcmask 519168
    %7041 = vst.msk [vmem:[#allocation13] sm:$0xf] %vm7040, %v7039
    // Predicated region
    $region50: #{_fused_call.1} parent=1 // pred_check
      _
    $region51: #{_fused_call.1} parent=1 // pred_check_branch
      %7043 = sbr.rel (0) target = $region53
    $region52: #{_fused_call.1} parent=1 // pred_region
      %7045 = vsyncadd [#allocation4], 0
      %s7047 = sshll.u32 [#allocation13], 4
      %s7048 = int_to_ptr.vmem [resolvable:$true] %s7047
      %s7049 = sshll.u32 %s6, 4
      %s7050 = int_to_ptr.hbm [resolvable:$true] %s7049
      %7052 = dma.vmem_to_hbm [thread:$0]  %s7048, 64, %s7050, [#allocation4]
    $region53: #{_fused_call.1} parent=1 // pred_fallthru
      _
    // Predicated region
    $region54: #{_fused_call.1} parent=1 // pred_check
      _
    $region55: #{_fused_call.1} parent=1 // pred_check_branch
      %7054 = sbr.rel (0) target = $region57
    $region56: #{_fused_call.1} parent=1 // pred_region
      %7056 = dma.done [#allocation4], 64
    $region57: #{_fused_call.1} parent=1 // pred_fallthru
      _
    %7057 = vsyncpa [#allocation3], 1
    %7058 = vsyncpa [#allocation6], 1
    %7059 = vsyncpa [#allocation9], 1
    %7060 = vsyncpa [#allocation12], 1
    %7061 = vsyncpa [#allocation4], 1

</llo_original>
